<compile_context>
chip_gen: v5e
topology: v5e:2x2
jax: 0.10.0
libtpu: 0.0.40
codegen_flags: <defaults>
</compile_context>

<pallas_src>
import functools

import jax
import jax.numpy as jnp
from jax.experimental import pallas as pl
from jax.experimental.pallas import tpu as pltpu


# ----------------------------------------------------------------------------
# Pallas kernels
# ----------------------------------------------------------------------------

def _gemm_fused_kernel(*refs, apply_relu, has_residual):
    """Single-K-block GEMM with fused '+shift (+residual), ReLU' epilogue."""
    if has_residual:
        x_ref, w_ref, shift_ref, res_ref, o_ref = refs
    else:
        x_ref, w_ref, shift_ref, o_ref = refs
        res_ref = None

    y = jnp.dot(x_ref[...], w_ref[...], preferred_element_type=jnp.float32)
    y = y + shift_ref[...]
    if has_residual:
        y = y + res_ref[...].astype(jnp.float32)
    if apply_relu:
        y = jnp.maximum(y, 0.0)
    o_ref[...] = y.astype(o_ref.dtype)


def _rb2_merged_kernel(x_ref, w_ref, shift_ref, h_ref, r_ref, *, n_main):
    """rb2 conv1(+bn1+relu) and 1x1 residual conv fused into one N=256 GEMM.

    Columns [0, n_main) are the 3x3 conv (+shift, ReLU); columns [n_main, N)
    are the 1x1 residual conv (no shift, no ReLU).
    """
    z = jnp.dot(x_ref[...], w_ref[...], preferred_element_type=jnp.float32)
    z = z + shift_ref[...]
    h_ref[...] = jnp.maximum(z[:, :n_main], 0.0).astype(h_ref.dtype)
    r_ref[...] = z[:, n_main:].astype(r_ref.dtype)


def _head_kernel(x_ref, w1_ref, b1_ref, w2_ref, b2_ref, w3_ref, b3_ref, o_ref):
    """Fused classifier head: fc1 -> relu -> fc2 -> relu -> fc3 -> log_softmax."""
    h = jnp.dot(x_ref[...], w1_ref[...],
                preferred_element_type=jnp.float32) + b1_ref[...]
    h = jnp.maximum(h, 0.0)
    h = jnp.dot(h.astype(jnp.bfloat16), w2_ref[...],
                preferred_element_type=jnp.float32) + b2_ref[...]
    h = jnp.maximum(h, 0.0)
    z = jnp.dot(h.astype(jnp.bfloat16), w3_ref[...],
                preferred_element_type=jnp.float32) + b3_ref[...]
    m = jnp.max(z, axis=-1, keepdims=True)
    y = z - m
    lse = jnp.log(jnp.sum(jnp.exp(y), axis=-1, keepdims=True))
    o_ref[...] = (y - lse).astype(o_ref.dtype)


_VMEM_SPEC = pl.BlockSpec(memory_space=pltpu.MemorySpace.VMEM)
_VMEM_LIMIT = 32 * 1024 * 1024     # keep <= 32 MiB: safe on v7x's 64 MiB VMEM
_SINGLE_BLOCK_M = 1024             # above this, split M into parallel blocks


# ----------------------------------------------------------------------------
# GEMM wrappers
# ----------------------------------------------------------------------------

def _round_up(v, m):
    return (v + m - 1) // m * m


def gemm_fused(x, w, shift, residual=None, apply_relu=True,
               out_dtype=jnp.bfloat16):
    """out = act(x @ w + shift [+ residual]); x:(M,K) bf16, w:(K,N) bf16."""
    M, K = x.shape
    Kw, N = w.shape
    assert K == Kw

    has_residual = residual is not None
    kernel = functools.partial(_gemm_fused_kernel,
                               apply_relu=apply_relu,
                               has_residual=has_residual)

    operands = [x.astype(jnp.bfloat16), w, shift]
    if has_residual:
        operands.append(residual.astype(jnp.bfloat16))

    # ---- single-tile fast path: no grid, no padding, whole-VMEM blocks ----
    if M <= _SINGLE_BLOCK_M:
        return pl.pallas_call(
            kernel,
            out_shape=jax.ShapeDtypeStruct((M, N), out_dtype),
            in_specs=[_VMEM_SPEC] * len(operands),
            out_specs=_VMEM_SPEC,
            compiler_params=pltpu.CompilerParams(
                vmem_limit_bytes=_VMEM_LIMIT),
        )(*operands)

    # ---- large-M path (conv1): >=2 parallel, 16-aligned M blocks ----------
    nm = -(-M // _SINGLE_BLOCK_M)
    tm = _round_up(-(-M // nm), 16)
    Mp = nm * tm
    if Mp != M:
        operands[0] = jnp.pad(operands[0], ((0, Mp - M), (0, 0)))
        if has_residual:
            operands[3] = jnp.pad(operands[3], ((0, Mp - M), (0, 0)))

    in_specs = [
        pl.BlockSpec((tm, K), lambda i: (i, 0)),      # activations, tiled on M
        pl.BlockSpec((K, N), lambda i: (0, 0)),       # full weight (K,N)
        pl.BlockSpec((1, N), lambda i: (0, 0)),       # shift
    ]
    if has_residual:
        in_specs.append(pl.BlockSpec((tm, N), lambda i: (i, 0)))

    out = pl.pallas_call(
        kernel,
        out_shape=jax.ShapeDtypeStruct((Mp, N), out_dtype),
        grid_spec=pltpu.PrefetchScalarGridSpec(
            num_scalar_prefetch=0,
            grid=(nm,),
            in_specs=in_specs,
            out_specs=pl.BlockSpec((tm, N), lambda i: (i, 0)),
        ),
        compiler_params=pltpu.CompilerParams(
            dimension_semantics=("parallel",),
            vmem_limit_bytes=_VMEM_LIMIT,
        ),
    )(*operands)
    return out[:M] if Mp != M else out


def rb2_merged_gemm(patches, w, shift, n_main):
    """Merged rb2 GEMM -> (relu'd conv1 output, raw 1x1-residual output)."""
    M = patches.shape[0]
    N = w.shape[1]
    kernel = functools.partial(_rb2_merged_kernel, n_main=n_main)
    return pl.pallas_call(
        kernel,
        out_shape=(jax.ShapeDtypeStruct((M, n_main), jnp.bfloat16),
                   jax.ShapeDtypeStruct((M, N - n_main), jnp.bfloat16)),
        in_specs=[_VMEM_SPEC] * 3,
        out_specs=(_VMEM_SPEC, _VMEM_SPEC),
        compiler_params=pltpu.CompilerParams(vmem_limit_bytes=_VMEM_LIMIT),
    )(patches.astype(jnp.bfloat16), w, shift)


def fc_head(x, w1, b1, w2, b2, w3, b3):
    """Fused fc1/fc2/fc3 + log_softmax as one Pallas call."""
    B = x.shape[0]
    nc = w3.shape[1]
    return pl.pallas_call(
        _head_kernel,
        out_shape=jax.ShapeDtypeStruct((B, nc), jnp.float32),
        in_specs=[_VMEM_SPEC] * 7,
        out_specs=_VMEM_SPEC,
        compiler_params=pltpu.CompilerParams(vmem_limit_bytes=_VMEM_LIMIT),
    )(x.astype(jnp.bfloat16), w1, b1, w2, b2, w3, b3)


# ----------------------------------------------------------------------------
# Conv-as-GEMM glue (im2col in plain JAX, GEMM in the Pallas kernel)
# ----------------------------------------------------------------------------

def _im2col(x, kh, kw, stride, pad):
    B, H, W, C = x.shape
    if pad > 0:
        x = jnp.pad(x, ((0, 0), (pad, pad), (pad, pad), (0, 0)))
    Hp, Wp = H + 2 * pad, W + 2 * pad
    Ho = (Hp - kh) // stride + 1
    Wo = (Wp - kw) // stride + 1
    cols = []
    for di in range(kh):
        for dj in range(kw):
            cols.append(x[:, di:di + stride * Ho:stride,
                          dj:dj + stride * Wo:stride, :])
    patches = jnp.concatenate(cols, axis=-1)          # (B, Ho, Wo, kh*kw*C)
    return patches.reshape(B * Ho * Wo, kh * kw * C), Ho, Wo


def conv2d(x, w_kn, shift, *, kh, kw, stride=1, pad=0, residual=None,
           apply_relu=True):
    """Conv2d on NHWC input; weights pre-reshaped to (kh*kw*Cin, Cout) bf16.

    `residual`, if given, is a flat (B*Ho*Wo, Cout) array added pre-ReLU.
    """
    _, Cout = w_kn.shape
    B = x.shape[0]
    if kh == 1 and kw == 1 and stride == 1 and pad == 0:
        Ho, Wo = x.shape[1], x.shape[2]
        patches = x.reshape(B * Ho * Wo, x.shape[3])
    else:
        patches, Ho, Wo = _im2col(x, kh, kw, stride, pad)
    out = gemm_fused(patches, w_kn, shift, residual=residual,
                     apply_relu=apply_relu)
    return out.reshape(B, Ho, Wo, Cout)


def maxpool2d(x, k, s, p):
    """MaxPool2d (PyTorch semantics) as a plain-JAX maximum tree."""
    B, H, W, C = x.shape
    if p > 0:
        x = jnp.pad(x, ((0, 0), (p, p), (p, p), (0, 0)),
                    constant_values=-jnp.inf)
    Hp, Wp = H + 2 * p, W + 2 * p
    Ho = (Hp - k) // s + 1
    Wo = (Wp - k) // s + 1
    out = None
    for di in range(k):
        for dj in range(k):
            win = x[:, di:di + s * Ho:s, dj:dj + s * Wo:s, :]
            out = win if out is None else jnp.maximum(out, win)
    return out


# ----------------------------------------------------------------------------
# Parameter initialization (deterministic, synthetic) + constant folding
# ----------------------------------------------------------------------------

def _init_params(key, in_channels, num_classes, flat_dim):
    keys = iter(jax.random.split(key, 64))

    def nrm(shape, s=0.05):
        return (s * jax.random.normal(next(keys), shape)).astype(jnp.float32)

    def bn(n):
        return {
            "gamma": 1.0 + nrm((n,)),
            "beta": nrm((n,)),
            "mean": nrm((n,)),
            "var": 1.0 + jnp.abs(nrm((n,))),
        }

    p = {}
    p["conv1_w"] = nrm((32, in_channels, 3, 3))
    p["conv1_b"] = nrm((32,))
    p["conv2_w"] = nrm((64, 32, 4, 4))
    p["conv2_b"] = nrm((64,))
    p["bn2"] = bn(64)
    p["rb1"] = {
        "conv1_w": nrm((64, 64, 3, 3)), "bn1": bn(64),
        "conv2_w": nrm((64, 64, 3, 3)), "bn2": bn(64),
    }
    p["rb2"] = {
        "res_w": nrm((128, 64, 1, 1)),
        "conv1_w": nrm((128, 64, 3, 3)), "bn1": bn(128),
        "conv2_w": nrm((128, 128, 3, 3)), "bn2": bn(128),
    }
    p["fc1_w"] = nrm((128, flat_dim))
    p["fc1_b"] = nrm((128,))
    p["fc2_w"] = nrm((64, 128))
    p["fc2_b"] = nrm((64,))
    p["fc3_w"] = nrm((num_classes, 64))
    p["fc3_b"] = nrm((num_classes,))
    return p


def fold_bn(bn, bias=None, eps=1e-5):
    scale = bn["gamma"] / jnp.sqrt(bn["var"] + eps)
    shift = bn["beta"] - bn["mean"] * scale
    if bias is not None:
        shift = shift + scale * bias
    return scale, shift


def _conv_w_to_kn(w_oihw):
    """OIHW -> (kh*kw*Cin, Cout), rows ordered (kh, kw, Cin) to match im2col."""
    Cout, Cin, kh, kw = w_oihw.shape
    return jnp.transpose(w_oihw, (2, 3, 1, 0)).reshape(
        kh * kw * Cin, Cout).astype(jnp.float32)


def prepare_params(p):
    """Fold BN/bias into weights, build merged rb2 weight, cast to bf16."""
    q = {}
    # conv1: bias only (scale = 1)
    q["c1_w"] = _conv_w_to_kn(p["conv1_w"]).astype(jnp.bfloat16)
    q["c1_s"] = p["conv1_b"].reshape(1, -1).astype(jnp.float32)
    # conv2 + bn2 (+ conv bias folded into the BN shift)
    s, b = fold_bn(p["bn2"], bias=p["conv2_b"])
    q["c2_w"] = (_conv_w_to_kn(p["conv2_w"]) * s.reshape(1, -1)
                 ).astype(jnp.bfloat16)
    q["c2_s"] = b.reshape(1, -1).astype(jnp.float32)
    # res block 1
    s, b = fold_bn(p["rb1"]["bn1"])
    q["rb1_c1_w"] = (_conv_w_to_kn(p["rb1"]["conv1_w"]) * s.reshape(1, -1)
                     ).astype(jnp.bfloat16)
    q["rb1_c1_s"] = b.reshape(1, -1).astype(jnp.float32)
    s, b = fold_bn(p["rb1"]["bn2"])
    q["rb1_c2_w"] = (_conv_w_to_kn(p["rb1"]["conv2_w"]) * s.reshape(1, -1)
                     ).astype(jnp.bfloat16)
    q["rb1_c2_s"] = b.reshape(1, -1).astype(jnp.float32)
    # res block 2: merge 1x1 residual conv (center tap) into the 3x3 conv1 GEMM
    s, b = fold_bn(p["rb2"]["bn1"])
    w_main = _conv_w_to_kn(p["rb2"]["conv1_w"]) * s.reshape(1, -1)   # (576,128)
    w_res_1x1 = _conv_w_to_kn(p["rb2"]["res_w"])                     # (64,128)
    cin = w_res_1x1.shape[0]
    w_res = jnp.zeros((9 * cin, w_res_1x1.shape[1]), jnp.float32)
    w_res = w_res.at[4 * cin:5 * cin, :].set(w_res_1x1)  # tap (1,1) of 3x3,p=1
    q["rb2_m_w"] = jnp.concatenate([w_main, w_res], axis=1
                                   ).astype(jnp.bfloat16)            # (576,256)
    q["rb2_m_s"] = jnp.concatenate(
        [b.reshape(1, -1), jnp.zeros((1, w_res_1x1.shape[1]), jnp.float32)],
        axis=1)                                                      # (1,256)
    s, b = fold_bn(p["rb2"]["bn2"])
    q["rb2_c2_w"] = (_conv_w_to_kn(p["rb2"]["conv2_w"]) * s.reshape(1, -1)
                     ).astype(jnp.bfloat16)
    q["rb2_c2_s"] = b.reshape(1, -1).astype(jnp.float32)
    # FC head: pre-transposed (K, N) bf16 weights, (1, N) f32 biases
    q["fc1_w"] = p["fc1_w"].T.astype(jnp.bfloat16)
    q["fc1_b"] = p["fc1_b"].reshape(1, -1).astype(jnp.float32)
    q["fc2_w"] = p["fc2_w"].T.astype(jnp.bfloat16)
    q["fc2_b"] = p["fc2_b"].reshape(1, -1).astype(jnp.float32)
    q["fc3_w"] = p["fc3_w"].T.astype(jnp.bfloat16)
    q["fc3_b"] = p["fc3_b"].reshape(1, -1).astype(jnp.float32)
    return q


# ----------------------------------------------------------------------------
# Model forward (eval mode: dropout = identity, BN uses running stats)
# ----------------------------------------------------------------------------

def forward(q, x_nchw):
    # NCHW -> NHWC, bf16 activations throughout the conv stack
    x = jnp.transpose(x_nchw, (0, 2, 3, 1)).astype(jnp.bfloat16)

    # conv1 (+bias) + relu, pool1; drop1 = identity
    x = conv2d(x, q["c1_w"], q["c1_s"], kh=3, kw=3)
    x = maxpool2d(x, 2, 2, 0)

    # conv2 + bn2 + relu, pool2; drop2 = identity
    x = conv2d(x, q["c2_w"], q["c2_s"], kh=4, kw=4, stride=2, pad=1)
    x = maxpool2d(x, 3, 2, 1)

    B, Hc, Wc, _ = x.shape

    # res block 1 (64 -> 64, identity residual)
    h = conv2d(x, q["rb1_c1_w"], q["rb1_c1_s"], kh=3, kw=3, pad=1)
    x = conv2d(h, q["rb1_c2_w"], q["rb1_c2_s"], kh=3, kw=3, pad=1,
               residual=x.reshape(B * Hc * Wc, -1), apply_relu=True)

    # res block 2 (64 -> 128): merged (3x3 conv1+bn1+relu) || (1x1 residual)
    patches, Ho, Wo = _im2col(x, 3, 3, 1, 1)
    h_flat, r_flat = rb2_merged_gemm(patches, q["rb2_m_w"], q["rb2_m_s"],
                                     n_main=128)
    h = h_flat.reshape(B, Ho, Wo, 128)
    x = conv2d(h, q["rb2_c2_w"], q["rb2_c2_s"], kh=3, kw=3, pad=1,
               residual=r_flat, apply_relu=True)

    x = maxpool2d(x, 2, 2, 0)

    # flatten in PyTorch NCHW order
    x = jnp.transpose(x, (0, 3, 1, 2)).reshape(B, -1)

    # fused fc1 -> fc2 -> fc3 -> log_softmax (drop3/drop4 = identity)
    return fc_head(x, q["fc1_w"], q["fc1_b"], q["fc2_w"], q["fc2_b"],
                   q["fc3_w"], q["fc3_b"])


# ----------------------------------------------------------------------------

if __name__ == "__main__":
    # input_shape = (3, 32, 32) -> fc1 in_features = 128 * (32//16)**2 = 512
    B, C, H, W = 2, 3, 32, 32
    NUM_CLASSES = 10
    FLAT_DIM = 128 * (H // 16) * (W // 16)

    key = jax.random.PRNGKey(0)
    pkey, xkey = jax.random.split(key)
    raw_params = _init_params(pkey, C, NUM_CLASSES, FLAT_DIM)
    params = prepare_params(raw_params)
    x = jax.random.normal(xkey, (B, C, H, W), dtype=jnp.float32)

    out = jax.jit(forward)(params, x)
    out = jax.block_until_ready(out)
    assert out.shape == (B, NUM_CLASSES)
    # sanity: rows of log_softmax exponentiate+sum to ~1
    assert bool(jnp.all(jnp.abs(jnp.sum(jnp.exp(out), axis=1) - 1.0) < 1e-3))
    print("KERNEL_OK")
</pallas_src>

<mosaic_0001>
module attributes {stable_mosaic.version = 11 : i64} {
  func.func @_gemm_fused_kernel(%arg0: i32, %arg1: memref<912x27xbf16, #tpu.memory_space<vmem>>, %arg2: memref<27x32xbf16, #tpu.memory_space<vmem>>, %arg3: memref<1x32xf32, #tpu.memory_space<vmem>>, %arg4: memref<912x32xbf16, #tpu.memory_space<vmem>>) attributes {dimension_semantics = [#tpu.dimension_semantics<parallel>], iteration_bounds = array<i64: 2>, scalar_prefetch = 0 : i64, scratch_operands = 0 : i64, tpu.core_type = #tpu.core_type<tc>, window_params = [{transform_indices = @transform_0, window_bounds = array<i64: 912, 27>}, {pipeline_mode = #tpu.pipeline_mode<synchronous>, transform_indices = @transform_1, window_bounds = array<i64: 27, 32>}, {pipeline_mode = #tpu.pipeline_mode<synchronous>, transform_indices = @transform_2, window_bounds = array<i64: 1, 32>}, {transform_indices = @transform_3, window_bounds = array<i64: 912, 32>}]} {
    %c0 = arith.constant 0 : index
    %c0_0 = arith.constant 0 : index
    %0 = vector.load %arg1[%c0, %c0_0] : memref<912x27xbf16, #tpu.memory_space<vmem>>, vector<912x27xbf16>
    %c0_1 = arith.constant 0 : index
    %c0_2 = arith.constant 0 : index
    %1 = vector.load %arg2[%c0_1, %c0_2] : memref<27x32xbf16, #tpu.memory_space<vmem>>, vector<27x32xbf16>
    %cst = arith.constant dense<0.000000e+00> : vector<912x32xf32>
    %2 = tpu.matmul %0, %1, %cst {dimension_numbers = #tpu.dot_dimension_numbers<[1], [0], [0], [1], [0, 0, 1, 1], [], []>} : vector<912x27xbf16>, vector<27x32xbf16>, vector<912x32xf32> -> vector<912x32xf32>
    %c0_3 = arith.constant 0 : index
    %c0_4 = arith.constant 0 : index
    %3 = vector.load %arg3[%c0_3, %c0_4] : memref<1x32xf32, #tpu.memory_space<vmem>>, vector<1x32xf32>
    %4 = vector.broadcast %3 : vector<1x32xf32> to vector<912x32xf32>
    %5 = arith.addf %2, %4 : vector<912x32xf32>
    %cst_5 = arith.constant 0.000000e+00 : f32
    %6 = vector.broadcast %cst_5 : f32 to vector<912x32xf32>
    %7 = arith.maximumf %5, %6 : vector<912x32xf32>
    %8 = arith.truncf %7 : vector<912x32xf32> to vector<912x32xbf16>
    %c0_6 = arith.constant 0 : index
    %c0_7 = arith.constant 0 : index
    %9 = vector.load %arg4[%c0_6, %c0_7] : memref<912x32xbf16, #tpu.memory_space<vmem>>, vector<912x32xbf16>
    tpu.vector_store %arg4[%c0_6, %c0_7], %8 {strides = array<i32>} : memref<912x32xbf16, #tpu.memory_space<vmem>>, vector<912x32xbf16>,
    return
  }
  func.func @transform_0(%arg0: i32) -> (i32, i32) {
    %c0_i32 = arith.constant 0 : i32
    %c0_i32_0 = arith.constant 0 : i32
    return %arg0, %c0_i32 : i32, i32
  }
  func.func @transform_1(%arg0: i32) -> (i32, i32) {
    %c0_i32 = arith.constant 0 : i32
    %c0_i32_0 = arith.constant 0 : i32
    %c0_i32_1 = arith.constant 0 : i32
    return %c0_i32, %c0_i32_0 : i32, i32
  }
  func.func @transform_2(%arg0: i32) -> (i32, i32) {
    %c0_i32 = arith.constant 0 : i32
    %c0_i32_0 = arith.constant 0 : i32
    %c0_i32_1 = arith.constant 0 : i32
    return %c0_i32, %c0_i32_0 : i32, i32
  }
  func.func @transform_3(%arg0: i32) -> (i32, i32) {
    %c0_i32 = arith.constant 0 : i32
    %c0_i32_0 = arith.constant 0 : i32
    return %arg0, %c0_i32 : i32, i32
  }
}

module attributes {stable_mosaic.version = 11 : i64} {
  func.func @_gemm_fused_kernel(%arg0: memref<98x512xbf16, #tpu.memory_space<vmem>>, %arg1: memref<512x64xbf16, #tpu.memory_space<vmem>>, %arg2: memref<1x64xf32, #tpu.memory_space<vmem>>, %arg3: memref<98x64xbf16, #tpu.memory_space<vmem>>) attributes {dimension_semantics = [], scalar_prefetch = 0 : i64, scratch_operands = 0 : i64, tpu.core_type = #tpu.core_type<tc>} {
    %c0 = arith.constant 0 : index
    %c0_0 = arith.constant 0 : index
    %0 = vector.load %arg0[%c0, %c0_0] : memref<98x512xbf16, #tpu.memory_space<vmem>>, vector<98x512xbf16>
    %c0_1 = arith.constant 0 : index
    %c0_2 = arith.constant 0 : index
    %1 = vector.load %arg1[%c0_1, %c0_2] : memref<512x64xbf16, #tpu.memory_space<vmem>>, vector<512x64xbf16>
    %cst = arith.constant dense<0.000000e+00> : vector<98x64xf32>
    %2 = tpu.matmul %0, %1, %cst {dimension_numbers = #tpu.dot_dimension_numbers<[1], [0], [0], [1], [0, 0, 1, 1], [], []>} : vector<98x512xbf16>, vector<512x64xbf16>, vector<98x64xf32> -> vector<98x64xf32>
    %c0_3 = arith.constant 0 : index
    %c0_4 = arith.constant 0 : index
    %3 = vector.load %arg2[%c0_3, %c0_4] : memref<1x64xf32, #tpu.memory_space<vmem>>, vector<1x64xf32>
    %4 = vector.broadcast %3 : vector<1x64xf32> to vector<98x64xf32>
    %5 = arith.addf %2, %4 : vector<98x64xf32>
    %cst_5 = arith.constant 0.000000e+00 : f32
    %6 = vector.broadcast %cst_5 : f32 to vector<98x64xf32>
    %7 = arith.maximumf %5, %6 : vector<98x64xf32>
    %8 = arith.truncf %7 : vector<98x64xf32> to vector<98x64xbf16>
    %c0_6 = arith.constant 0 : index
    %c0_7 = arith.constant 0 : index
    %9 = vector.load %arg3[%c0_6, %c0_7] : memref<98x64xbf16, #tpu.memory_space<vmem>>, vector<98x64xbf16>
    tpu.vector_store %arg3[%c0_6, %c0_7], %8 {strides = array<i32>} : memref<98x64xbf16, #tpu.memory_space<vmem>>, vector<98x64xbf16>,
    return
  }
}

module attributes {stable_mosaic.version = 11 : i64} {
  func.func @_gemm_fused_kernel(%arg0: memref<32x576xbf16, #tpu.memory_space<vmem>>, %arg1: memref<576x64xbf16, #tpu.memory_space<vmem>>, %arg2: memref<1x64xf32, #tpu.memory_space<vmem>>, %arg3: memref<32x64xbf16, #tpu.memory_space<vmem>>, %arg4: memref<32x64xbf16, #tpu.memory_space<vmem>>) attributes {dimension_semantics = [], scalar_prefetch = 0 : i64, scratch_operands = 0 : i64, tpu.core_type = #tpu.core_type<tc>} {
    %c0 = arith.constant 0 : index
    %c0_0 = arith.constant 0 : index
    %0 = vector.load %arg0[%c0, %c0_0] : memref<32x576xbf16, #tpu.memory_space<vmem>>, vector<32x576xbf16>
    %c0_1 = arith.constant 0 : index
    %c0_2 = arith.constant 0 : index
    %1 = vector.load %arg1[%c0_1, %c0_2] : memref<576x64xbf16, #tpu.memory_space<vmem>>, vector<576x64xbf16>
    %cst = arith.constant dense<0.000000e+00> : vector<32x64xf32>
    %2 = tpu.matmul %0, %1, %cst {dimension_numbers = #tpu.dot_dimension_numbers<[1], [0], [0], [1], [0, 0, 1, 1], [], []>} : vector<32x576xbf16>, vector<576x64xbf16>, vector<32x64xf32> -> vector<32x64xf32>
    %c0_3 = arith.constant 0 : index
    %c0_4 = arith.constant 0 : index
    %3 = vector.load %arg2[%c0_3, %c0_4] : memref<1x64xf32, #tpu.memory_space<vmem>>, vector<1x64xf32>
    %4 = vector.broadcast %3 : vector<1x64xf32> to vector<32x64xf32>
    %5 = arith.addf %2, %4 : vector<32x64xf32>
    %c0_5 = arith.constant 0 : index
    %c0_6 = arith.constant 0 : index
    %6 = vector.load %arg3[%c0_5, %c0_6] : memref<32x64xbf16, #tpu.memory_space<vmem>>, vector<32x64xbf16>
    %7 = arith.extf %6 : vector<32x64xbf16> to vector<32x64xf32>
    %8 = arith.addf %5, %7 : vector<32x64xf32>
    %cst_7 = arith.constant 0.000000e+00 : f32
    %9 = vector.broadcast %cst_7 : f32 to vector<32x64xf32>
    %10 = arith.maximumf %8, %9 : vector<32x64xf32>
    %11 = arith.truncf %10 : vector<32x64xf32> to vector<32x64xbf16>
    %c0_8 = arith.constant 0 : index
    %c0_9 = arith.constant 0 : index
    %12 = vector.load %arg4[%c0_8, %c0_9] : memref<32x64xbf16, #tpu.memory_space<vmem>>, vector<32x64xbf16>
    tpu.vector_store %arg4[%c0_8, %c0_9], %11 {strides = array<i32>} : memref<32x64xbf16, #tpu.memory_space<vmem>>, vector<32x64xbf16>,
    return
  }
}

module attributes {stable_mosaic.version = 11 : i64} {
  func.func @_rb2_merged_kernel(%arg0: memref<32x576xbf16, #tpu.memory_space<vmem>>, %arg1: memref<576x256xbf16, #tpu.memory_space<vmem>>, %arg2: memref<1x256xf32, #tpu.memory_space<vmem>>, %arg3: memref<32x128xbf16, #tpu.memory_space<vmem>>, %arg4: memref<32x128xbf16, #tpu.memory_space<vmem>>) attributes {dimension_semantics = [], scalar_prefetch = 0 : i64, scratch_operands = 0 : i64, tpu.core_type = #tpu.core_type<tc>} {
    %c0 = arith.constant 0 : index
    %c0_0 = arith.constant 0 : index
    %0 = vector.load %arg0[%c0, %c0_0] : memref<32x576xbf16, #tpu.memory_space<vmem>>, vector<32x576xbf16>
    %c0_1 = arith.constant 0 : index
    %c0_2 = arith.constant 0 : index
    %1 = vector.load %arg1[%c0_1, %c0_2] : memref<576x256xbf16, #tpu.memory_space<vmem>>, vector<576x256xbf16>
    %cst = arith.constant dense<0.000000e+00> : vector<32x256xf32>
    %2 = tpu.matmul %0, %1, %cst {dimension_numbers = #tpu.dot_dimension_numbers<[1], [0], [0], [1], [0, 0, 1, 1], [], []>} : vector<32x576xbf16>, vector<576x256xbf16>, vector<32x256xf32> -> vector<32x256xf32>
    %c0_3 = arith.constant 0 : index
    %c0_4 = arith.constant 0 : index
    %3 = vector.load %arg2[%c0_3, %c0_4] : memref<1x256xf32, #tpu.memory_space<vmem>>, vector<1x256xf32>
    %4 = vector.broadcast %3 : vector<1x256xf32> to vector<32x256xf32>
    %5 = arith.addf %2, %4 : vector<32x256xf32>
    %6 = vector.extract_strided_slice %5 {offsets = [0, 0], sizes = [32, 128], strides = [1, 1]} : vector<32x256xf32> to vector<32x128xf32>
    %cst_5 = arith.constant 0.000000e+00 : f32
    %7 = vector.broadcast %cst_5 : f32 to vector<32x128xf32>
    %8 = arith.maximumf %6, %7 : vector<32x128xf32>
    %9 = arith.truncf %8 : vector<32x128xf32> to vector<32x128xbf16>
    %c0_6 = arith.constant 0 : index
    %c0_7 = arith.constant 0 : index
    %10 = vector.load %arg3[%c0_6, %c0_7] : memref<32x128xbf16, #tpu.memory_space<vmem>>, vector<32x128xbf16>
    tpu.vector_store %arg3[%c0_6, %c0_7], %9 {strides = array<i32>} : memref<32x128xbf16, #tpu.memory_space<vmem>>, vector<32x128xbf16>,
    %11 = vector.extract_strided_slice %5 {offsets = [0, 128], sizes = [32, 128], strides = [1, 1]} : vector<32x256xf32> to vector<32x128xf32>
    %12 = arith.truncf %11 : vector<32x128xf32> to vector<32x128xbf16>
    %c0_8 = arith.constant 0 : index
    %c0_9 = arith.constant 0 : index
    %13 = vector.load %arg4[%c0_8, %c0_9] : memref<32x128xbf16, #tpu.memory_space<vmem>>, vector<32x128xbf16>
    tpu.vector_store %arg4[%c0_8, %c0_9], %12 {strides = array<i32>} : memref<32x128xbf16, #tpu.memory_space<vmem>>, vector<32x128xbf16>,
    return
  }
}

module attributes {stable_mosaic.version = 11 : i64} {
  func.func @_gemm_fused_kernel(%arg0: memref<32x576xbf16, #tpu.memory_space<vmem>>, %arg1: memref<576x64xbf16, #tpu.memory_space<vmem>>, %arg2: memref<1x64xf32, #tpu.memory_space<vmem>>, %arg3: memref<32x64xbf16, #tpu.memory_space<vmem>>) attributes {dimension_semantics = [], scalar_prefetch = 0 : i64, scratch_operands = 0 : i64, tpu.core_type = #tpu.core_type<tc>} {
    %c0 = arith.constant 0 : index
    %c0_0 = arith.constant 0 : index
    %0 = vector.load %arg0[%c0, %c0_0] : memref<32x576xbf16, #tpu.memory_space<vmem>>, vector<32x576xbf16>
    %c0_1 = arith.constant 0 : index
    %c0_2 = arith.constant 0 : index
    %1 = vector.load %arg1[%c0_1, %c0_2] : memref<576x64xbf16, #tpu.memory_space<vmem>>, vector<576x64xbf16>
    %cst = arith.constant dense<0.000000e+00> : vector<32x64xf32>
    %2 = tpu.matmul %0, %1, %cst {dimension_numbers = #tpu.dot_dimension_numbers<[1], [0], [0], [1], [0, 0, 1, 1], [], []>} : vector<32x576xbf16>, vector<576x64xbf16>, vector<32x64xf32> -> vector<32x64xf32>
    %c0_3 = arith.constant 0 : index
    %c0_4 = arith.constant 0 : index
    %3 = vector.load %arg2[%c0_3, %c0_4] : memref<1x64xf32, #tpu.memory_space<vmem>>, vector<1x64xf32>
    %4 = vector.broadcast %3 : vector<1x64xf32> to vector<32x64xf32>
    %5 = arith.addf %2, %4 : vector<32x64xf32>
    %cst_5 = arith.constant 0.000000e+00 : f32
    %6 = vector.broadcast %cst_5 : f32 to vector<32x64xf32>
    %7 = arith.maximumf %5, %6 : vector<32x64xf32>
    %8 = arith.truncf %7 : vector<32x64xf32> to vector<32x64xbf16>
    %c0_6 = arith.constant 0 : index
    %c0_7 = arith.constant 0 : index
    %9 = vector.load %arg3[%c0_6, %c0_7] : memref<32x64xbf16, #tpu.memory_space<vmem>>, vector<32x64xbf16>
    tpu.vector_store %arg3[%c0_6, %c0_7], %8 {strides = array<i32>} : memref<32x64xbf16, #tpu.memory_space<vmem>>, vector<32x64xbf16>,
    return
  }
}

module attributes {stable_mosaic.version = 11 : i64} {
  func.func @_gemm_fused_kernel(%arg0: memref<32x1152xbf16, #tpu.memory_space<vmem>>, %arg1: memref<1152x128xbf16, #tpu.memory_space<vmem>>, %arg2: memref<1x128xf32, #tpu.memory_space<vmem>>, %arg3: memref<32x128xbf16, #tpu.memory_space<vmem>>, %arg4: memref<32x128xbf16, #tpu.memory_space<vmem>>) attributes {dimension_semantics = [], scalar_prefetch = 0 : i64, scratch_operands = 0 : i64, tpu.core_type = #tpu.core_type<tc>} {
    %c0 = arith.constant 0 : index
    %c0_0 = arith.constant 0 : index
    %0 = vector.load %arg0[%c0, %c0_0] : memref<32x1152xbf16, #tpu.memory_space<vmem>>, vector<32x1152xbf16>
    %c0_1 = arith.constant 0 : index
    %c0_2 = arith.constant 0 : index
    %1 = vector.load %arg1[%c0_1, %c0_2] : memref<1152x128xbf16, #tpu.memory_space<vmem>>, vector<1152x128xbf16>
    %cst = arith.constant dense<0.000000e+00> : vector<32x128xf32>
    %2 = tpu.matmul %0, %1, %cst {dimension_numbers = #tpu.dot_dimension_numbers<[1], [0], [0], [1], [0, 0, 1, 1], [], []>} : vector<32x1152xbf16>, vector<1152x128xbf16>, vector<32x128xf32> -> vector<32x128xf32>
    %c0_3 = arith.constant 0 : index
    %c0_4 = arith.constant 0 : index
    %3 = vector.load %arg2[%c0_3, %c0_4] : memref<1x128xf32, #tpu.memory_space<vmem>>, vector<1x128xf32>
    %4 = vector.broadcast %3 : vector<1x128xf32> to vector<32x128xf32>
    %5 = arith.addf %2, %4 : vector<32x128xf32>
    %c0_5 = arith.constant 0 : index
    %c0_6 = arith.constant 0 : index
    %6 = vector.load %arg3[%c0_5, %c0_6] : memref<32x128xbf16, #tpu.memory_space<vmem>>, vector<32x128xbf16>
    %7 = arith.extf %6 : vector<32x128xbf16> to vector<32x128xf32>
    %8 = arith.addf %5, %7 : vector<32x128xf32>
    %cst_7 = arith.constant 0.000000e+00 : f32
    %9 = vector.broadcast %cst_7 : f32 to vector<32x128xf32>
    %10 = arith.maximumf %8, %9 : vector<32x128xf32>
    %11 = arith.truncf %10 : vector<32x128xf32> to vector<32x128xbf16>
    %c0_8 = arith.constant 0 : index
    %c0_9 = arith.constant 0 : index
    %12 = vector.load %arg4[%c0_8, %c0_9] : memref<32x128xbf16, #tpu.memory_space<vmem>>, vector<32x128xbf16>
    tpu.vector_store %arg4[%c0_8, %c0_9], %11 {strides = array<i32>} : memref<32x128xbf16, #tpu.memory_space<vmem>>, vector<32x128xbf16>,
    return
  }
}

module attributes {stable_mosaic.version = 11 : i64} {
  func.func @_head_kernel(%arg0: memref<2x512xbf16, #tpu.memory_space<vmem>>, %arg1: memref<512x128xbf16, #tpu.memory_space<vmem>>, %arg2: memref<1x128xf32, #tpu.memory_space<vmem>>, %arg3: memref<128x64xbf16, #tpu.memory_space<vmem>>, %arg4: memref<1x64xf32, #tpu.memory_space<vmem>>, %arg5: memref<64x10xbf16, #tpu.memory_space<vmem>>, %arg6: memref<1x10xf32, #tpu.memory_space<vmem>>, %arg7: memref<2x10xf32, #tpu.memory_space<vmem>>) attributes {dimension_semantics = [], scalar_prefetch = 0 : i64, scratch_operands = 0 : i64, tpu.core_type = #tpu.core_type<tc>} {
    %c0 = arith.constant 0 : index
    %c0_0 = arith.constant 0 : index
    %0 = vector.load %arg0[%c0, %c0_0] : memref<2x512xbf16, #tpu.memory_space<vmem>>, vector<2x512xbf16>
    %c0_1 = arith.constant 0 : index
    %c0_2 = arith.constant 0 : index
    %1 = vector.load %arg1[%c0_1, %c0_2] : memref<512x128xbf16, #tpu.memory_space<vmem>>, vector<512x128xbf16>
    %cst = arith.constant dense<0.000000e+00> : vector<2x128xf32>
    %2 = tpu.matmul %0, %1, %cst {dimension_numbers = #tpu.dot_dimension_numbers<[1], [0], [0], [1], [0, 0, 1, 1], [], []>} : vector<2x512xbf16>, vector<512x128xbf16>, vector<2x128xf32> -> vector<2x128xf32>
    %c0_3 = arith.constant 0 : index
    %c0_4 = arith.constant 0 : index
    %3 = vector.load %arg2[%c0_3, %c0_4] : memref<1x128xf32, #tpu.memory_space<vmem>>, vector<1x128xf32>
    %4 = vector.broadcast %3 : vector<1x128xf32> to vector<2x128xf32>
    %5 = arith.addf %2, %4 : vector<2x128xf32>
    %cst_5 = arith.constant 0.000000e+00 : f32
    %6 = vector.broadcast %cst_5 : f32 to vector<2x128xf32>
    %7 = arith.maximumf %5, %6 : vector<2x128xf32>
    %8 = arith.truncf %7 : vector<2x128xf32> to vector<2x128xbf16>
    %c0_6 = arith.constant 0 : index
    %c0_7 = arith.constant 0 : index
    %9 = vector.load %arg3[%c0_6, %c0_7] : memref<128x64xbf16, #tpu.memory_space<vmem>>, vector<128x64xbf16>
    %cst_8 = arith.constant dense<0.000000e+00> : vector<2x64xf32>
    %10 = tpu.matmul %8, %9, %cst_8 {dimension_numbers = #tpu.dot_dimension_numbers<[1], [0], [0], [1], [0, 0, 1, 1], [], []>} : vector<2x128xbf16>, vector<128x64xbf16>, vector<2x64xf32> -> vector<2x64xf32>
    %c0_9 = arith.constant 0 : index
    %c0_10 = arith.constant 0 : index
    %11 = vector.load %arg4[%c0_9, %c0_10] : memref<1x64xf32, #tpu.memory_space<vmem>>, vector<1x64xf32>
    %12 = vector.broadcast %11 : vector<1x64xf32> to vector<2x64xf32>
    %13 = arith.addf %10, %12 : vector<2x64xf32>
    %cst_11 = arith.constant 0.000000e+00 : f32
    %14 = vector.broadcast %cst_11 : f32 to vector<2x64xf32>
    %15 = arith.maximumf %13, %14 : vector<2x64xf32>
    %16 = arith.truncf %15 : vector<2x64xf32> to vector<2x64xbf16>
    %c0_12 = arith.constant 0 : index
    %c0_13 = arith.constant 0 : index
    %17 = vector.load %arg5[%c0_12, %c0_13] : memref<64x10xbf16, #tpu.memory_space<vmem>>, vector<64x10xbf16>
    %cst_14 = arith.constant dense<0.000000e+00> : vector<2x10xf32>
    %18 = tpu.matmul %16, %17, %cst_14 {dimension_numbers = #tpu.dot_dimension_numbers<[1], [0], [0], [1], [0, 0, 1, 1], [], []>} : vector<2x64xbf16>, vector<64x10xbf16>, vector<2x10xf32> -> vector<2x10xf32>
    %c0_15 = arith.constant 0 : index
    %c0_16 = arith.constant 0 : index
    %19 = vector.load %arg6[%c0_15, %c0_16] : memref<1x10xf32, #tpu.memory_space<vmem>>, vector<1x10xf32>
    %20 = vector.broadcast %19 : vector<1x10xf32> to vector<2x10xf32>
    %21 = arith.addf %18, %20 : vector<2x10xf32>
    %cst_17 = arith.constant dense<0xFF800000> : vector<2xf32>
    %22 = vector.multi_reduction <maximumf>, %21, %cst_17 [1] : vector<2x10xf32> to vector<2xf32>
    %23 = vector.shape_cast %22 : vector<2xf32> to vector<2x1xf32>
    %24 = vector.broadcast %23 : vector<2x1xf32> to vector<2x10xf32>
    %25 = arith.subf %21, %24 : vector<2x10xf32>
    %26 = math.exp %25 : vector<2x10xf32>
    %cst_18 = arith.constant dense<0.000000e+00> : vector<2xf32>
    %27 = vector.multi_reduction <add>, %26, %cst_18 [1] : vector<2x10xf32> to vector<2xf32>
    %28 = vector.shape_cast %27 : vector<2xf32> to vector<2x1xf32>
    %29 = math.log %28 : vector<2x1xf32>
    %30 = vector.broadcast %29 : vector<2x1xf32> to vector<2x10xf32>
    %31 = arith.subf %25, %30 : vector<2x10xf32>
    %c0_19 = arith.constant 0 : index
    %c0_20 = arith.constant 0 : index
    %32 = vector.load %arg7[%c0_19, %c0_20] : memref<2x10xf32, #tpu.memory_space<vmem>>, vector<2x10xf32>
    tpu.vector_store %arg7[%c0_19, %c0_20], %31 {strides = array<i32>} : memref<2x10xf32, #tpu.memory_space<vmem>>, vector<2x10xf32>,
    return
  }
}

</mosaic_0001>

<llo_original>
// kernel: forward.7
$region0: #{forward.7}
  #allocation0 [shape = 'u32[]', space=smem, size = 0x4, offset = 0x4, fixed_abs, tag = 'smem constant byte address 0x4 - core index']
  #allocation1 [shape = 'u32[72,128]{1,0:T(1,128)}', space=vmem, size = 0x9000, scoped, tag = 'internal scratch']
  %s0 = inlined_call_operand.vmem [shape: bf16[1824,27], index: 0, kind: input, shape index: {}]
  %s1 = inlined_call_operand.vmem [shape: bf16[27,32], index: 1, kind: input, shape index: {}]
  %s2 = inlined_call_operand.vmem [shape: f32[1,32], index: 2, kind: input, shape index: {}]
  %s3 = inlined_call_operand.vmem [shape: bf16[1824,32], index: 3, kind: output, shape index: {}]
  %s4 = sld [smem:[#allocation0]]
  $region45: #{forward.7} parent=0
    _
  %s6 = ssub.s32 1, %s4
  %s7 = scalar_select 0, %s6, %s4
  loop: start=0, step=1, limit=4
  $region2: #{forward.7} parent=0 // loop_pre_header
    _
  $region3: #{forward.7} parent=0 // loop_header
    %s9 = sphi 0, %s13
    %p10 = scmp.ge.s32.totalorder %s9, 4
    %s19 = sphi 0, %s21
    %s22 = sphi 0, %s19
    %s23 = sphi 0, %s22
    %s39 = sphi 0, %s23
    %s43 = sphi 0, %s43
    %s45 = sphi 0, %s43
    %s46 = sphi 0, %s45
    %s60 = sphi 0, %s46
    %s64 = sphi 0, %s64
    %s66 = sphi 0, %s64
    %s67 = sphi 0, %s66
    %s81 = sphi 0, %s67
    %s87 = sphi 0, %s89
    %s90 = sphi 0, %s87
    %s91 = sphi 0, %s90
    %s107 = sphi 0, %s91
  $region4: #{forward.7} parent=0 // loop_header_branch
    %12 = sbr.rel (%p10) target = $region8
  $region5: #{forward.7} parent=0 // loop_body
    %s14 = ssub.s32 %s9, 1
    %s15 = ssub.s32 %s9, 2
    %s16 = sadd.s32 %s9, 1
    %s17 = ssub.s32 %s9, %s16
    %p18 = scmp.eq.s32.totalorder %s17, 0
    %s20 = sadd.s32 %s19, 1
    %s21 = scalar_select %p18, %s19, %s20
    %p24 = pneg %p18
    %p25 = scmp.eq.s32.totalorder %s9, 1
    %p26 = por %p24, %p25
    %p27 = scmp.ne.s32.totalorder %s19, %s22
    %p28 = scmp.eq.s32.totalorder %s9, 0
    %p29 = por %p27, %p28
    %p30 = scmp.ne.s32.totalorder %s19, %s22
    %p31 = scmp.eq.s32.totalorder %s14, 1
    %p32 = por %p30, %p31
    %p33 = scmp.ne.s32.totalorder %s22, %s23
    %p34 = scmp.eq.s32.totalorder %s14, 0
    %p35 = por %p33, %p34
    %p36 = scmp.ne.s32.totalorder %s22, %s23
    %p37 = scmp.eq.s32.totalorder %s15, 1
    %p38 = por %p36, %p37
    %p40 = scmp.ne.s32.totalorder %s23, %s39
    %p41 = scmp.eq.s32.totalorder %s15, 0
    %p42 = por %p40, %p41
    %s44 = sadd.s32 %s43, 1
    %p47 = scmp.eq.s32.totalorder %s9, 1
    %p48 = scmp.ne.s32.totalorder %s43, %s45
    %p49 = scmp.eq.s32.totalorder %s9, 0
    %p50 = por %p48, %p49
    %p51 = scmp.ne.s32.totalorder %s43, %s45
    %p52 = scmp.eq.s32.totalorder %s14, 1
    %p53 = por %p51, %p52
    %p54 = scmp.ne.s32.totalorder %s45, %s46
    %p55 = scmp.eq.s32.totalorder %s14, 0
    %p56 = por %p54, %p55
    %p57 = scmp.ne.s32.totalorder %s45, %s46
    %p58 = scmp.eq.s32.totalorder %s15, 1
    %p59 = por %p57, %p58
    %p61 = scmp.ne.s32.totalorder %s46, %s60
    %p62 = scmp.eq.s32.totalorder %s15, 0
    %p63 = por %p61, %p62
    %s65 = sadd.s32 %s64, 1
    %p68 = scmp.eq.s32.totalorder %s9, 1
    %p69 = scmp.ne.s32.totalorder %s64, %s66
    %p70 = scmp.eq.s32.totalorder %s9, 0
    %p71 = por %p69, %p70
    %p72 = scmp.ne.s32.totalorder %s64, %s66
    %p73 = scmp.eq.s32.totalorder %s14, 1
    %p74 = por %p72, %p73
    %p75 = scmp.ne.s32.totalorder %s66, %s67
    %p76 = scmp.eq.s32.totalorder %s14, 0
    %p77 = por %p75, %p76
    %p78 = scmp.ne.s32.totalorder %s66, %s67
    %p79 = scmp.eq.s32.totalorder %s15, 1
    %p80 = por %p78, %p79
    %p82 = scmp.ne.s32.totalorder %s67, %s81
    %p83 = scmp.eq.s32.totalorder %s15, 0
    %p84 = por %p82, %p83
    %s85 = ssub.s32 %s9, %s16
    %p86 = scmp.eq.s32.totalorder %s85, 0
    %s88 = sadd.s32 %s87, 1
    %s89 = scalar_select %p86, %s87, %s88
    %p92 = pneg %p86
    %p93 = scmp.eq.s32.totalorder %s9, 1
    %p94 = por %p92, %p93
    %p95 = scmp.ne.s32.totalorder %s87, %s90
    %p96 = scmp.eq.s32.totalorder %s9, 0
    %p97 = por %p95, %p96
    %p98 = scmp.ne.s32.totalorder %s87, %s90
    %p99 = scmp.eq.s32.totalorder %s14, 1
    %p100 = por %p98, %p99
    %p101 = scmp.ne.s32.totalorder %s90, %s91
    %p102 = scmp.eq.s32.totalorder %s14, 0
    %p103 = por %p101, %p102
    %p104 = scmp.ne.s32.totalorder %s90, %s91
    %p105 = scmp.eq.s32.totalorder %s15, 1
    %p106 = por %p104, %p105
    %p108 = scmp.ne.s32.totalorder %s91, %s107
    %p109 = scmp.eq.s32.totalorder %s15, 0
    %p110 = por %p108, %p109
    %p111 = scmp.le.s32.totalorder 1, %s9
    %p112 = scmp.lt.s32.totalorder %s9, 3
    %p113 = pnand %p111, %p112
    %p114 = pneg %p113
    // Predicated region
    $region9: #{forward.7} parent=5 // pred_check
      _
    $region10: #{forward.7} parent=5 // pred_check_branch
      %116 = sbr.rel (%p113) target = $region12
    $region11: #{forward.7} parent=5 // pred_region
      %s117 = ssub.s32 %s9, 1
      // Predicated region
      $region13: #{forward.7} parent=11 // pred_check
        %p118 = pneg %p56
      $region14: #{forward.7} parent=11 // pred_check_branch
        %120 = sbr.rel (%p118) target = $region16
      $region15: #{forward.7} parent=11 // pred_region
        _
      $region16: #{forward.7} parent=11 // pred_fallthru
        _
      // Predicated region
      $region17: #{forward.7} parent=11 // pred_check
        %p121 = pneg %p77
      $region18: #{forward.7} parent=11 // pred_check_branch
        %123 = sbr.rel (%p121) target = $region20
      $region19: #{forward.7} parent=11 // pred_region
        _
      $region20: #{forward.7} parent=11 // pred_fallthru
        _
    $region12: #{forward.7} parent=5 // pred_fallthru
      _
    %p124 = scmp.lt.s32.totalorder %s9, 2
    // Predicated region
    $region21: #{forward.7} parent=5 // pred_check
      %p125 = pneg %p124
    $region22: #{forward.7} parent=5 // pred_check_branch
      %127 = sbr.rel (%p125) target = $region24
    $region23: #{forward.7} parent=5 // pred_region
      // Predicated region
      $region25: #{forward.7} parent=23 // pred_check
        %p128 = pneg %p29
      $region26: #{forward.7} parent=23 // pred_check_branch
        %130 = sbr.rel (%p128) target = $region28
      $region27: #{forward.7} parent=23 // pred_region
        %s131 = smul.u32 114, %s9
        %p132 = scmp.lt.s32.totalorder %s131, 227
        %s133 = scalar_select %p132, %s131, 227
        %s134 = smul.addr %s133, 4
        %s135 = scalar_lea.vmem %s0, %s134
        %s136 = smul.u32 114, %s9
      $region28: #{forward.7} parent=23 // pred_fallthru
        _
    $region24: #{forward.7} parent=5 // pred_fallthru
      _
    %p137 = scmp.le.s32.totalorder 1, %s9
    %p138 = scmp.lt.s32.totalorder %s9, 3
    %p139 = pnand %p137, %p138
    %p140 = pneg %p139
    // Predicated region
    $region29: #{forward.7} parent=5 // pred_check
      _
    $region30: #{forward.7} parent=5 // pred_check_branch
      %142 = sbr.rel (%p139) target = $region32
    $region31: #{forward.7} parent=5 // pred_region
      %s143 = ssub.s32 %s9, 1
      %s144 = smul.u32 114, %s14
      %p145 = scmp.lt.s32.totalorder %s144, 227
      %s146 = scalar_select %p145, %s144, 227
      %s147 = smul.addr %s146, 4
      %s148 = scalar_lea.vmem %s0, %s147
      %p149 = pneg %p35
      %p150 = pneg %p32
      %p151 = pneg %p56
      %p152 = pneg %p53
      %p153 = pneg %p77
      %p154 = pneg %p74
      %p155 = pneg %p103
      %p156 = pneg %p100
      %s157 = smul.u32 114, %s14
      %p158 = scmp.lt.s32.totalorder %s157, 227
      %s159 = scalar_select %p158, %s157, 227
      %s160 = smul.addr %s159, 4
      %s161 = scalar_lea.vmem %s3, %s160
      %s162 = smul.u32 114, %s14
      %p163 = scmp.lt.s32.totalorder %s162, 227
      %s164 = scalar_select %p163, %s162, 227
      %s165 = smul.addr %s164, 4
      %s166 = scalar_lea.vmem %s0, %s165
      %s167 = smul.u32 114, %s14
      %s168 = smul.u32 114, %s14
      %p169 = scmp.lt.s32.totalorder %s168, 227
      %s170 = scalar_select %p169, %s168, 227
      %s171 = smul.addr %s170, 4
      %s172 = scalar_lea.vmem %s3, %s171
      %s173 = smul.u32 114, %s14
      %v175 = vld [vmem:[%s166] sm:$0xf]
      %v176 = vld [vmem:[%s166 + $0x4] sm:$0xf]
      %v177 = vld [vmem:[%s166 + $0x8] sm:$0xf]
      %v178 = vld [vmem:[%s166 + $0xc] sm:$0xf]
      %v179 = vld [vmem:[%s166 + $0x10] sm:$0xf]
      %v180 = vld [vmem:[%s166 + $0x14] sm:$0xf]
      %v181 = vld [vmem:[%s166 + $0x18] sm:$0xf]
      %v182 = vld [vmem:[%s166 + $0x1c] sm:$0xf]
      %v183 = vld [vmem:[%s166 + $0x20] sm:$0xf]
      %v184 = vld [vmem:[%s166 + $0x24] sm:$0xf]
      %v185 = vld [vmem:[%s166 + $0x28] sm:$0xf]
      %v186 = vld [vmem:[%s166 + $0x2c] sm:$0xf]
      %v187 = vld [vmem:[%s166 + $0x30] sm:$0xf]
      %v188 = vld [vmem:[%s166 + $0x34] sm:$0xf]
      %v189 = vld [vmem:[%s166 + $0x38] sm:$0xf]
      %v190 = vld [vmem:[%s166 + $0x3c] sm:$0xf]
      %v191 = vld [vmem:[%s166 + $0x40] sm:$0xf]
      %v192 = vld [vmem:[%s166 + $0x44] sm:$0xf]
      %v193 = vld [vmem:[%s166 + $0x48] sm:$0xf]
      %v194 = vld [vmem:[%s166 + $0x4c] sm:$0xf]
      %v195 = vld [vmem:[%s166 + $0x50] sm:$0xf]
      %v196 = vld [vmem:[%s166 + $0x54] sm:$0xf]
      %v197 = vld [vmem:[%s166 + $0x58] sm:$0xf]
      %v198 = vld [vmem:[%s166 + $0x5c] sm:$0xf]
      %v199 = vld [vmem:[%s166 + $0x60] sm:$0xf]
      %v200 = vld [vmem:[%s166 + $0x64] sm:$0xf]
      %v201 = vld [vmem:[%s166 + $0x68] sm:$0xf]
      %v202 = vld [vmem:[%s166 + $0x6c] sm:$0xf]
      %v203 = vld [vmem:[%s166 + $0x70] sm:$0xf]
      %v204 = vld [vmem:[%s166 + $0x74] sm:$0xf]
      %v205 = vld [vmem:[%s166 + $0x78] sm:$0xf]
      %v206 = vld [vmem:[%s166 + $0x7c] sm:$0xf]
      %v207 = vld [vmem:[%s166 + $0x80] sm:$0xf]
      %v208 = vld [vmem:[%s166 + $0x84] sm:$0xf]
      %v209 = vld [vmem:[%s166 + $0x88] sm:$0xf]
      %v210 = vld [vmem:[%s166 + $0x8c] sm:$0xf]
      %v211 = vld [vmem:[%s166 + $0x90] sm:$0xf]
      %v212 = vld [vmem:[%s166 + $0x94] sm:$0xf]
      %v213 = vld [vmem:[%s166 + $0x98] sm:$0xf]
      %v214 = vld [vmem:[%s166 + $0x9c] sm:$0xf]
      %v215 = vld [vmem:[%s166 + $0xa0] sm:$0xf]
      %v216 = vld [vmem:[%s166 + $0xa4] sm:$0xf]
      %v217 = vld [vmem:[%s166 + $0xa8] sm:$0xf]
      %v218 = vld [vmem:[%s166 + $0xac] sm:$0xf]
      %v219 = vld [vmem:[%s166 + $0xb0] sm:$0xf]
      %v220 = vld [vmem:[%s166 + $0xb4] sm:$0xf]
      %v221 = vld [vmem:[%s166 + $0xb8] sm:$0xf]
      %v222 = vld [vmem:[%s166 + $0xbc] sm:$0xf]
      %v223 = vld [vmem:[%s166 + $0xc0] sm:$0xf]
      %v224 = vld [vmem:[%s166 + $0xc4] sm:$0xf]
      %v225 = vld [vmem:[%s166 + $0xc8] sm:$0xf]
      %v226 = vld [vmem:[%s166 + $0xcc] sm:$0xf]
      %v227 = vld [vmem:[%s166 + $0xd0] sm:$0xf]
      %v228 = vld [vmem:[%s166 + $0xd4] sm:$0xf]
      %v229 = vld [vmem:[%s166 + $0xd8] sm:$0xf]
      %v230 = vld [vmem:[%s166 + $0xdc] sm:$0xf]
      %v231 = vld [vmem:[%s166 + $0xe0] sm:$0xf]
      %v232 = vld [vmem:[%s166 + $0xe4] sm:$0xf]
      %v233 = vld [vmem:[%s166 + $0xe8] sm:$0xf]
      %v234 = vld [vmem:[%s166 + $0xec] sm:$0xf]
      %v235 = vld [vmem:[%s166 + $0xf0] sm:$0xf]
      %v236 = vld [vmem:[%s166 + $0xf4] sm:$0xf]
      %v237 = vld [vmem:[%s166 + $0xf8] sm:$0xf]
      %v238 = vld [vmem:[%s166 + $0xfc] sm:$0xf]
      %v239 = vld [vmem:[%s166 + $0x100] sm:$0xf]
      %v240 = vld [vmem:[%s166 + $0x104] sm:$0xf]
      %v241 = vld [vmem:[%s166 + $0x108] sm:$0xf]
      %v242 = vld [vmem:[%s166 + $0x10c] sm:$0xf]
      %v243 = vld [vmem:[%s166 + $0x110] sm:$0xf]
      %v244 = vld [vmem:[%s166 + $0x114] sm:$0xf]
      %v245 = vld [vmem:[%s166 + $0x118] sm:$0xf]
      %v246 = vld [vmem:[%s166 + $0x11c] sm:$0xf]
      %v247 = vld [vmem:[%s166 + $0x120] sm:$0xf]
      %v248 = vld [vmem:[%s166 + $0x124] sm:$0xf]
      %v249 = vld [vmem:[%s166 + $0x128] sm:$0xf]
      %v250 = vld [vmem:[%s166 + $0x12c] sm:$0xf]
      %v251 = vld [vmem:[%s166 + $0x130] sm:$0xf]
      %v252 = vld [vmem:[%s166 + $0x134] sm:$0xf]
      %v253 = vld [vmem:[%s166 + $0x138] sm:$0xf]
      %v254 = vld [vmem:[%s166 + $0x13c] sm:$0xf]
      %v255 = vld [vmem:[%s166 + $0x140] sm:$0xf]
      %v256 = vld [vmem:[%s166 + $0x144] sm:$0xf]
      %v257 = vld [vmem:[%s166 + $0x148] sm:$0xf]
      %v258 = vld [vmem:[%s166 + $0x14c] sm:$0xf]
      %v259 = vld [vmem:[%s166 + $0x150] sm:$0xf]
      %v260 = vld [vmem:[%s166 + $0x154] sm:$0xf]
      %v261 = vld [vmem:[%s166 + $0x158] sm:$0xf]
      %v262 = vld [vmem:[%s166 + $0x15c] sm:$0xf]
      %v263 = vld [vmem:[%s166 + $0x160] sm:$0xf]
      %v264 = vld [vmem:[%s166 + $0x164] sm:$0xf]
      %v265 = vld [vmem:[%s166 + $0x168] sm:$0xf]
      %v266 = vld [vmem:[%s166 + $0x16c] sm:$0xf]
      %v267 = vld [vmem:[%s166 + $0x170] sm:$0xf]
      %v268 = vld [vmem:[%s166 + $0x174] sm:$0xf]
      %v269 = vld [vmem:[%s166 + $0x178] sm:$0xf]
      %v270 = vld [vmem:[%s166 + $0x17c] sm:$0xf]
      %v271 = vld [vmem:[%s166 + $0x180] sm:$0xf]
      %v272 = vld [vmem:[%s166 + $0x184] sm:$0xf]
      %v273 = vld [vmem:[%s166 + $0x188] sm:$0xf]
      %v274 = vld [vmem:[%s166 + $0x18c] sm:$0xf]
      %v275 = vld [vmem:[%s166 + $0x190] sm:$0xf]
      %v276 = vld [vmem:[%s166 + $0x194] sm:$0xf]
      %v277 = vld [vmem:[%s166 + $0x198] sm:$0xf]
      %v278 = vld [vmem:[%s166 + $0x19c] sm:$0xf]
      %v279 = vld [vmem:[%s166 + $0x1a0] sm:$0xf]
      %v280 = vld [vmem:[%s166 + $0x1a4] sm:$0xf]
      %v281 = vld [vmem:[%s166 + $0x1a8] sm:$0xf]
      %v282 = vld [vmem:[%s166 + $0x1ac] sm:$0xf]
      %v283 = vld [vmem:[%s166 + $0x1b0] sm:$0xf]
      %v284 = vld [vmem:[%s166 + $0x1b4] sm:$0xf]
      %v285 = vld [vmem:[%s166 + $0x1b8] sm:$0xf]
      %v286 = vld [vmem:[%s166 + $0x1bc] sm:$0xf]
      %v287 = vld [vmem:[%s166 + $0x1c0] sm:$0xf]
      %v288 = vld [vmem:[%s166 + $0x1c4] sm:$0xf]
      %v289 = vld [vmem:[%s1] sm:$0xf]
      %v290 = vld [vmem:[%s1 + $0x4] sm:$0xf]
      %v291 = vld [vmem:[%s1 + $0x8] sm:$0xf]
      %v292 = vld [vmem:[%s1 + $0xc] sm:$0x3]
      %v293 = vld [vmem:[%s2] sm:$0x1]
      %v295 = vperm.slane %v293, 0
      %v411 = vunpack.c.l.b16 %v175
      %v412 = vunpack.c.l.b16 %v176
      %v413 = vunpack.c.l.b16 %v177
      %v414 = vunpack.c.l.b16 %v178
      %v415 = vunpack.c.l.b16 %v179
      %v416 = vunpack.c.l.b16 %v180
      %v417 = vunpack.c.l.b16 %v181
      %v418 = vunpack.c.l.b16 %v182
      %v419 = vunpack.c.l.b16 %v183
      %v420 = vunpack.c.l.b16 %v184
      %v421 = vunpack.c.l.b16 %v185
      %v422 = vunpack.c.l.b16 %v186
      %v423 = vunpack.c.l.b16 %v187
      %v424 = vunpack.c.l.b16 %v188
      %v425 = vunpack.c.l.b16 %v189
      %v426 = vunpack.c.l.b16 %v190
      %v427 = vunpack.c.l.b16 %v191
      %v428 = vunpack.c.l.b16 %v192
      %v429 = vunpack.c.l.b16 %v193
      %v430 = vunpack.c.l.b16 %v194
      %v431 = vunpack.c.l.b16 %v195
      %v432 = vunpack.c.l.b16 %v196
      %v433 = vunpack.c.l.b16 %v197
      %v434 = vunpack.c.l.b16 %v198
      %v435 = vunpack.c.l.b16 %v199
      %v436 = vunpack.c.l.b16 %v200
      %v437 = vunpack.c.l.b16 %v201
      %v438 = vunpack.c.l.b16 %v202
      %v439 = vunpack.c.l.b16 %v203
      %v440 = vunpack.c.l.b16 %v204
      %v441 = vunpack.c.l.b16 %v205
      %v442 = vunpack.c.l.b16 %v206
      %v443 = vunpack.c.l.b16 %v207
      %v444 = vunpack.c.l.b16 %v208
      %v445 = vunpack.c.l.b16 %v209
      %v446 = vunpack.c.l.b16 %v210
      %v447 = vunpack.c.l.b16 %v211
      %v448 = vunpack.c.l.b16 %v212
      %v449 = vunpack.c.l.b16 %v213
      %v450 = vunpack.c.l.b16 %v214
      %v451 = vunpack.c.l.b16 %v215
      %v452 = vunpack.c.l.b16 %v216
      %v453 = vunpack.c.l.b16 %v217
      %v454 = vunpack.c.l.b16 %v218
      %v455 = vunpack.c.l.b16 %v219
      %v456 = vunpack.c.l.b16 %v220
      %v457 = vunpack.c.l.b16 %v221
      %v458 = vunpack.c.l.b16 %v222
      %v459 = vunpack.c.l.b16 %v223
      %v460 = vunpack.c.l.b16 %v224
      %v461 = vunpack.c.l.b16 %v225
      %v462 = vunpack.c.l.b16 %v226
      %v463 = vunpack.c.l.b16 %v227
      %v464 = vunpack.c.l.b16 %v228
      %v465 = vunpack.c.l.b16 %v229
      %v466 = vunpack.c.l.b16 %v230
      %v467 = vunpack.c.l.b16 %v231
      %v468 = vunpack.c.l.b16 %v232
      %v469 = vunpack.c.l.b16 %v233
      %v470 = vunpack.c.l.b16 %v234
      %v471 = vunpack.c.l.b16 %v235
      %v472 = vunpack.c.l.b16 %v236
      %v473 = vunpack.c.l.b16 %v237
      %v474 = vunpack.c.l.b16 %v238
      %v475 = vunpack.c.l.b16 %v239
      %v476 = vunpack.c.l.b16 %v240
      %v477 = vunpack.c.l.b16 %v241
      %v478 = vunpack.c.l.b16 %v242
      %v479 = vunpack.c.l.b16 %v243
      %v480 = vunpack.c.l.b16 %v244
      %v481 = vunpack.c.l.b16 %v245
      %v482 = vunpack.c.l.b16 %v246
      %v483 = vunpack.c.l.b16 %v247
      %v484 = vunpack.c.l.b16 %v248
      %v485 = vunpack.c.l.b16 %v249
      %v486 = vunpack.c.l.b16 %v250
      %v487 = vunpack.c.l.b16 %v251
      %v488 = vunpack.c.l.b16 %v252
      %v489 = vunpack.c.l.b16 %v253
      %v490 = vunpack.c.l.b16 %v254
      %v491 = vunpack.c.l.b16 %v255
      %v492 = vunpack.c.l.b16 %v256
      %v493 = vunpack.c.l.b16 %v257
      %v494 = vunpack.c.l.b16 %v258
      %v495 = vunpack.c.l.b16 %v259
      %v496 = vunpack.c.l.b16 %v260
      %v497 = vunpack.c.l.b16 %v261
      %v498 = vunpack.c.l.b16 %v262
      %v499 = vunpack.c.l.b16 %v263
      %v500 = vunpack.c.l.b16 %v264
      %v501 = vunpack.c.l.b16 %v265
      %v502 = vunpack.c.l.b16 %v266
      %v503 = vunpack.c.l.b16 %v267
      %v504 = vunpack.c.l.b16 %v268
      %v505 = vunpack.c.l.b16 %v269
      %v506 = vunpack.c.l.b16 %v270
      %v507 = vunpack.c.l.b16 %v271
      %v508 = vunpack.c.l.b16 %v272
      %v509 = vunpack.c.l.b16 %v273
      %v510 = vunpack.c.l.b16 %v274
      %v511 = vunpack.c.l.b16 %v275
      %v512 = vunpack.c.l.b16 %v276
      %v513 = vunpack.c.l.b16 %v277
      %v514 = vunpack.c.l.b16 %v278
      %v515 = vunpack.c.l.b16 %v279
      %v516 = vunpack.c.l.b16 %v280
      %v517 = vunpack.c.l.b16 %v281
      %v518 = vunpack.c.l.b16 %v282
      %v519 = vunpack.c.l.b16 %v283
      %v520 = vunpack.c.l.b16 %v284
      %v521 = vunpack.c.l.b16 %v285
      %v522 = vunpack.c.l.b16 %v286
      %v523 = vunpack.c.l.b16 %v287
      %v524 = vunpack.c.l.b16 %v288
      %v525 = vpack.c.b16 %v412, %v411
      %v526 = vpack.c.b16 %v414, %v413
      %v527 = vpack.c.b16 %v416, %v415
      %v528 = vpack.c.b16 %v418, %v417
      %v529 = vpack.c.b16 %v420, %v419
      %v530 = vpack.c.b16 %v422, %v421
      %v531 = vpack.c.b16 %v424, %v423
      %v532 = vpack.c.b16 %v426, %v425
      %v533 = vpack.c.b16 %v428, %v427
      %v534 = vpack.c.b16 %v430, %v429
      %v535 = vpack.c.b16 %v432, %v431
      %v536 = vpack.c.b16 %v434, %v433
      %v537 = vpack.c.b16 %v436, %v435
      %v538 = vpack.c.b16 %v438, %v437
      %v539 = vpack.c.b16 %v440, %v439
      %v540 = vpack.c.b16 %v442, %v441
      %v541 = vpack.c.b16 %v444, %v443
      %v542 = vpack.c.b16 %v446, %v445
      %v543 = vpack.c.b16 %v448, %v447
      %v544 = vpack.c.b16 %v450, %v449
      %v545 = vpack.c.b16 %v452, %v451
      %v546 = vpack.c.b16 %v454, %v453
      %v547 = vpack.c.b16 %v456, %v455
      %v548 = vpack.c.b16 %v458, %v457
      %v549 = vpack.c.b16 %v460, %v459
      %v550 = vpack.c.b16 %v462, %v461
      %v551 = vpack.c.b16 %v464, %v463
      %v552 = vpack.c.b16 %v466, %v465
      %v553 = vpack.c.b16 %v468, %v467
      %v554 = vpack.c.b16 %v470, %v469
      %v555 = vpack.c.b16 %v472, %v471
      %v556 = vpack.c.b16 %v474, %v473
      %v557 = vpack.c.b16 %v476, %v475
      %v558 = vpack.c.b16 %v478, %v477
      %v559 = vpack.c.b16 %v480, %v479
      %v560 = vpack.c.b16 %v482, %v481
      %v561 = vpack.c.b16 %v484, %v483
      %v562 = vpack.c.b16 %v486, %v485
      %v563 = vpack.c.b16 %v488, %v487
      %v564 = vpack.c.b16 %v490, %v489
      %v565 = vpack.c.b16 %v492, %v491
      %v566 = vpack.c.b16 %v494, %v493
      %v567 = vpack.c.b16 %v496, %v495
      %v568 = vpack.c.b16 %v498, %v497
      %v569 = vpack.c.b16 %v500, %v499
      %v570 = vpack.c.b16 %v502, %v501
      %v571 = vpack.c.b16 %v504, %v503
      %v572 = vpack.c.b16 %v506, %v505
      %v573 = vpack.c.b16 %v508, %v507
      %v574 = vpack.c.b16 %v510, %v509
      %v575 = vpack.c.b16 %v512, %v511
      %v576 = vpack.c.b16 %v514, %v513
      %v577 = vpack.c.b16 %v516, %v515
      %v578 = vpack.c.b16 %v518, %v517
      %v579 = vpack.c.b16 %v520, %v519
      %v580 = vpack.c.b16 %v522, %v521
      %v581 = vpack.c.b16 %v524, %v523
      %v586 = vunpack.c.l.b16 %v289
      %v587 = vunpack.c.l.b16 %v290
      %v588 = vunpack.c.l.b16 %v291
      %v589 = vunpack.c.l.b16 %v292
      %v590 = vpack.c.b16 %v587, %v586
      %v591 = vpack.c.b16 %v589, %v588
      %vm593 = vcmask 220160
      %v595 = vsel %vm593, %v525, 0
      %v598 = vsel %vm593, %v526, 0
      %v601 = vsel %vm593, %v527, 0
      %v604 = vsel %vm593, %v528, 0
      %v607 = vsel %vm593, %v529, 0
      %v610 = vsel %vm593, %v530, 0
      %v613 = vsel %vm593, %v531, 0
      %v616 = vsel %vm593, %v532, 0
      %v619 = vsel %vm593, %v533, 0
      %v622 = vsel %vm593, %v534, 0
      %v625 = vsel %vm593, %v535, 0
      %v628 = vsel %vm593, %v536, 0
      %v631 = vsel %vm593, %v537, 0
      %v634 = vsel %vm593, %v538, 0
      %v637 = vsel %vm593, %v539, 0
      %v640 = vsel %vm593, %v540, 0
      %v643 = vsel %vm593, %v541, 0
      %v646 = vsel %vm593, %v542, 0
      %v649 = vsel %vm593, %v543, 0
      %v652 = vsel %vm593, %v544, 0
      %v655 = vsel %vm593, %v545, 0
      %v658 = vsel %vm593, %v546, 0
      %v661 = vsel %vm593, %v547, 0
      %v664 = vsel %vm593, %v548, 0
      %v667 = vsel %vm593, %v549, 0
      %v670 = vsel %vm593, %v550, 0
      %v673 = vsel %vm593, %v551, 0
      %v676 = vsel %vm593, %v552, 0
      %v679 = vsel %vm593, %v553, 0
      %v682 = vsel %vm593, %v554, 0
      %v685 = vsel %vm593, %v555, 0
      %v688 = vsel %vm593, %v556, 0
      %v691 = vsel %vm593, %v557, 0
      %v694 = vsel %vm593, %v558, 0
      %v697 = vsel %vm593, %v559, 0
      %v700 = vsel %vm593, %v560, 0
      %v703 = vsel %vm593, %v561, 0
      %v706 = vsel %vm593, %v562, 0
      %v709 = vsel %vm593, %v563, 0
      %v712 = vsel %vm593, %v564, 0
      %v715 = vsel %vm593, %v565, 0
      %v718 = vsel %vm593, %v566, 0
      %v721 = vsel %vm593, %v567, 0
      %v724 = vsel %vm593, %v568, 0
      %v727 = vsel %vm593, %v569, 0
      %v730 = vsel %vm593, %v570, 0
      %v733 = vsel %vm593, %v571, 0
      %v736 = vsel %vm593, %v572, 0
      %v739 = vsel %vm593, %v573, 0
      %v742 = vsel %vm593, %v574, 0
      %v745 = vsel %vm593, %v575, 0
      %v748 = vsel %vm593, %v576, 0
      %v751 = vsel %vm593, %v577, 0
      %v754 = vsel %vm593, %v578, 0
      %v757 = vsel %vm593, %v579, 0
      %v760 = vsel %vm593, %v580, 0
      %v763 = vsel %vm593, %v581, 0
      %vm765 = vcmask 1044480
      %vm766 = vcmask 1045504
      %v767 = vsel %vm765, 4294967295, 65535
      %v768 = vsel %vm766, %v767, 0
      %v770 = vand.u32 %v591, %v768
      %772 = vmatpush.bf16.msra.mxu0 0
      %773 = vmatpush.bf16.msra.mxu0 0
      %774 = vmatpush.bf16.msra.mxu0 0
      %775 = vmatpush.bf16.msra.mxu0 0
      %776 = vmatpush.bf16.msra.mxu0 0
      %777 = vmatpush.bf16.msra.mxu0 0
      %778 = vmatpush.bf16.msra.mxu0 %v770
      %779 = vmatpush.bf16.msra.mxu0 %v590
      %780 = vmatmul.bf16.gmra.mxu0 %v595
      %v781 = vpop.f32.mrf.mxu0
      %v782 = vadd.f32 %v295, %v781
      %v783 = vpop.f32.mrf.mxu0
      %v784 = vadd.f32 %v295, %v783
      %785 = vmatmul.bf16.gmra.mxu0 %v598
      %v786 = vpop.f32.mrf.mxu0
      %v787 = vadd.f32 %v295, %v786
      %v788 = vpop.f32.mrf.mxu0
      %v789 = vadd.f32 %v295, %v788
      %790 = vmatmul.bf16.gmra.mxu0 %v601
      %v791 = vpop.f32.mrf.mxu0
      %v792 = vadd.f32 %v295, %v791
      %v793 = vpop.f32.mrf.mxu0
      %v794 = vadd.f32 %v295, %v793
      %795 = vmatmul.bf16.gmra.mxu0 %v604
      %v796 = vpop.f32.mrf.mxu0
      %v797 = vadd.f32 %v295, %v796
      %v798 = vpop.f32.mrf.mxu0
      %v799 = vadd.f32 %v295, %v798
      %800 = vmatmul.bf16.gmra.mxu0 %v607
      %v801 = vpop.f32.mrf.mxu0
      %v802 = vadd.f32 %v295, %v801
      %v803 = vpop.f32.mrf.mxu0
      %v804 = vadd.f32 %v295, %v803
      %805 = vmatmul.bf16.gmra.mxu0 %v610
      %v806 = vpop.f32.mrf.mxu0
      %v807 = vadd.f32 %v295, %v806
      %v808 = vpop.f32.mrf.mxu0
      %v809 = vadd.f32 %v295, %v808
      %810 = vmatmul.bf16.gmra.mxu0 %v613
      %v811 = vpop.f32.mrf.mxu0
      %v812 = vadd.f32 %v295, %v811
      %v813 = vpop.f32.mrf.mxu0
      %v814 = vadd.f32 %v295, %v813
      %815 = vmatmul.bf16.gmra.mxu0 %v616
      %v816 = vpop.f32.mrf.mxu0
      %v817 = vadd.f32 %v295, %v816
      %v818 = vpop.f32.mrf.mxu0
      %v819 = vadd.f32 %v295, %v818
      %820 = vmatmul.bf16.gmra.mxu0 %v619
      %v821 = vpop.f32.mrf.mxu0
      %v822 = vadd.f32 %v295, %v821
      %v823 = vpop.f32.mrf.mxu0
      %v824 = vadd.f32 %v295, %v823
      %825 = vmatmul.bf16.gmra.mxu0 %v622
      %v826 = vpop.f32.mrf.mxu0
      %v827 = vadd.f32 %v295, %v826
      %v828 = vpop.f32.mrf.mxu0
      %v829 = vadd.f32 %v295, %v828
      %830 = vmatmul.bf16.gmra.mxu0 %v625
      %v831 = vpop.f32.mrf.mxu0
      %v832 = vadd.f32 %v295, %v831
      %v833 = vpop.f32.mrf.mxu0
      %v834 = vadd.f32 %v295, %v833
      %835 = vmatmul.bf16.gmra.mxu0 %v628
      %v836 = vpop.f32.mrf.mxu0
      %v837 = vadd.f32 %v295, %v836
      %v838 = vpop.f32.mrf.mxu0
      %v839 = vadd.f32 %v295, %v838
      %840 = vmatmul.bf16.gmra.mxu0 %v631
      %v841 = vpop.f32.mrf.mxu0
      %v842 = vadd.f32 %v295, %v841
      %v843 = vpop.f32.mrf.mxu0
      %v844 = vadd.f32 %v295, %v843
      %845 = vmatmul.bf16.gmra.mxu0 %v634
      %v846 = vpop.f32.mrf.mxu0
      %v847 = vadd.f32 %v295, %v846
      %v848 = vpop.f32.mrf.mxu0
      %v849 = vadd.f32 %v295, %v848
      %850 = vmatmul.bf16.gmra.mxu0 %v637
      %v851 = vpop.f32.mrf.mxu0
      %v852 = vadd.f32 %v295, %v851
      %v853 = vpop.f32.mrf.mxu0
      %v854 = vadd.f32 %v295, %v853
      %855 = vmatmul.bf16.gmra.mxu0 %v640
      %v856 = vpop.f32.mrf.mxu0
      %v857 = vadd.f32 %v295, %v856
      %v858 = vpop.f32.mrf.mxu0
      %v859 = vadd.f32 %v295, %v858
      %860 = vmatmul.bf16.gmra.mxu0 %v643
      %v861 = vpop.f32.mrf.mxu0
      %v862 = vadd.f32 %v295, %v861
      %v863 = vpop.f32.mrf.mxu0
      %v864 = vadd.f32 %v295, %v863
      %865 = vmatmul.bf16.gmra.mxu0 %v646
      %v866 = vpop.f32.mrf.mxu0
      %v867 = vadd.f32 %v295, %v866
      %v868 = vpop.f32.mrf.mxu0
      %v869 = vadd.f32 %v295, %v868
      %870 = vmatmul.bf16.gmra.mxu0 %v649
      %v871 = vpop.f32.mrf.mxu0
      %v872 = vadd.f32 %v295, %v871
      %v873 = vpop.f32.mrf.mxu0
      %v874 = vadd.f32 %v295, %v873
      %875 = vmatmul.bf16.gmra.mxu0 %v652
      %v876 = vpop.f32.mrf.mxu0
      %v877 = vadd.f32 %v295, %v876
      %v878 = vpop.f32.mrf.mxu0
      %v879 = vadd.f32 %v295, %v878
      %880 = vmatmul.bf16.gmra.mxu0 %v655
      %v881 = vpop.f32.mrf.mxu0
      %v882 = vadd.f32 %v295, %v881
      %v883 = vpop.f32.mrf.mxu0
      %v884 = vadd.f32 %v295, %v883
      %885 = vmatmul.bf16.gmra.mxu0 %v658
      %v886 = vpop.f32.mrf.mxu0
      %v887 = vadd.f32 %v295, %v886
      %v888 = vpop.f32.mrf.mxu0
      %v889 = vadd.f32 %v295, %v888
      %890 = vmatmul.bf16.gmra.mxu0 %v661
      %v891 = vpop.f32.mrf.mxu0
      %v892 = vadd.f32 %v295, %v891
      %v893 = vpop.f32.mrf.mxu0
      %v894 = vadd.f32 %v295, %v893
      %895 = vmatmul.bf16.gmra.mxu0 %v664
      %v896 = vpop.f32.mrf.mxu0
      %v897 = vadd.f32 %v295, %v896
      %v898 = vpop.f32.mrf.mxu0
      %v899 = vadd.f32 %v295, %v898
      %900 = vmatmul.bf16.gmra.mxu0 %v667
      %v901 = vpop.f32.mrf.mxu0
      %v902 = vadd.f32 %v295, %v901
      %v903 = vpop.f32.mrf.mxu0
      %v904 = vadd.f32 %v295, %v903
      %905 = vmatmul.bf16.gmra.mxu0 %v670
      %v906 = vpop.f32.mrf.mxu0
      %v907 = vadd.f32 %v295, %v906
      %v908 = vpop.f32.mrf.mxu0
      %v909 = vadd.f32 %v295, %v908
      %910 = vmatmul.bf16.gmra.mxu0 %v673
      %v911 = vpop.f32.mrf.mxu0
      %v912 = vadd.f32 %v295, %v911
      %v913 = vpop.f32.mrf.mxu0
      %v914 = vadd.f32 %v295, %v913
      %915 = vmatmul.bf16.gmra.mxu0 %v676
      %v916 = vpop.f32.mrf.mxu0
      %v917 = vadd.f32 %v295, %v916
      %v918 = vpop.f32.mrf.mxu0
      %v919 = vadd.f32 %v295, %v918
      %920 = vmatmul.bf16.gmra.mxu0 %v679
      %v921 = vpop.f32.mrf.mxu0
      %v922 = vadd.f32 %v295, %v921
      %v923 = vpop.f32.mrf.mxu0
      %v924 = vadd.f32 %v295, %v923
      %925 = vmatmul.bf16.gmra.mxu0 %v682
      %v926 = vpop.f32.mrf.mxu0
      %v927 = vadd.f32 %v295, %v926
      %v928 = vpop.f32.mrf.mxu0
      %v929 = vadd.f32 %v295, %v928
      %930 = vmatmul.bf16.gmra.mxu0 %v685
      %v931 = vpop.f32.mrf.mxu0
      %v932 = vadd.f32 %v295, %v931
      %v933 = vpop.f32.mrf.mxu0
      %v934 = vadd.f32 %v295, %v933
      %935 = vmatmul.bf16.gmra.mxu0 %v688
      %v936 = vpop.f32.mrf.mxu0
      %v937 = vadd.f32 %v295, %v936
      %v938 = vpop.f32.mrf.mxu0
      %v939 = vadd.f32 %v295, %v938
      %940 = vmatmul.bf16.gmra.mxu0 %v691
      %v941 = vpop.f32.mrf.mxu0
      %v942 = vadd.f32 %v295, %v941
      %v943 = vpop.f32.mrf.mxu0
      %v944 = vadd.f32 %v295, %v943
      %945 = vmatmul.bf16.gmra.mxu0 %v694
      %v946 = vpop.f32.mrf.mxu0
      %v947 = vadd.f32 %v295, %v946
      %v948 = vpop.f32.mrf.mxu0
      %v949 = vadd.f32 %v295, %v948
      %950 = vmatmul.bf16.gmra.mxu0 %v697
      %v951 = vpop.f32.mrf.mxu0
      %v952 = vadd.f32 %v295, %v951
      %v953 = vpop.f32.mrf.mxu0
      %v954 = vadd.f32 %v295, %v953
      %955 = vmatmul.bf16.gmra.mxu0 %v700
      %v956 = vpop.f32.mrf.mxu0
      %v957 = vadd.f32 %v295, %v956
      %v958 = vpop.f32.mrf.mxu0
      %v959 = vadd.f32 %v295, %v958
      %960 = vmatmul.bf16.gmra.mxu0 %v703
      %v961 = vpop.f32.mrf.mxu0
      %v962 = vadd.f32 %v295, %v961
      %v963 = vpop.f32.mrf.mxu0
      %v964 = vadd.f32 %v295, %v963
      %965 = vmatmul.bf16.gmra.mxu0 %v706
      %v966 = vpop.f32.mrf.mxu0
      %v967 = vadd.f32 %v295, %v966
      %v968 = vpop.f32.mrf.mxu0
      %v969 = vadd.f32 %v295, %v968
      %970 = vmatmul.bf16.gmra.mxu0 %v709
      %v971 = vpop.f32.mrf.mxu0
      %v972 = vadd.f32 %v295, %v971
      %v973 = vpop.f32.mrf.mxu0
      %v974 = vadd.f32 %v295, %v973
      %975 = vmatmul.bf16.gmra.mxu0 %v712
      %v976 = vpop.f32.mrf.mxu0
      %v977 = vadd.f32 %v295, %v976
      %v978 = vpop.f32.mrf.mxu0
      %v979 = vadd.f32 %v295, %v978
      %980 = vmatmul.bf16.gmra.mxu0 %v715
      %v981 = vpop.f32.mrf.mxu0
      %v982 = vadd.f32 %v295, %v981
      %v983 = vpop.f32.mrf.mxu0
      %v984 = vadd.f32 %v295, %v983
      %985 = vmatmul.bf16.gmra.mxu0 %v718
      %v986 = vpop.f32.mrf.mxu0
      %v987 = vadd.f32 %v295, %v986
      %v988 = vpop.f32.mrf.mxu0
      %v989 = vadd.f32 %v295, %v988
      %990 = vmatmul.bf16.gmra.mxu0 %v721
      %v991 = vpop.f32.mrf.mxu0
      %v992 = vadd.f32 %v295, %v991
      %v993 = vpop.f32.mrf.mxu0
      %v994 = vadd.f32 %v295, %v993
      %995 = vmatmul.bf16.gmra.mxu0 %v724
      %v996 = vpop.f32.mrf.mxu0
      %v997 = vadd.f32 %v295, %v996
      %v998 = vpop.f32.mrf.mxu0
      %v999 = vadd.f32 %v295, %v998
      %1000 = vmatmul.bf16.gmra.mxu0 %v727
      %v1001 = vpop.f32.mrf.mxu0
      %v1002 = vadd.f32 %v295, %v1001
      %v1003 = vpop.f32.mrf.mxu0
      %v1004 = vadd.f32 %v295, %v1003
      %1005 = vmatmul.bf16.gmra.mxu0 %v730
      %v1006 = vpop.f32.mrf.mxu0
      %v1007 = vadd.f32 %v295, %v1006
      %v1008 = vpop.f32.mrf.mxu0
      %v1009 = vadd.f32 %v295, %v1008
      %1010 = vmatmul.bf16.gmra.mxu0 %v733
      %v1011 = vpop.f32.mrf.mxu0
      %v1012 = vadd.f32 %v295, %v1011
      %v1013 = vpop.f32.mrf.mxu0
      %v1014 = vadd.f32 %v295, %v1013
      %1015 = vmatmul.bf16.gmra.mxu0 %v736
      %v1016 = vpop.f32.mrf.mxu0
      %v1017 = vadd.f32 %v295, %v1016
      %v1018 = vpop.f32.mrf.mxu0
      %v1019 = vadd.f32 %v295, %v1018
      %1020 = vmatmul.bf16.gmra.mxu0 %v739
      %v1021 = vpop.f32.mrf.mxu0
      %v1022 = vadd.f32 %v295, %v1021
      %v1023 = vpop.f32.mrf.mxu0
      %v1024 = vadd.f32 %v295, %v1023
      %1025 = vmatmul.bf16.gmra.mxu0 %v742
      %v1026 = vpop.f32.mrf.mxu0
      %v1027 = vadd.f32 %v295, %v1026
      %v1028 = vpop.f32.mrf.mxu0
      %v1029 = vadd.f32 %v295, %v1028
      %1030 = vmatmul.bf16.gmra.mxu0 %v745
      %v1031 = vpop.f32.mrf.mxu0
      %v1032 = vadd.f32 %v295, %v1031
      %v1033 = vpop.f32.mrf.mxu0
      %v1034 = vadd.f32 %v295, %v1033
      %1035 = vmatmul.bf16.gmra.mxu0 %v748
      %v1036 = vpop.f32.mrf.mxu0
      %v1037 = vadd.f32 %v295, %v1036
      %v1038 = vpop.f32.mrf.mxu0
      %v1039 = vadd.f32 %v295, %v1038
      %1040 = vmatmul.bf16.gmra.mxu0 %v751
      %v1041 = vpop.f32.mrf.mxu0
      %v1042 = vadd.f32 %v295, %v1041
      %v1043 = vpop.f32.mrf.mxu0
      %v1044 = vadd.f32 %v295, %v1043
      %1045 = vmatmul.bf16.gmra.mxu0 %v754
      %v1046 = vpop.f32.mrf.mxu0
      %v1047 = vadd.f32 %v295, %v1046
      %v1048 = vpop.f32.mrf.mxu0
      %v1049 = vadd.f32 %v295, %v1048
      %1050 = vmatmul.bf16.gmra.mxu0 %v757
      %v1051 = vpop.f32.mrf.mxu0
      %v1052 = vadd.f32 %v295, %v1051
      %v1053 = vpop.f32.mrf.mxu0
      %v1054 = vadd.f32 %v295, %v1053
      %1055 = vmatmul.bf16.gmra.mxu0 %v760
      %v1056 = vpop.f32.mrf.mxu0
      %v1057 = vadd.f32 %v295, %v1056
      %v1058 = vpop.f32.mrf.mxu0
      %v1059 = vadd.f32 %v295, %v1058
      %1060 = vmatmul.bf16.gmra.mxu0 %v763
      %v1061 = vpop.f32.mrf.mxu0
      %v1062 = vadd.f32 %v295, %v1061
      %v1063 = vpop.f32.mrf.mxu0
      %v1064 = vadd.f32 %v295, %v1063
      %1065 = vdwg.mxu0
      %v1066 = vmax.f32 %v782, 0.0
      %v1067 = vmax.f32 %v784, 0.0
      %v1068 = vmax.f32 %v787, 0.0
      %v1069 = vmax.f32 %v789, 0.0
      %v1070 = vmax.f32 %v792, 0.0
      %v1071 = vmax.f32 %v794, 0.0
      %v1072 = vmax.f32 %v797, 0.0
      %v1073 = vmax.f32 %v799, 0.0
      %v1074 = vmax.f32 %v802, 0.0
      %v1075 = vmax.f32 %v804, 0.0
      %v1076 = vmax.f32 %v807, 0.0
      %v1077 = vmax.f32 %v809, 0.0
      %v1078 = vmax.f32 %v812, 0.0
      %v1079 = vmax.f32 %v814, 0.0
      %v1080 = vmax.f32 %v817, 0.0
      %v1081 = vmax.f32 %v819, 0.0
      %v1082 = vmax.f32 %v822, 0.0
      %v1083 = vmax.f32 %v824, 0.0
      %v1084 = vmax.f32 %v827, 0.0
      %v1085 = vmax.f32 %v829, 0.0
      %v1086 = vmax.f32 %v832, 0.0
      %v1087 = vmax.f32 %v834, 0.0
      %v1088 = vmax.f32 %v837, 0.0
      %v1089 = vmax.f32 %v839, 0.0
      %v1090 = vmax.f32 %v842, 0.0
      %v1091 = vmax.f32 %v844, 0.0
      %v1092 = vmax.f32 %v847, 0.0
      %v1093 = vmax.f32 %v849, 0.0
      %v1094 = vmax.f32 %v852, 0.0
      %v1095 = vmax.f32 %v854, 0.0
      %v1096 = vmax.f32 %v857, 0.0
      %v1097 = vmax.f32 %v859, 0.0
      %v1098 = vmax.f32 %v862, 0.0
      %v1099 = vmax.f32 %v864, 0.0
      %v1100 = vmax.f32 %v867, 0.0
      %v1101 = vmax.f32 %v869, 0.0
      %v1102 = vmax.f32 %v872, 0.0
      %v1103 = vmax.f32 %v874, 0.0
      %v1104 = vmax.f32 %v877, 0.0
      %v1105 = vmax.f32 %v879, 0.0
      %v1106 = vmax.f32 %v882, 0.0
      %v1107 = vmax.f32 %v884, 0.0
      %v1108 = vmax.f32 %v887, 0.0
      %v1109 = vmax.f32 %v889, 0.0
      %v1110 = vmax.f32 %v892, 0.0
      %v1111 = vmax.f32 %v894, 0.0
      %v1112 = vmax.f32 %v897, 0.0
      %v1113 = vmax.f32 %v899, 0.0
      %v1114 = vmax.f32 %v902, 0.0
      %v1115 = vmax.f32 %v904, 0.0
      %v1116 = vmax.f32 %v907, 0.0
      %v1117 = vmax.f32 %v909, 0.0
      %v1118 = vmax.f32 %v912, 0.0
      %v1119 = vmax.f32 %v914, 0.0
      %v1120 = vmax.f32 %v917, 0.0
      %v1121 = vmax.f32 %v919, 0.0
      %v1122 = vmax.f32 %v922, 0.0
      %v1123 = vmax.f32 %v924, 0.0
      %v1124 = vmax.f32 %v927, 0.0
      %v1125 = vmax.f32 %v929, 0.0
      %v1126 = vmax.f32 %v932, 0.0
      %v1127 = vmax.f32 %v934, 0.0
      %v1128 = vmax.f32 %v937, 0.0
      %v1129 = vmax.f32 %v939, 0.0
      %v1130 = vmax.f32 %v942, 0.0
      %v1131 = vmax.f32 %v944, 0.0
      %v1132 = vmax.f32 %v947, 0.0
      %v1133 = vmax.f32 %v949, 0.0
      %v1134 = vmax.f32 %v952, 0.0
      %v1135 = vmax.f32 %v954, 0.0
      %v1136 = vmax.f32 %v957, 0.0
      %v1137 = vmax.f32 %v959, 0.0
      %v1138 = vmax.f32 %v962, 0.0
      %v1139 = vmax.f32 %v964, 0.0
      %v1140 = vmax.f32 %v967, 0.0
      %v1141 = vmax.f32 %v969, 0.0
      %v1142 = vmax.f32 %v972, 0.0
      %v1143 = vmax.f32 %v974, 0.0
      %v1144 = vmax.f32 %v977, 0.0
      %v1145 = vmax.f32 %v979, 0.0
      %v1146 = vmax.f32 %v982, 0.0
      %v1147 = vmax.f32 %v984, 0.0
      %v1148 = vmax.f32 %v987, 0.0
      %v1149 = vmax.f32 %v989, 0.0
      %v1150 = vmax.f32 %v992, 0.0
      %v1151 = vmax.f32 %v994, 0.0
      %v1152 = vmax.f32 %v997, 0.0
      %v1153 = vmax.f32 %v999, 0.0
      %v1154 = vmax.f32 %v1002, 0.0
      %v1155 = vmax.f32 %v1004, 0.0
      %v1156 = vmax.f32 %v1007, 0.0
      %v1157 = vmax.f32 %v1009, 0.0
      %v1158 = vmax.f32 %v1012, 0.0
      %v1159 = vmax.f32 %v1014, 0.0
      %v1160 = vmax.f32 %v1017, 0.0
      %v1161 = vmax.f32 %v1019, 0.0
      %v1162 = vmax.f32 %v1022, 0.0
      %v1163 = vmax.f32 %v1024, 0.0
      %v1164 = vmax.f32 %v1027, 0.0
      %v1165 = vmax.f32 %v1029, 0.0
      %v1166 = vmax.f32 %v1032, 0.0
      %v1167 = vmax.f32 %v1034, 0.0
      %v1168 = vmax.f32 %v1037, 0.0
      %v1169 = vmax.f32 %v1039, 0.0
      %v1170 = vmax.f32 %v1042, 0.0
      %v1171 = vmax.f32 %v1044, 0.0
      %v1172 = vmax.f32 %v1047, 0.0
      %v1173 = vmax.f32 %v1049, 0.0
      %v1174 = vmax.f32 %v1052, 0.0
      %v1175 = vmax.f32 %v1054, 0.0
      %v1176 = vmax.f32 %v1057, 0.0
      %v1177 = vmax.f32 %v1059, 0.0
      %v1178 = vmax.f32 %v1062, 0.0
      %v1179 = vmax.f32 %v1064, 0.0
      %v1180 = vpack.c.bf16 %v1066, %v1066
      %v1181 = vpack.c.bf16 %v1067, %v1067
      %v1182 = vpack.c.bf16 %v1068, %v1068
      %v1183 = vpack.c.bf16 %v1069, %v1069
      %v1184 = vpack.c.bf16 %v1070, %v1070
      %v1185 = vpack.c.bf16 %v1071, %v1071
      %v1186 = vpack.c.bf16 %v1072, %v1072
      %v1187 = vpack.c.bf16 %v1073, %v1073
      %v1188 = vpack.c.bf16 %v1074, %v1074
      %v1189 = vpack.c.bf16 %v1075, %v1075
      %v1190 = vpack.c.bf16 %v1076, %v1076
      %v1191 = vpack.c.bf16 %v1077, %v1077
      %v1192 = vpack.c.bf16 %v1078, %v1078
      %v1193 = vpack.c.bf16 %v1079, %v1079
      %v1194 = vpack.c.bf16 %v1080, %v1080
      %v1195 = vpack.c.bf16 %v1081, %v1081
      %v1196 = vpack.c.bf16 %v1082, %v1082
      %v1197 = vpack.c.bf16 %v1083, %v1083
      %v1198 = vpack.c.bf16 %v1084, %v1084
      %v1199 = vpack.c.bf16 %v1085, %v1085
      %v1200 = vpack.c.bf16 %v1086, %v1086
      %v1201 = vpack.c.bf16 %v1087, %v1087
      %v1202 = vpack.c.bf16 %v1088, %v1088
      %v1203 = vpack.c.bf16 %v1089, %v1089
      %v1204 = vpack.c.bf16 %v1090, %v1090
      %v1205 = vpack.c.bf16 %v1091, %v1091
      %v1206 = vpack.c.bf16 %v1092, %v1092
      %v1207 = vpack.c.bf16 %v1093, %v1093
      %v1208 = vpack.c.bf16 %v1094, %v1094
      %v1209 = vpack.c.bf16 %v1095, %v1095
      %v1210 = vpack.c.bf16 %v1096, %v1096
      %v1211 = vpack.c.bf16 %v1097, %v1097
      %v1212 = vpack.c.bf16 %v1098, %v1098
      %v1213 = vpack.c.bf16 %v1099, %v1099
      %v1214 = vpack.c.bf16 %v1100, %v1100
      %v1215 = vpack.c.bf16 %v1101, %v1101
      %v1216 = vpack.c.bf16 %v1102, %v1102
      %v1217 = vpack.c.bf16 %v1103, %v1103
      %v1218 = vpack.c.bf16 %v1104, %v1104
      %v1219 = vpack.c.bf16 %v1105, %v1105
      %v1220 = vpack.c.bf16 %v1106, %v1106
      %v1221 = vpack.c.bf16 %v1107, %v1107
      %v1222 = vpack.c.bf16 %v1108, %v1108
      %v1223 = vpack.c.bf16 %v1109, %v1109
      %v1224 = vpack.c.bf16 %v1110, %v1110
      %v1225 = vpack.c.bf16 %v1111, %v1111
      %v1226 = vpack.c.bf16 %v1112, %v1112
      %v1227 = vpack.c.bf16 %v1113, %v1113
      %v1228 = vpack.c.bf16 %v1114, %v1114
      %v1229 = vpack.c.bf16 %v1115, %v1115
      %v1230 = vpack.c.bf16 %v1116, %v1116
      %v1231 = vpack.c.bf16 %v1117, %v1117
      %v1232 = vpack.c.bf16 %v1118, %v1118
      %v1233 = vpack.c.bf16 %v1119, %v1119
      %v1234 = vpack.c.bf16 %v1120, %v1120
      %v1235 = vpack.c.bf16 %v1121, %v1121
      %v1236 = vpack.c.bf16 %v1122, %v1122
      %v1237 = vpack.c.bf16 %v1123, %v1123
      %v1238 = vpack.c.bf16 %v1124, %v1124
      %v1239 = vpack.c.bf16 %v1125, %v1125
      %v1240 = vpack.c.bf16 %v1126, %v1126
      %v1241 = vpack.c.bf16 %v1127, %v1127
      %v1242 = vpack.c.bf16 %v1128, %v1128
      %v1243 = vpack.c.bf16 %v1129, %v1129
      %v1244 = vpack.c.bf16 %v1130, %v1130
      %v1245 = vpack.c.bf16 %v1131, %v1131
      %v1246 = vpack.c.bf16 %v1132, %v1132
      %v1247 = vpack.c.bf16 %v1133, %v1133
      %v1248 = vpack.c.bf16 %v1134, %v1134
      %v1249 = vpack.c.bf16 %v1135, %v1135
      %v1250 = vpack.c.bf16 %v1136, %v1136
      %v1251 = vpack.c.bf16 %v1137, %v1137
      %v1252 = vpack.c.bf16 %v1138, %v1138
      %v1253 = vpack.c.bf16 %v1139, %v1139
      %v1254 = vpack.c.bf16 %v1140, %v1140
      %v1255 = vpack.c.bf16 %v1141, %v1141
      %v1256 = vpack.c.bf16 %v1142, %v1142
      %v1257 = vpack.c.bf16 %v1143, %v1143
      %v1258 = vpack.c.bf16 %v1144, %v1144
      %v1259 = vpack.c.bf16 %v1145, %v1145
      %v1260 = vpack.c.bf16 %v1146, %v1146
      %v1261 = vpack.c.bf16 %v1147, %v1147
      %v1262 = vpack.c.bf16 %v1148, %v1148
      %v1263 = vpack.c.bf16 %v1149, %v1149
      %v1264 = vpack.c.bf16 %v1150, %v1150
      %v1265 = vpack.c.bf16 %v1151, %v1151
      %v1266 = vpack.c.bf16 %v1152, %v1152
      %v1267 = vpack.c.bf16 %v1153, %v1153
      %v1268 = vpack.c.bf16 %v1154, %v1154
      %v1269 = vpack.c.bf16 %v1155, %v1155
      %v1270 = vpack.c.bf16 %v1156, %v1156
      %v1271 = vpack.c.bf16 %v1157, %v1157
      %v1272 = vpack.c.bf16 %v1158, %v1158
      %v1273 = vpack.c.bf16 %v1159, %v1159
      %v1274 = vpack.c.bf16 %v1160, %v1160
      %v1275 = vpack.c.bf16 %v1161, %v1161
      %v1276 = vpack.c.bf16 %v1162, %v1162
      %v1277 = vpack.c.bf16 %v1163, %v1163
      %v1278 = vpack.c.bf16 %v1164, %v1164
      %v1279 = vpack.c.bf16 %v1165, %v1165
      %v1280 = vpack.c.bf16 %v1166, %v1166
      %v1281 = vpack.c.bf16 %v1167, %v1167
      %v1282 = vpack.c.bf16 %v1168, %v1168
      %v1283 = vpack.c.bf16 %v1169, %v1169
      %v1284 = vpack.c.bf16 %v1170, %v1170
      %v1285 = vpack.c.bf16 %v1171, %v1171
      %v1286 = vpack.c.bf16 %v1172, %v1172
      %v1287 = vpack.c.bf16 %v1173, %v1173
      %v1288 = vpack.c.bf16 %v1174, %v1174
      %v1289 = vpack.c.bf16 %v1175, %v1175
      %v1290 = vpack.c.bf16 %v1176, %v1176
      %v1291 = vpack.c.bf16 %v1177, %v1177
      %v1292 = vpack.c.bf16 %v1178, %v1178
      %v1293 = vpack.c.bf16 %v1179, %v1179
      %vm1294 = vcmask 257024
      %1295 = vst.msk [vmem:[%s172] sm:$0xf] %vm1294, %v1180
      %1296 = vst.msk [vmem:[%s172 + $0x4] sm:$0xf] %vm1294, %v1181
      %1297 = vst.msk [vmem:[%s172 + $0x8] sm:$0xf] %vm1294, %v1182
      %1298 = vst.msk [vmem:[%s172 + $0xc] sm:$0xf] %vm1294, %v1183
      %1299 = vst.msk [vmem:[%s172 + $0x10] sm:$0xf] %vm1294, %v1184
      %1300 = vst.msk [vmem:[%s172 + $0x14] sm:$0xf] %vm1294, %v1185
      %1301 = vst.msk [vmem:[%s172 + $0x18] sm:$0xf] %vm1294, %v1186
      %1302 = vst.msk [vmem:[%s172 + $0x1c] sm:$0xf] %vm1294, %v1187
      %1303 = vst.msk [vmem:[%s172 + $0x20] sm:$0xf] %vm1294, %v1188
      %1304 = vst.msk [vmem:[%s172 + $0x24] sm:$0xf] %vm1294, %v1189
      %1305 = vst.msk [vmem:[%s172 + $0x28] sm:$0xf] %vm1294, %v1190
      %1306 = vst.msk [vmem:[%s172 + $0x2c] sm:$0xf] %vm1294, %v1191
      %1307 = vst.msk [vmem:[%s172 + $0x30] sm:$0xf] %vm1294, %v1192
      %1308 = vst.msk [vmem:[%s172 + $0x34] sm:$0xf] %vm1294, %v1193
      %1309 = vst.msk [vmem:[%s172 + $0x38] sm:$0xf] %vm1294, %v1194
      %1310 = vst.msk [vmem:[%s172 + $0x3c] sm:$0xf] %vm1294, %v1195
      %1311 = vst.msk [vmem:[%s172 + $0x40] sm:$0xf] %vm1294, %v1196
      %1312 = vst.msk [vmem:[%s172 + $0x44] sm:$0xf] %vm1294, %v1197
      %1313 = vst.msk [vmem:[%s172 + $0x48] sm:$0xf] %vm1294, %v1198
      %1314 = vst.msk [vmem:[%s172 + $0x4c] sm:$0xf] %vm1294, %v1199
      %1315 = vst.msk [vmem:[%s172 + $0x50] sm:$0xf] %vm1294, %v1200
      %1316 = vst.msk [vmem:[%s172 + $0x54] sm:$0xf] %vm1294, %v1201
      %1317 = vst.msk [vmem:[%s172 + $0x58] sm:$0xf] %vm1294, %v1202
      %1318 = vst.msk [vmem:[%s172 + $0x5c] sm:$0xf] %vm1294, %v1203
      %1319 = vst.msk [vmem:[%s172 + $0x60] sm:$0xf] %vm1294, %v1204
      %1320 = vst.msk [vmem:[%s172 + $0x64] sm:$0xf] %vm1294, %v1205
      %1321 = vst.msk [vmem:[%s172 + $0x68] sm:$0xf] %vm1294, %v1206
      %1322 = vst.msk [vmem:[%s172 + $0x6c] sm:$0xf] %vm1294, %v1207
      %1323 = vst.msk [vmem:[%s172 + $0x70] sm:$0xf] %vm1294, %v1208
      %1324 = vst.msk [vmem:[%s172 + $0x74] sm:$0xf] %vm1294, %v1209
      %1325 = vst.msk [vmem:[%s172 + $0x78] sm:$0xf] %vm1294, %v1210
      %1326 = vst.msk [vmem:[%s172 + $0x7c] sm:$0xf] %vm1294, %v1211
      %1327 = vst.msk [vmem:[%s172 + $0x80] sm:$0xf] %vm1294, %v1212
      %1328 = vst.msk [vmem:[%s172 + $0x84] sm:$0xf] %vm1294, %v1213
      %1329 = vst.msk [vmem:[%s172 + $0x88] sm:$0xf] %vm1294, %v1214
      %1330 = vst.msk [vmem:[%s172 + $0x8c] sm:$0xf] %vm1294, %v1215
      %1331 = vst.msk [vmem:[%s172 + $0x90] sm:$0xf] %vm1294, %v1216
      %1332 = vst.msk [vmem:[%s172 + $0x94] sm:$0xf] %vm1294, %v1217
      %1333 = vst.msk [vmem:[%s172 + $0x98] sm:$0xf] %vm1294, %v1218
      %1334 = vst.msk [vmem:[%s172 + $0x9c] sm:$0xf] %vm1294, %v1219
      %1335 = vst.msk [vmem:[%s172 + $0xa0] sm:$0xf] %vm1294, %v1220
      %1336 = vst.msk [vmem:[%s172 + $0xa4] sm:$0xf] %vm1294, %v1221
      %1337 = vst.msk [vmem:[%s172 + $0xa8] sm:$0xf] %vm1294, %v1222
      %1338 = vst.msk [vmem:[%s172 + $0xac] sm:$0xf] %vm1294, %v1223
      %1339 = vst.msk [vmem:[%s172 + $0xb0] sm:$0xf] %vm1294, %v1224
      %1340 = vst.msk [vmem:[%s172 + $0xb4] sm:$0xf] %vm1294, %v1225
      %1341 = vst.msk [vmem:[%s172 + $0xb8] sm:$0xf] %vm1294, %v1226
      %1342 = vst.msk [vmem:[%s172 + $0xbc] sm:$0xf] %vm1294, %v1227
      %1343 = vst.msk [vmem:[%s172 + $0xc0] sm:$0xf] %vm1294, %v1228
      %1344 = vst.msk [vmem:[%s172 + $0xc4] sm:$0xf] %vm1294, %v1229
      %1345 = vst.msk [vmem:[%s172 + $0xc8] sm:$0xf] %vm1294, %v1230
      %1346 = vst.msk [vmem:[%s172 + $0xcc] sm:$0xf] %vm1294, %v1231
      %1347 = vst.msk [vmem:[%s172 + $0xd0] sm:$0xf] %vm1294, %v1232
      %1348 = vst.msk [vmem:[%s172 + $0xd4] sm:$0xf] %vm1294, %v1233
      %1349 = vst.msk [vmem:[%s172 + $0xd8] sm:$0xf] %vm1294, %v1234
      %1350 = vst.msk [vmem:[%s172 + $0xdc] sm:$0xf] %vm1294, %v1235
      %1351 = vst.msk [vmem:[%s172 + $0xe0] sm:$0xf] %vm1294, %v1236
      %1352 = vst.msk [vmem:[%s172 + $0xe4] sm:$0xf] %vm1294, %v1237
      %1353 = vst.msk [vmem:[%s172 + $0xe8] sm:$0xf] %vm1294, %v1238
      %1354 = vst.msk [vmem:[%s172 + $0xec] sm:$0xf] %vm1294, %v1239
      %1355 = vst.msk [vmem:[%s172 + $0xf0] sm:$0xf] %vm1294, %v1240
      %1356 = vst.msk [vmem:[%s172 + $0xf4] sm:$0xf] %vm1294, %v1241
      %1357 = vst.msk [vmem:[%s172 + $0xf8] sm:$0xf] %vm1294, %v1242
      %1358 = vst.msk [vmem:[%s172 + $0xfc] sm:$0xf] %vm1294, %v1243
      %1359 = vst.msk [vmem:[%s172 + $0x100] sm:$0xf] %vm1294, %v1244
      %1360 = vst.msk [vmem:[%s172 + $0x104] sm:$0xf] %vm1294, %v1245
      %1361 = vst.msk [vmem:[%s172 + $0x108] sm:$0xf] %vm1294, %v1246
      %1362 = vst.msk [vmem:[%s172 + $0x10c] sm:$0xf] %vm1294, %v1247
      %1363 = vst.msk [vmem:[%s172 + $0x110] sm:$0xf] %vm1294, %v1248
      %1364 = vst.msk [vmem:[%s172 + $0x114] sm:$0xf] %vm1294, %v1249
      %1365 = vst.msk [vmem:[%s172 + $0x118] sm:$0xf] %vm1294, %v1250
      %1366 = vst.msk [vmem:[%s172 + $0x11c] sm:$0xf] %vm1294, %v1251
      %1367 = vst.msk [vmem:[%s172 + $0x120] sm:$0xf] %vm1294, %v1252
      %1368 = vst.msk [vmem:[%s172 + $0x124] sm:$0xf] %vm1294, %v1253
      %1369 = vst.msk [vmem:[%s172 + $0x128] sm:$0xf] %vm1294, %v1254
      %1370 = vst.msk [vmem:[%s172 + $0x12c] sm:$0xf] %vm1294, %v1255
      %1371 = vst.msk [vmem:[%s172 + $0x130] sm:$0xf] %vm1294, %v1256
      %1372 = vst.msk [vmem:[%s172 + $0x134] sm:$0xf] %vm1294, %v1257
      %1373 = vst.msk [vmem:[%s172 + $0x138] sm:$0xf] %vm1294, %v1258
      %1374 = vst.msk [vmem:[%s172 + $0x13c] sm:$0xf] %vm1294, %v1259
      %1375 = vst.msk [vmem:[%s172 + $0x140] sm:$0xf] %vm1294, %v1260
      %1376 = vst.msk [vmem:[%s172 + $0x144] sm:$0xf] %vm1294, %v1261
      %1377 = vst.msk [vmem:[%s172 + $0x148] sm:$0xf] %vm1294, %v1262
      %1378 = vst.msk [vmem:[%s172 + $0x14c] sm:$0xf] %vm1294, %v1263
      %1379 = vst.msk [vmem:[%s172 + $0x150] sm:$0xf] %vm1294, %v1264
      %1380 = vst.msk [vmem:[%s172 + $0x154] sm:$0xf] %vm1294, %v1265
      %1381 = vst.msk [vmem:[%s172 + $0x158] sm:$0xf] %vm1294, %v1266
      %1382 = vst.msk [vmem:[%s172 + $0x15c] sm:$0xf] %vm1294, %v1267
      %1383 = vst.msk [vmem:[%s172 + $0x160] sm:$0xf] %vm1294, %v1268
      %1384 = vst.msk [vmem:[%s172 + $0x164] sm:$0xf] %vm1294, %v1269
      %1385 = vst.msk [vmem:[%s172 + $0x168] sm:$0xf] %vm1294, %v1270
      %1386 = vst.msk [vmem:[%s172 + $0x16c] sm:$0xf] %vm1294, %v1271
      %1387 = vst.msk [vmem:[%s172 + $0x170] sm:$0xf] %vm1294, %v1272
      %1388 = vst.msk [vmem:[%s172 + $0x174] sm:$0xf] %vm1294, %v1273
      %1389 = vst.msk [vmem:[%s172 + $0x178] sm:$0xf] %vm1294, %v1274
      %1390 = vst.msk [vmem:[%s172 + $0x17c] sm:$0xf] %vm1294, %v1275
      %1391 = vst.msk [vmem:[%s172 + $0x180] sm:$0xf] %vm1294, %v1276
      %1392 = vst.msk [vmem:[%s172 + $0x184] sm:$0xf] %vm1294, %v1277
      %1393 = vst.msk [vmem:[%s172 + $0x188] sm:$0xf] %vm1294, %v1278
      %1394 = vst.msk [vmem:[%s172 + $0x18c] sm:$0xf] %vm1294, %v1279
      %1395 = vst.msk [vmem:[%s172 + $0x190] sm:$0xf] %vm1294, %v1280
      %1396 = vst.msk [vmem:[%s172 + $0x194] sm:$0xf] %vm1294, %v1281
      %1397 = vst.msk [vmem:[%s172 + $0x198] sm:$0xf] %vm1294, %v1282
      %1398 = vst.msk [vmem:[%s172 + $0x19c] sm:$0xf] %vm1294, %v1283
      %1399 = vst.msk [vmem:[%s172 + $0x1a0] sm:$0xf] %vm1294, %v1284
      %1400 = vst.msk [vmem:[%s172 + $0x1a4] sm:$0xf] %vm1294, %v1285
      %1401 = vst.msk [vmem:[%s172 + $0x1a8] sm:$0xf] %vm1294, %v1286
      %1402 = vst.msk [vmem:[%s172 + $0x1ac] sm:$0xf] %vm1294, %v1287
      %1403 = vst.msk [vmem:[%s172 + $0x1b0] sm:$0xf] %vm1294, %v1288
      %1404 = vst.msk [vmem:[%s172 + $0x1b4] sm:$0xf] %vm1294, %v1289
      %1405 = vst.msk [vmem:[%s172 + $0x1b8] sm:$0xf] %vm1294, %v1290
      %1406 = vst.msk [vmem:[%s172 + $0x1bc] sm:$0xf] %vm1294, %v1291
      %1407 = vst.msk [vmem:[%s172 + $0x1c0] sm:$0xf] %vm1294, %v1292
      %1408 = vst.msk [vmem:[%s172 + $0x1c4] sm:$0xf] %vm1294, %v1293
      %s1409 = smul.u32 114, %s14
      %p1410 = scmp.lt.s32.totalorder %s1409, 227
      %s1411 = scalar_select %p1410, %s1409, 227
      %s1412 = smul.addr %s1411, 4
      %s1413 = scalar_lea.vmem %s3, %s1412
      // Predicated region
      $region33: #{forward.7} parent=31 // pred_check
        %p1414 = pneg %p100
      $region34: #{forward.7} parent=31 // pred_check_branch
        %1416 = sbr.rel (%p1414) target = $region36
      $region35: #{forward.7} parent=31 // pred_region
        %s1417 = smul.u32 114, %s14
      $region36: #{forward.7} parent=31 // pred_fallthru
        _
    $region32: #{forward.7} parent=5 // pred_fallthru
      _
    %p1418 = scmp.le.s32.totalorder 2, %s9
    // Predicated region
    $region37: #{forward.7} parent=5 // pred_check
      %p1419 = pneg %p1418
    $region38: #{forward.7} parent=5 // pred_check_branch
      %1421 = sbr.rel (%p1419) target = $region40
    $region39: #{forward.7} parent=5 // pred_region
      %s1422 = ssub.s32 %s9, 2
      // Predicated region
      $region41: #{forward.7} parent=39 // pred_check
        %p1423 = pneg %p106
      $region42: #{forward.7} parent=39 // pred_check_branch
        %1425 = sbr.rel (%p1423) target = $region44
      $region43: #{forward.7} parent=39 // pred_region
        %s1426 = smul.u32 114, %s15
        %p1427 = scmp.lt.s32.totalorder %s1426, 227
        %s1428 = scalar_select %p1427, %s1426, 227
        %s1429 = smul.addr %s1428, 4
        %s1430 = scalar_lea.vmem %s3, %s1429
      $region44: #{forward.7} parent=39 // pred_fallthru
        _
    $region40: #{forward.7} parent=5 // pred_fallthru
      _
  $region6: #{forward.7} parent=0 // loop_footer
    %s13 = sadd.s32 1, %s9
  $region7: #{forward.7} parent=0 // loop_footer_branch
    %8 = sbr.rel target = $region3
  $region8: #{forward.7} parent=0 // loop_exit
    _

// kernel: forward.8
$region0: #{forward.8}
  #allocation0 [shape = 'u32[]', space=smem, size = 0x4, offset = 0x4, fixed_abs, tag = 'smem constant byte address 0x4 - core index']
  #allocation1 [shape = 'u32[72,128]{1,0:T(1,128)}', space=vmem, size = 0x9000, scoped, tag = 'internal scratch']
  %s0 = inlined_call_operand.vmem [shape: bf16[98,512], index: 0, kind: input, shape index: {}]
  %s1 = inlined_call_operand.vmem [shape: bf16[512,64], index: 1, kind: input, shape index: {}]
  %s2 = inlined_call_operand.vmem [shape: f32[1,64], index: 2, kind: input, shape index: {}]
  %s3 = inlined_call_operand.vmem [shape: bf16[98,64], index: 3, kind: output, shape index: {}]
  %s4 = sld [smem:[#allocation0]]
  $region22: #{forward.8} parent=0
    _
  %s6 = ssub.s32 1, %s4
  %s7 = scalar_select 0, %s6, %s4
  // Predicated region
  $region2: #{forward.8} parent=0 // pred_check
    _
  $region3: #{forward.8} parent=0 // pred_check_branch
    %9 = sbr.rel (0) target = $region5
  $region4: #{forward.8} parent=0 // pred_region
    _
  $region5: #{forward.8} parent=0 // pred_fallthru
    _
  // Predicated region
  $region6: #{forward.8} parent=0 // pred_check
    _
  $region7: #{forward.8} parent=0 // pred_check_branch
    %11 = sbr.rel (0) target = $region9
  $region8: #{forward.8} parent=0 // pred_region
    _
  $region9: #{forward.8} parent=0 // pred_fallthru
    _
  // Predicated region
  $region10: #{forward.8} parent=0 // pred_check
    _
  $region11: #{forward.8} parent=0 // pred_check_branch
    %13 = sbr.rel (0) target = $region13
  $region12: #{forward.8} parent=0 // pred_region
    _
  $region13: #{forward.8} parent=0 // pred_fallthru
    _
  %v14 = vld [vmem:[%s0] sm:$0xff]
  %v15 = vld [vmem:[%s0 + $0x8] sm:$0xff]
  %v16 = vld [vmem:[%s0 + $0x10] sm:$0xff]
  %v17 = vld [vmem:[%s0 + $0x18] sm:$0xff]
  %v18 = vld [vmem:[%s0 + $0x20] sm:$0xff]
  %v19 = vld [vmem:[%s0 + $0x28] sm:$0xff]
  %v20 = vld [vmem:[%s0 + $0x30] sm:$0xff]
  %v21 = vld [vmem:[%s0 + $0x38] sm:$0xff]
  %v22 = vld [vmem:[%s0 + $0x40] sm:$0xff]
  %v23 = vld [vmem:[%s0 + $0x48] sm:$0xff]
  %v24 = vld [vmem:[%s0 + $0x50] sm:$0xff]
  %v25 = vld [vmem:[%s0 + $0x58] sm:$0xff]
  %v26 = vld [vmem:[%s0 + $0x60] sm:$0xff]
  %v27 = vld [vmem:[%s0 + $0x68] sm:$0xff]
  %v28 = vld [vmem:[%s0 + $0x70] sm:$0xff]
  %v29 = vld [vmem:[%s0 + $0x78] sm:$0xff]
  %v30 = vld [vmem:[%s0 + $0x80] sm:$0xff]
  %v31 = vld [vmem:[%s0 + $0x88] sm:$0xff]
  %v32 = vld [vmem:[%s0 + $0x90] sm:$0xff]
  %v33 = vld [vmem:[%s0 + $0x98] sm:$0xff]
  %v34 = vld [vmem:[%s0 + $0xa0] sm:$0xff]
  %v35 = vld [vmem:[%s0 + $0xa8] sm:$0xff]
  %v36 = vld [vmem:[%s0 + $0xb0] sm:$0xff]
  %v37 = vld [vmem:[%s0 + $0xb8] sm:$0xff]
  %v38 = vld [vmem:[%s0 + $0xc0] sm:$0x11]
  %v39 = vld [vmem:[%s0 + $0xc8] sm:$0x11]
  %v40 = vld [vmem:[%s1] sm:$0xf]
  %v41 = vld [vmem:[%s1 + $0x4] sm:$0xf]
  %v42 = vld [vmem:[%s1 + $0x8] sm:$0xf]
  %v43 = vld [vmem:[%s1 + $0xc] sm:$0xf]
  %v44 = vld [vmem:[%s1 + $0x10] sm:$0xf]
  %v45 = vld [vmem:[%s1 + $0x14] sm:$0xf]
  %v46 = vld [vmem:[%s1 + $0x18] sm:$0xf]
  %v47 = vld [vmem:[%s1 + $0x1c] sm:$0xf]
  %v48 = vld [vmem:[%s1 + $0x20] sm:$0xf]
  %v49 = vld [vmem:[%s1 + $0x24] sm:$0xf]
  %v50 = vld [vmem:[%s1 + $0x28] sm:$0xf]
  %v51 = vld [vmem:[%s1 + $0x2c] sm:$0xf]
  %v52 = vld [vmem:[%s1 + $0x30] sm:$0xf]
  %v53 = vld [vmem:[%s1 + $0x34] sm:$0xf]
  %v54 = vld [vmem:[%s1 + $0x38] sm:$0xf]
  %v55 = vld [vmem:[%s1 + $0x3c] sm:$0xf]
  %v56 = vld [vmem:[%s1 + $0x40] sm:$0xf]
  %v57 = vld [vmem:[%s1 + $0x44] sm:$0xf]
  %v58 = vld [vmem:[%s1 + $0x48] sm:$0xf]
  %v59 = vld [vmem:[%s1 + $0x4c] sm:$0xf]
  %v60 = vld [vmem:[%s1 + $0x50] sm:$0xf]
  %v61 = vld [vmem:[%s1 + $0x54] sm:$0xf]
  %v62 = vld [vmem:[%s1 + $0x58] sm:$0xf]
  %v63 = vld [vmem:[%s1 + $0x5c] sm:$0xf]
  %v64 = vld [vmem:[%s1 + $0x60] sm:$0xf]
  %v65 = vld [vmem:[%s1 + $0x64] sm:$0xf]
  %v66 = vld [vmem:[%s1 + $0x68] sm:$0xf]
  %v67 = vld [vmem:[%s1 + $0x6c] sm:$0xf]
  %v68 = vld [vmem:[%s1 + $0x70] sm:$0xf]
  %v69 = vld [vmem:[%s1 + $0x74] sm:$0xf]
  %v70 = vld [vmem:[%s1 + $0x78] sm:$0xf]
  %v71 = vld [vmem:[%s1 + $0x7c] sm:$0xf]
  %v72 = vld [vmem:[%s1 + $0x80] sm:$0xf]
  %v73 = vld [vmem:[%s1 + $0x84] sm:$0xf]
  %v74 = vld [vmem:[%s1 + $0x88] sm:$0xf]
  %v75 = vld [vmem:[%s1 + $0x8c] sm:$0xf]
  %v76 = vld [vmem:[%s1 + $0x90] sm:$0xf]
  %v77 = vld [vmem:[%s1 + $0x94] sm:$0xf]
  %v78 = vld [vmem:[%s1 + $0x98] sm:$0xf]
  %v79 = vld [vmem:[%s1 + $0x9c] sm:$0xf]
  %v80 = vld [vmem:[%s1 + $0xa0] sm:$0xf]
  %v81 = vld [vmem:[%s1 + $0xa4] sm:$0xf]
  %v82 = vld [vmem:[%s1 + $0xa8] sm:$0xf]
  %v83 = vld [vmem:[%s1 + $0xac] sm:$0xf]
  %v84 = vld [vmem:[%s1 + $0xb0] sm:$0xf]
  %v85 = vld [vmem:[%s1 + $0xb4] sm:$0xf]
  %v86 = vld [vmem:[%s1 + $0xb8] sm:$0xf]
  %v87 = vld [vmem:[%s1 + $0xbc] sm:$0xf]
  %v88 = vld [vmem:[%s1 + $0xc0] sm:$0xf]
  %v89 = vld [vmem:[%s1 + $0xc4] sm:$0xf]
  %v90 = vld [vmem:[%s1 + $0xc8] sm:$0xf]
  %v91 = vld [vmem:[%s1 + $0xcc] sm:$0xf]
  %v92 = vld [vmem:[%s1 + $0xd0] sm:$0xf]
  %v93 = vld [vmem:[%s1 + $0xd4] sm:$0xf]
  %v94 = vld [vmem:[%s1 + $0xd8] sm:$0xf]
  %v95 = vld [vmem:[%s1 + $0xdc] sm:$0xf]
  %v96 = vld [vmem:[%s1 + $0xe0] sm:$0xf]
  %v97 = vld [vmem:[%s1 + $0xe4] sm:$0xf]
  %v98 = vld [vmem:[%s1 + $0xe8] sm:$0xf]
  %v99 = vld [vmem:[%s1 + $0xec] sm:$0xf]
  %v100 = vld [vmem:[%s1 + $0xf0] sm:$0xf]
  %v101 = vld [vmem:[%s1 + $0xf4] sm:$0xf]
  %v102 = vld [vmem:[%s1 + $0xf8] sm:$0xf]
  %v103 = vld [vmem:[%s1 + $0xfc] sm:$0xf]
  %v104 = vld [vmem:[%s2] sm:$0x1]
  %v106 = vperm.slane %v104, 0
  %v134 = vunpack.c.l.b16 %v14
  %v135 = vunpack.c.h.b16 %v14
  %v136 = vunpack.c.l.b16 %v15
  %v137 = vunpack.c.h.b16 %v15
  %v138 = vunpack.c.l.b16 %v16
  %v139 = vunpack.c.h.b16 %v16
  %v140 = vunpack.c.l.b16 %v17
  %v141 = vunpack.c.h.b16 %v17
  %v142 = vunpack.c.l.b16 %v18
  %v143 = vunpack.c.h.b16 %v18
  %v144 = vunpack.c.l.b16 %v19
  %v145 = vunpack.c.h.b16 %v19
  %v146 = vunpack.c.l.b16 %v20
  %v147 = vunpack.c.h.b16 %v20
  %v148 = vunpack.c.l.b16 %v21
  %v149 = vunpack.c.h.b16 %v21
  %v150 = vunpack.c.l.b16 %v22
  %v151 = vunpack.c.h.b16 %v22
  %v152 = vunpack.c.l.b16 %v23
  %v153 = vunpack.c.h.b16 %v23
  %v154 = vunpack.c.l.b16 %v24
  %v155 = vunpack.c.h.b16 %v24
  %v156 = vunpack.c.l.b16 %v25
  %v157 = vunpack.c.h.b16 %v25
  %v158 = vunpack.c.l.b16 %v26
  %v159 = vunpack.c.h.b16 %v26
  %v160 = vunpack.c.l.b16 %v27
  %v161 = vunpack.c.h.b16 %v27
  %v162 = vunpack.c.l.b16 %v28
  %v163 = vunpack.c.h.b16 %v28
  %v164 = vunpack.c.l.b16 %v29
  %v165 = vunpack.c.h.b16 %v29
  %v166 = vunpack.c.l.b16 %v30
  %v167 = vunpack.c.h.b16 %v30
  %v168 = vunpack.c.l.b16 %v31
  %v169 = vunpack.c.h.b16 %v31
  %v170 = vunpack.c.l.b16 %v32
  %v171 = vunpack.c.h.b16 %v32
  %v172 = vunpack.c.l.b16 %v33
  %v173 = vunpack.c.h.b16 %v33
  %v174 = vunpack.c.l.b16 %v34
  %v175 = vunpack.c.h.b16 %v34
  %v176 = vunpack.c.l.b16 %v35
  %v177 = vunpack.c.h.b16 %v35
  %v178 = vunpack.c.l.b16 %v36
  %v179 = vunpack.c.h.b16 %v36
  %v180 = vunpack.c.l.b16 %v37
  %v181 = vunpack.c.h.b16 %v37
  %v182 = vunpack.c.l.b16 %v38
  %v183 = vunpack.c.h.b16 %v38
  %v184 = vunpack.c.l.b16 %v39
  %v185 = vunpack.c.h.b16 %v39
  %v186 = vpack.c.b16 %v138, %v134
  %v187 = vpack.c.b16 %v139, %v135
  %v188 = vpack.c.b16 %v140, %v136
  %v189 = vpack.c.b16 %v141, %v137
  %v190 = vpack.c.b16 %v146, %v142
  %v191 = vpack.c.b16 %v147, %v143
  %v192 = vpack.c.b16 %v148, %v144
  %v193 = vpack.c.b16 %v149, %v145
  %v194 = vpack.c.b16 %v154, %v150
  %v195 = vpack.c.b16 %v155, %v151
  %v196 = vpack.c.b16 %v156, %v152
  %v197 = vpack.c.b16 %v157, %v153
  %v198 = vpack.c.b16 %v162, %v158
  %v199 = vpack.c.b16 %v163, %v159
  %v200 = vpack.c.b16 %v164, %v160
  %v201 = vpack.c.b16 %v165, %v161
  %v202 = vpack.c.b16 %v170, %v166
  %v203 = vpack.c.b16 %v171, %v167
  %v204 = vpack.c.b16 %v172, %v168
  %v205 = vpack.c.b16 %v173, %v169
  %v206 = vpack.c.b16 %v178, %v174
  %v207 = vpack.c.b16 %v179, %v175
  %v208 = vpack.c.b16 %v180, %v176
  %v209 = vpack.c.b16 %v181, %v177
  %v210 = vpack.c.b16 %v182, %v182
  %v211 = vpack.c.b16 %v183, %v183
  %v212 = vpack.c.b16 %v184, %v184
  %v213 = vpack.c.b16 %v185, %v185
  %v306 = vunpack.c.l.b16 %v40
  %v307 = vunpack.c.l.b16 %v41
  %v308 = vunpack.c.l.b16 %v42
  %v309 = vunpack.c.l.b16 %v43
  %v310 = vunpack.c.l.b16 %v44
  %v311 = vunpack.c.l.b16 %v45
  %v312 = vunpack.c.l.b16 %v46
  %v313 = vunpack.c.l.b16 %v47
  %v314 = vunpack.c.l.b16 %v48
  %v315 = vunpack.c.l.b16 %v49
  %v316 = vunpack.c.l.b16 %v50
  %v317 = vunpack.c.l.b16 %v51
  %v318 = vunpack.c.l.b16 %v52
  %v319 = vunpack.c.l.b16 %v53
  %v320 = vunpack.c.l.b16 %v54
  %v321 = vunpack.c.l.b16 %v55
  %v322 = vunpack.c.l.b16 %v56
  %v323 = vunpack.c.l.b16 %v57
  %v324 = vunpack.c.l.b16 %v58
  %v325 = vunpack.c.l.b16 %v59
  %v326 = vunpack.c.l.b16 %v60
  %v327 = vunpack.c.l.b16 %v61
  %v328 = vunpack.c.l.b16 %v62
  %v329 = vunpack.c.l.b16 %v63
  %v330 = vunpack.c.l.b16 %v64
  %v331 = vunpack.c.l.b16 %v65
  %v332 = vunpack.c.l.b16 %v66
  %v333 = vunpack.c.l.b16 %v67
  %v334 = vunpack.c.l.b16 %v68
  %v335 = vunpack.c.l.b16 %v69
  %v336 = vunpack.c.l.b16 %v70
  %v337 = vunpack.c.l.b16 %v71
  %v338 = vunpack.c.l.b16 %v72
  %v339 = vunpack.c.l.b16 %v73
  %v340 = vunpack.c.l.b16 %v74
  %v341 = vunpack.c.l.b16 %v75
  %v342 = vunpack.c.l.b16 %v76
  %v343 = vunpack.c.l.b16 %v77
  %v344 = vunpack.c.l.b16 %v78
  %v345 = vunpack.c.l.b16 %v79
  %v346 = vunpack.c.l.b16 %v80
  %v347 = vunpack.c.l.b16 %v81
  %v348 = vunpack.c.l.b16 %v82
  %v349 = vunpack.c.l.b16 %v83
  %v350 = vunpack.c.l.b16 %v84
  %v351 = vunpack.c.l.b16 %v85
  %v352 = vunpack.c.l.b16 %v86
  %v353 = vunpack.c.l.b16 %v87
  %v354 = vunpack.c.l.b16 %v88
  %v355 = vunpack.c.l.b16 %v89
  %v356 = vunpack.c.l.b16 %v90
  %v357 = vunpack.c.l.b16 %v91
  %v358 = vunpack.c.l.b16 %v92
  %v359 = vunpack.c.l.b16 %v93
  %v360 = vunpack.c.l.b16 %v94
  %v361 = vunpack.c.l.b16 %v95
  %v362 = vunpack.c.l.b16 %v96
  %v363 = vunpack.c.l.b16 %v97
  %v364 = vunpack.c.l.b16 %v98
  %v365 = vunpack.c.l.b16 %v99
  %v366 = vunpack.c.l.b16 %v100
  %v367 = vunpack.c.l.b16 %v101
  %v368 = vunpack.c.l.b16 %v102
  %v369 = vunpack.c.l.b16 %v103
  %v370 = vpack.c.b16 %v307, %v306
  %v371 = vpack.c.b16 %v309, %v308
  %v372 = vpack.c.b16 %v311, %v310
  %v373 = vpack.c.b16 %v313, %v312
  %v374 = vpack.c.b16 %v315, %v314
  %v375 = vpack.c.b16 %v317, %v316
  %v376 = vpack.c.b16 %v319, %v318
  %v377 = vpack.c.b16 %v321, %v320
  %v378 = vpack.c.b16 %v323, %v322
  %v379 = vpack.c.b16 %v325, %v324
  %v380 = vpack.c.b16 %v327, %v326
  %v381 = vpack.c.b16 %v329, %v328
  %v382 = vpack.c.b16 %v331, %v330
  %v383 = vpack.c.b16 %v333, %v332
  %v384 = vpack.c.b16 %v335, %v334
  %v385 = vpack.c.b16 %v337, %v336
  %v386 = vpack.c.b16 %v339, %v338
  %v387 = vpack.c.b16 %v341, %v340
  %v388 = vpack.c.b16 %v343, %v342
  %v389 = vpack.c.b16 %v345, %v344
  %v390 = vpack.c.b16 %v347, %v346
  %v391 = vpack.c.b16 %v349, %v348
  %v392 = vpack.c.b16 %v351, %v350
  %v393 = vpack.c.b16 %v353, %v352
  %v394 = vpack.c.b16 %v355, %v354
  %v395 = vpack.c.b16 %v357, %v356
  %v396 = vpack.c.b16 %v359, %v358
  %v397 = vpack.c.b16 %v361, %v360
  %v398 = vpack.c.b16 %v363, %v362
  %v399 = vpack.c.b16 %v365, %v364
  %v400 = vpack.c.b16 %v367, %v366
  %v401 = vpack.c.b16 %v369, %v368
  %434 = vmatpush.bf16.msra.mxu0 %v377
  %435 = vmatpush.bf16.msra.mxu0 %v376
  %436 = vmatpush.bf16.msra.mxu0 %v375
  %437 = vmatpush.bf16.msra.mxu0 %v374
  %438 = vmatpush.bf16.msra.mxu0 %v373
  %439 = vmatpush.bf16.msra.mxu0 %v372
  %440 = vmatpush.bf16.msra.mxu0 %v371
  %441 = vmatpush.bf16.msra.mxu0 %v370
  %442 = vmatmul.bf16.gmra.mxu0 %v186
  %v443 = vpop.f32.mrf.mxu0
  %v444 = vadd.f32 %v106, %v443
  %v445 = vpop.f32.mrf.mxu0
  %v446 = vadd.f32 %v106, %v445
  %447 = vmatmul.bf16.gmra.mxu0 %v190
  %v448 = vpop.f32.mrf.mxu0
  %v449 = vadd.f32 %v106, %v448
  %v450 = vpop.f32.mrf.mxu0
  %v451 = vadd.f32 %v106, %v450
  %452 = vmatmul.bf16.gmra.mxu0 %v194
  %v453 = vpop.f32.mrf.mxu0
  %v454 = vadd.f32 %v106, %v453
  %v455 = vpop.f32.mrf.mxu0
  %v456 = vadd.f32 %v106, %v455
  %457 = vmatmul.bf16.gmra.mxu0 %v198
  %v458 = vpop.f32.mrf.mxu0
  %v459 = vadd.f32 %v106, %v458
  %v460 = vpop.f32.mrf.mxu0
  %v461 = vadd.f32 %v106, %v460
  %462 = vmatmul.bf16.gmra.mxu0 %v202
  %v463 = vpop.f32.mrf.mxu0
  %v464 = vadd.f32 %v106, %v463
  %v465 = vpop.f32.mrf.mxu0
  %v466 = vadd.f32 %v106, %v465
  %467 = vmatmul.bf16.gmra.mxu0 %v206
  %v468 = vpop.f32.mrf.mxu0
  %v469 = vadd.f32 %v106, %v468
  %v470 = vpop.f32.mrf.mxu0
  %v471 = vadd.f32 %v106, %v470
  %472 = vmatmul.bf16.gmra.mxu0 %v210
  %v473 = vpop.f32.mrf.mxu0
  %v474 = vadd.f32 %v106, %v473
  %v475 = vpop.f32.mrf.mxu0
  %476 = vdwg.mxu0
  %477 = vmatpush.bf16.msra.mxu0 %v385
  %478 = vmatpush.bf16.msra.mxu0 %v384
  %479 = vmatpush.bf16.msra.mxu0 %v383
  %480 = vmatpush.bf16.msra.mxu0 %v382
  %481 = vmatpush.bf16.msra.mxu0 %v381
  %482 = vmatpush.bf16.msra.mxu0 %v380
  %483 = vmatpush.bf16.msra.mxu0 %v379
  %484 = vmatpush.bf16.msra.mxu0 %v378
  %485 = vmatmul.bf16.gmra.mxu0 %v187
  %v486 = vpop.f32.mrf.mxu0
  %v487 = vadd.f32 %v444, %v486
  %v488 = vpop.f32.mrf.mxu0
  %v489 = vadd.f32 %v446, %v488
  %490 = vmatmul.bf16.gmra.mxu0 %v191
  %v491 = vpop.f32.mrf.mxu0
  %v492 = vadd.f32 %v449, %v491
  %v493 = vpop.f32.mrf.mxu0
  %v494 = vadd.f32 %v451, %v493
  %495 = vmatmul.bf16.gmra.mxu0 %v195
  %v496 = vpop.f32.mrf.mxu0
  %v497 = vadd.f32 %v454, %v496
  %v498 = vpop.f32.mrf.mxu0
  %v499 = vadd.f32 %v456, %v498
  %500 = vmatmul.bf16.gmra.mxu0 %v199
  %v501 = vpop.f32.mrf.mxu0
  %v502 = vadd.f32 %v459, %v501
  %v503 = vpop.f32.mrf.mxu0
  %v504 = vadd.f32 %v461, %v503
  %505 = vmatmul.bf16.gmra.mxu0 %v203
  %v506 = vpop.f32.mrf.mxu0
  %v507 = vadd.f32 %v464, %v506
  %v508 = vpop.f32.mrf.mxu0
  %v509 = vadd.f32 %v466, %v508
  %510 = vmatmul.bf16.gmra.mxu0 %v207
  %v511 = vpop.f32.mrf.mxu0
  %v512 = vadd.f32 %v469, %v511
  %v513 = vpop.f32.mrf.mxu0
  %v514 = vadd.f32 %v471, %v513
  %515 = vmatmul.bf16.gmra.mxu0 %v211
  %v516 = vpop.f32.mrf.mxu0
  %v517 = vadd.f32 %v474, %v516
  %v518 = vpop.f32.mrf.mxu0
  %519 = vdwg.mxu0
  %520 = vmatpush.bf16.msra.mxu0 %v393
  %521 = vmatpush.bf16.msra.mxu0 %v392
  %522 = vmatpush.bf16.msra.mxu0 %v391
  %523 = vmatpush.bf16.msra.mxu0 %v390
  %524 = vmatpush.bf16.msra.mxu0 %v389
  %525 = vmatpush.bf16.msra.mxu0 %v388
  %526 = vmatpush.bf16.msra.mxu0 %v387
  %527 = vmatpush.bf16.msra.mxu0 %v386
  %528 = vmatmul.bf16.gmra.mxu0 %v188
  %v529 = vpop.f32.mrf.mxu0
  %v530 = vadd.f32 %v487, %v529
  %v531 = vpop.f32.mrf.mxu0
  %v532 = vadd.f32 %v489, %v531
  %533 = vmatmul.bf16.gmra.mxu0 %v192
  %v534 = vpop.f32.mrf.mxu0
  %v535 = vadd.f32 %v492, %v534
  %v536 = vpop.f32.mrf.mxu0
  %v537 = vadd.f32 %v494, %v536
  %538 = vmatmul.bf16.gmra.mxu0 %v196
  %v539 = vpop.f32.mrf.mxu0
  %v540 = vadd.f32 %v497, %v539
  %v541 = vpop.f32.mrf.mxu0
  %v542 = vadd.f32 %v499, %v541
  %543 = vmatmul.bf16.gmra.mxu0 %v200
  %v544 = vpop.f32.mrf.mxu0
  %v545 = vadd.f32 %v502, %v544
  %v546 = vpop.f32.mrf.mxu0
  %v547 = vadd.f32 %v504, %v546
  %548 = vmatmul.bf16.gmra.mxu0 %v204
  %v549 = vpop.f32.mrf.mxu0
  %v550 = vadd.f32 %v507, %v549
  %v551 = vpop.f32.mrf.mxu0
  %v552 = vadd.f32 %v509, %v551
  %553 = vmatmul.bf16.gmra.mxu0 %v208
  %v554 = vpop.f32.mrf.mxu0
  %v555 = vadd.f32 %v512, %v554
  %v556 = vpop.f32.mrf.mxu0
  %v557 = vadd.f32 %v514, %v556
  %558 = vmatmul.bf16.gmra.mxu0 %v212
  %v559 = vpop.f32.mrf.mxu0
  %v560 = vadd.f32 %v517, %v559
  %v561 = vpop.f32.mrf.mxu0
  %562 = vdwg.mxu0
  %563 = vmatpush.bf16.msra.mxu0 %v401
  %564 = vmatpush.bf16.msra.mxu0 %v400
  %565 = vmatpush.bf16.msra.mxu0 %v399
  %566 = vmatpush.bf16.msra.mxu0 %v398
  %567 = vmatpush.bf16.msra.mxu0 %v397
  %568 = vmatpush.bf16.msra.mxu0 %v396
  %569 = vmatpush.bf16.msra.mxu0 %v395
  %570 = vmatpush.bf16.msra.mxu0 %v394
  %571 = vmatmul.bf16.gmra.mxu0 %v189
  %v572 = vpop.f32.mrf.mxu0
  %v573 = vadd.f32 %v530, %v572
  %v574 = vpop.f32.mrf.mxu0
  %v575 = vadd.f32 %v532, %v574
  %576 = vmatmul.bf16.gmra.mxu0 %v193
  %v577 = vpop.f32.mrf.mxu0
  %v578 = vadd.f32 %v535, %v577
  %v579 = vpop.f32.mrf.mxu0
  %v580 = vadd.f32 %v537, %v579
  %581 = vmatmul.bf16.gmra.mxu0 %v197
  %v582 = vpop.f32.mrf.mxu0
  %v583 = vadd.f32 %v540, %v582
  %v584 = vpop.f32.mrf.mxu0
  %v585 = vadd.f32 %v542, %v584
  %586 = vmatmul.bf16.gmra.mxu0 %v201
  %v587 = vpop.f32.mrf.mxu0
  %v588 = vadd.f32 %v545, %v587
  %v589 = vpop.f32.mrf.mxu0
  %v590 = vadd.f32 %v547, %v589
  %591 = vmatmul.bf16.gmra.mxu0 %v205
  %v592 = vpop.f32.mrf.mxu0
  %v593 = vadd.f32 %v550, %v592
  %v594 = vpop.f32.mrf.mxu0
  %v595 = vadd.f32 %v552, %v594
  %596 = vmatmul.bf16.gmra.mxu0 %v209
  %v597 = vpop.f32.mrf.mxu0
  %v598 = vadd.f32 %v555, %v597
  %v599 = vpop.f32.mrf.mxu0
  %v600 = vadd.f32 %v557, %v599
  %601 = vmatmul.bf16.gmra.mxu0 %v213
  %v602 = vpop.f32.mrf.mxu0
  %v603 = vadd.f32 %v560, %v602
  %v604 = vpop.f32.mrf.mxu0
  %605 = vdwg.mxu0
  %v606 = vmax.f32 %v573, 0.0
  %v607 = vmax.f32 %v575, 0.0
  %v608 = vmax.f32 %v578, 0.0
  %v609 = vmax.f32 %v580, 0.0
  %v610 = vmax.f32 %v583, 0.0
  %v611 = vmax.f32 %v585, 0.0
  %v612 = vmax.f32 %v588, 0.0
  %v613 = vmax.f32 %v590, 0.0
  %v614 = vmax.f32 %v593, 0.0
  %v615 = vmax.f32 %v595, 0.0
  %v616 = vmax.f32 %v598, 0.0
  %v617 = vmax.f32 %v600, 0.0
  %v618 = vmax.f32 %v603, 0.0
  %v619 = vpack.c.bf16 %v606, %v606
  %v620 = vpack.c.bf16 %v607, %v607
  %v621 = vpack.c.bf16 %v608, %v608
  %v622 = vpack.c.bf16 %v609, %v609
  %v623 = vpack.c.bf16 %v610, %v610
  %v624 = vpack.c.bf16 %v611, %v611
  %v625 = vpack.c.bf16 %v612, %v612
  %v626 = vpack.c.bf16 %v613, %v613
  %v627 = vpack.c.bf16 %v614, %v614
  %v628 = vpack.c.bf16 %v615, %v615
  %v629 = vpack.c.bf16 %v616, %v616
  %v630 = vpack.c.bf16 %v617, %v617
  %v631 = vpack.c.bf16 %v618, %v618
  %vm632 = vcmask 519168
  %633 = vst.msk [vmem:[%s3] sm:$0xf] %vm632, %v619
  %634 = vst.msk [vmem:[%s3 + $0x4] sm:$0xf] %vm632, %v620
  %635 = vst.msk [vmem:[%s3 + $0x8] sm:$0xf] %vm632, %v621
  %636 = vst.msk [vmem:[%s3 + $0xc] sm:$0xf] %vm632, %v622
  %637 = vst.msk [vmem:[%s3 + $0x10] sm:$0xf] %vm632, %v623
  %638 = vst.msk [vmem:[%s3 + $0x14] sm:$0xf] %vm632, %v624
  %639 = vst.msk [vmem:[%s3 + $0x18] sm:$0xf] %vm632, %v625
  %640 = vst.msk [vmem:[%s3 + $0x1c] sm:$0xf] %vm632, %v626
  %641 = vst.msk [vmem:[%s3 + $0x20] sm:$0xf] %vm632, %v627
  %642 = vst.msk [vmem:[%s3 + $0x24] sm:$0xf] %vm632, %v628
  %643 = vst.msk [vmem:[%s3 + $0x28] sm:$0xf] %vm632, %v629
  %644 = vst.msk [vmem:[%s3 + $0x2c] sm:$0xf] %vm632, %v630
  %vm645 = vcmask 516096
  %646 = vst.msk [vmem:[%s3 + $0x30] sm:$0x1] %vm645, %v631
  // Predicated region
  $region14: #{forward.8} parent=0 // pred_check
    _
  $region15: #{forward.8} parent=0 // pred_check_branch
    %648 = sbr.rel (0) target = $region17
  $region16: #{forward.8} parent=0 // pred_region
    _
  $region17: #{forward.8} parent=0 // pred_fallthru
    _
  // Predicated region
  $region18: #{forward.8} parent=0 // pred_check
    _
  $region19: #{forward.8} parent=0 // pred_check_branch
    %650 = sbr.rel (0) target = $region21
  $region20: #{forward.8} parent=0 // pred_region
    _
  $region21: #{forward.8} parent=0 // pred_fallthru
    _

// kernel: forward.11
$region0: #{forward.11}
  #allocation0 [shape = 'u32[]', space=smem, size = 0x4, offset = 0x4, fixed_abs, tag = 'smem constant byte address 0x4 - core index']
  #allocation1 [shape = 'u32[72,128]{1,0:T(1,128)}', space=vmem, size = 0x9000, scoped, tag = 'internal scratch']
  %s0 = inlined_call_operand.vmem [shape: bf16[32,576], index: 0, kind: input, shape index: {}]
  %s1 = inlined_call_operand.vmem [shape: bf16[576,256], index: 1, kind: input, shape index: {}]
  %s2 = inlined_call_operand.vmem [shape: f32[1,256], index: 2, kind: input, shape index: {}]
  %s3 = inlined_call_operand.vmem [shape: bf16[32,128], index: 3, kind: output, shape index: {0}]
  %s4 = inlined_call_operand.vmem [shape: bf16[32,128], index: 4, kind: output, shape index: {1}]
  %5 = xla_tuple %s3, %s4
  %s6 = sld [smem:[#allocation0]]
  $region30: #{forward.11} parent=0
    _
  %s8 = ssub.s32 1, %s6
  %s9 = scalar_select 0, %s8, %s6
  // Predicated region
  $region2: #{forward.11} parent=0 // pred_check
    _
  $region3: #{forward.11} parent=0 // pred_check_branch
    %11 = sbr.rel (0) target = $region5
  $region4: #{forward.11} parent=0 // pred_region
    _
  $region5: #{forward.11} parent=0 // pred_fallthru
    _
  // Predicated region
  $region6: #{forward.11} parent=0 // pred_check
    _
  $region7: #{forward.11} parent=0 // pred_check_branch
    %13 = sbr.rel (0) target = $region9
  $region8: #{forward.11} parent=0 // pred_region
    _
  $region9: #{forward.11} parent=0 // pred_fallthru
    _
  // Predicated region
  $region10: #{forward.11} parent=0 // pred_check
    _
  $region11: #{forward.11} parent=0 // pred_check_branch
    %15 = sbr.rel (0) target = $region13
  $region12: #{forward.11} parent=0 // pred_region
    _
  $region13: #{forward.11} parent=0 // pred_fallthru
    _
  %v17 = vld [vmem:[%s0] sm:$0xff]
  %v18 = vld [vmem:[%s0 + $0x8] sm:$0xff]
  %v19 = vld [vmem:[%s0 + $0x10] sm:$0xf]
  %v20 = vld [vmem:[%s0 + $0x14] sm:$0xff]
  %v21 = vld [vmem:[%s0 + $0x1c] sm:$0xff]
  %v22 = vld [vmem:[%s0 + $0x24] sm:$0xf]
  %v23 = vld [vmem:[%s0 + $0x28] sm:$0xff]
  %v24 = vld [vmem:[%s0 + $0x30] sm:$0xff]
  %v25 = vld [vmem:[%s0 + $0x38] sm:$0xf]
  %v26 = vld [vmem:[%s0 + $0x3c] sm:$0xff]
  %v27 = vld [vmem:[%s0 + $0x44] sm:$0xff]
  %v28 = vld [vmem:[%s0 + $0x4c] sm:$0xf]
  %v29 = vld [vmem:[%s1] sm:$0xff]
  %v30 = vld [vmem:[%s1 + $0x8] sm:$0xff]
  %v31 = vld [vmem:[%s1 + $0x10] sm:$0xff]
  %v32 = vld [vmem:[%s1 + $0x18] sm:$0xff]
  %v33 = vld [vmem:[%s1 + $0x20] sm:$0xff]
  %v34 = vld [vmem:[%s1 + $0x28] sm:$0xff]
  %v35 = vld [vmem:[%s1 + $0x30] sm:$0xff]
  %v36 = vld [vmem:[%s1 + $0x38] sm:$0xff]
  %v37 = vld [vmem:[%s1 + $0x40] sm:$0xff]
  %v38 = vld [vmem:[%s1 + $0x48] sm:$0xff]
  %v39 = vld [vmem:[%s1 + $0x50] sm:$0xff]
  %v40 = vld [vmem:[%s1 + $0x58] sm:$0xff]
  %v41 = vld [vmem:[%s1 + $0x60] sm:$0xff]
  %v42 = vld [vmem:[%s1 + $0x68] sm:$0xff]
  %v43 = vld [vmem:[%s1 + $0x70] sm:$0xff]
  %v44 = vld [vmem:[%s1 + $0x78] sm:$0xff]
  %v45 = vld [vmem:[%s1 + $0x80] sm:$0xff]
  %v46 = vld [vmem:[%s1 + $0x88] sm:$0xff]
  %v47 = vld [vmem:[%s1 + $0x90] sm:$0xff]
  %v48 = vld [vmem:[%s1 + $0x98] sm:$0xff]
  %v49 = vld [vmem:[%s1 + $0xa0] sm:$0xff]
  %v50 = vld [vmem:[%s1 + $0xa8] sm:$0xff]
  %v51 = vld [vmem:[%s1 + $0xb0] sm:$0xff]
  %v52 = vld [vmem:[%s1 + $0xb8] sm:$0xff]
  %v53 = vld [vmem:[%s1 + $0xc0] sm:$0xff]
  %v54 = vld [vmem:[%s1 + $0xc8] sm:$0xff]
  %v55 = vld [vmem:[%s1 + $0xd0] sm:$0xff]
  %v56 = vld [vmem:[%s1 + $0xd8] sm:$0xff]
  %v57 = vld [vmem:[%s1 + $0xe0] sm:$0xff]
  %v58 = vld [vmem:[%s1 + $0xe8] sm:$0xff]
  %v59 = vld [vmem:[%s1 + $0xf0] sm:$0xff]
  %v60 = vld [vmem:[%s1 + $0xf8] sm:$0xff]
  %v61 = vld [vmem:[%s1 + $0x100] sm:$0xff]
  %v62 = vld [vmem:[%s1 + $0x108] sm:$0xff]
  %v63 = vld [vmem:[%s1 + $0x110] sm:$0xff]
  %v64 = vld [vmem:[%s1 + $0x118] sm:$0xff]
  %v65 = vld [vmem:[%s1 + $0x120] sm:$0xff]
  %v66 = vld [vmem:[%s1 + $0x128] sm:$0xff]
  %v67 = vld [vmem:[%s1 + $0x130] sm:$0xff]
  %v68 = vld [vmem:[%s1 + $0x138] sm:$0xff]
  %v69 = vld [vmem:[%s1 + $0x140] sm:$0xff]
  %v70 = vld [vmem:[%s1 + $0x148] sm:$0xff]
  %v71 = vld [vmem:[%s1 + $0x150] sm:$0xff]
  %v72 = vld [vmem:[%s1 + $0x158] sm:$0xff]
  %v73 = vld [vmem:[%s1 + $0x160] sm:$0xff]
  %v74 = vld [vmem:[%s1 + $0x168] sm:$0xff]
  %v75 = vld [vmem:[%s1 + $0x170] sm:$0xff]
  %v76 = vld [vmem:[%s1 + $0x178] sm:$0xff]
  %v77 = vld [vmem:[%s1 + $0x180] sm:$0xff]
  %v78 = vld [vmem:[%s1 + $0x188] sm:$0xff]
  %v79 = vld [vmem:[%s1 + $0x190] sm:$0xff]
  %v80 = vld [vmem:[%s1 + $0x198] sm:$0xff]
  %v81 = vld [vmem:[%s1 + $0x1a0] sm:$0xff]
  %v82 = vld [vmem:[%s1 + $0x1a8] sm:$0xff]
  %v83 = vld [vmem:[%s1 + $0x1b0] sm:$0xff]
  %v84 = vld [vmem:[%s1 + $0x1b8] sm:$0xff]
  %v85 = vld [vmem:[%s1 + $0x1c0] sm:$0xff]
  %v86 = vld [vmem:[%s1 + $0x1c8] sm:$0xff]
  %v87 = vld [vmem:[%s1 + $0x1d0] sm:$0xff]
  %v88 = vld [vmem:[%s1 + $0x1d8] sm:$0xff]
  %v89 = vld [vmem:[%s1 + $0x1e0] sm:$0xff]
  %v90 = vld [vmem:[%s1 + $0x1e8] sm:$0xff]
  %v91 = vld [vmem:[%s1 + $0x1f0] sm:$0xff]
  %v92 = vld [vmem:[%s1 + $0x1f8] sm:$0xff]
  %v93 = vld [vmem:[%s1 + $0x200] sm:$0xff]
  %v94 = vld [vmem:[%s1 + $0x208] sm:$0xff]
  %v95 = vld [vmem:[%s1 + $0x210] sm:$0xff]
  %v96 = vld [vmem:[%s1 + $0x218] sm:$0xff]
  %v97 = vld [vmem:[%s1 + $0x220] sm:$0xff]
  %v98 = vld [vmem:[%s1 + $0x228] sm:$0xff]
  %v99 = vld [vmem:[%s1 + $0x230] sm:$0xff]
  %v100 = vld [vmem:[%s1 + $0x238] sm:$0xff]
  %v101 = vld [vmem:[%s2] sm:$0x3]
  %v103 = vperm.slane %v101, 0
  %v104 = vperm.slane %v101, 1
  %v119 = vunpack.c.l.b16 %v17
  %v120 = vunpack.c.h.b16 %v17
  %v121 = vunpack.c.l.b16 %v18
  %v122 = vunpack.c.h.b16 %v18
  %v123 = vunpack.c.l.b16 %v19
  %v124 = vunpack.c.l.b16 %v20
  %v125 = vunpack.c.h.b16 %v20
  %v126 = vunpack.c.l.b16 %v21
  %v127 = vunpack.c.h.b16 %v21
  %v128 = vunpack.c.l.b16 %v22
  %v129 = vunpack.c.l.b16 %v23
  %v130 = vunpack.c.h.b16 %v23
  %v131 = vunpack.c.l.b16 %v24
  %v132 = vunpack.c.h.b16 %v24
  %v133 = vunpack.c.l.b16 %v25
  %v134 = vunpack.c.l.b16 %v26
  %v135 = vunpack.c.h.b16 %v26
  %v136 = vunpack.c.l.b16 %v27
  %v137 = vunpack.c.h.b16 %v27
  %v138 = vunpack.c.l.b16 %v28
  %v139 = vpack.c.b16 %v124, %v119
  %v140 = vpack.c.b16 %v125, %v120
  %v141 = vpack.c.b16 %v126, %v121
  %v142 = vpack.c.b16 %v127, %v122
  %v143 = vpack.c.b16 %v128, %v123
  %v144 = vpack.c.b16 %v134, %v129
  %v145 = vpack.c.b16 %v135, %v130
  %v146 = vpack.c.b16 %v136, %v131
  %v147 = vpack.c.b16 %v137, %v132
  %v148 = vpack.c.b16 %v138, %v133
  %v229 = vunpack.c.l.b16 %v29
  %v230 = vunpack.c.h.b16 %v29
  %v231 = vunpack.c.l.b16 %v30
  %v232 = vunpack.c.h.b16 %v30
  %v233 = vunpack.c.l.b16 %v31
  %v234 = vunpack.c.h.b16 %v31
  %v235 = vunpack.c.l.b16 %v32
  %v236 = vunpack.c.h.b16 %v32
  %v237 = vunpack.c.l.b16 %v33
  %v238 = vunpack.c.h.b16 %v33
  %v239 = vunpack.c.l.b16 %v34
  %v240 = vunpack.c.h.b16 %v34
  %v241 = vunpack.c.l.b16 %v35
  %v242 = vunpack.c.h.b16 %v35
  %v243 = vunpack.c.l.b16 %v36
  %v244 = vunpack.c.h.b16 %v36
  %v245 = vunpack.c.l.b16 %v37
  %v246 = vunpack.c.h.b16 %v37
  %v247 = vunpack.c.l.b16 %v38
  %v248 = vunpack.c.h.b16 %v38
  %v249 = vunpack.c.l.b16 %v39
  %v250 = vunpack.c.h.b16 %v39
  %v251 = vunpack.c.l.b16 %v40
  %v252 = vunpack.c.h.b16 %v40
  %v253 = vunpack.c.l.b16 %v41
  %v254 = vunpack.c.h.b16 %v41
  %v255 = vunpack.c.l.b16 %v42
  %v256 = vunpack.c.h.b16 %v42
  %v257 = vunpack.c.l.b16 %v43
  %v258 = vunpack.c.h.b16 %v43
  %v259 = vunpack.c.l.b16 %v44
  %v260 = vunpack.c.h.b16 %v44
  %v261 = vunpack.c.l.b16 %v45
  %v262 = vunpack.c.h.b16 %v45
  %v263 = vunpack.c.l.b16 %v46
  %v264 = vunpack.c.h.b16 %v46
  %v265 = vunpack.c.l.b16 %v47
  %v266 = vunpack.c.h.b16 %v47
  %v267 = vunpack.c.l.b16 %v48
  %v268 = vunpack.c.h.b16 %v48
  %v269 = vunpack.c.l.b16 %v49
  %v270 = vunpack.c.h.b16 %v49
  %v271 = vunpack.c.l.b16 %v50
  %v272 = vunpack.c.h.b16 %v50
  %v273 = vunpack.c.l.b16 %v51
  %v274 = vunpack.c.h.b16 %v51
  %v275 = vunpack.c.l.b16 %v52
  %v276 = vunpack.c.h.b16 %v52
  %v277 = vunpack.c.l.b16 %v53
  %v278 = vunpack.c.h.b16 %v53
  %v279 = vunpack.c.l.b16 %v54
  %v280 = vunpack.c.h.b16 %v54
  %v281 = vunpack.c.l.b16 %v55
  %v282 = vunpack.c.h.b16 %v55
  %v283 = vunpack.c.l.b16 %v56
  %v284 = vunpack.c.h.b16 %v56
  %v285 = vunpack.c.l.b16 %v57
  %v286 = vunpack.c.h.b16 %v57
  %v287 = vunpack.c.l.b16 %v58
  %v288 = vunpack.c.h.b16 %v58
  %v289 = vunpack.c.l.b16 %v59
  %v290 = vunpack.c.h.b16 %v59
  %v291 = vunpack.c.l.b16 %v60
  %v292 = vunpack.c.h.b16 %v60
  %v293 = vunpack.c.l.b16 %v61
  %v294 = vunpack.c.h.b16 %v61
  %v295 = vunpack.c.l.b16 %v62
  %v296 = vunpack.c.h.b16 %v62
  %v297 = vunpack.c.l.b16 %v63
  %v298 = vunpack.c.h.b16 %v63
  %v299 = vunpack.c.l.b16 %v64
  %v300 = vunpack.c.h.b16 %v64
  %v301 = vunpack.c.l.b16 %v65
  %v302 = vunpack.c.h.b16 %v65
  %v303 = vunpack.c.l.b16 %v66
  %v304 = vunpack.c.h.b16 %v66
  %v305 = vunpack.c.l.b16 %v67
  %v306 = vunpack.c.h.b16 %v67
  %v307 = vunpack.c.l.b16 %v68
  %v308 = vunpack.c.h.b16 %v68
  %v309 = vunpack.c.l.b16 %v69
  %v310 = vunpack.c.h.b16 %v69
  %v311 = vunpack.c.l.b16 %v70
  %v312 = vunpack.c.h.b16 %v70
  %v313 = vunpack.c.l.b16 %v71
  %v314 = vunpack.c.h.b16 %v71
  %v315 = vunpack.c.l.b16 %v72
  %v316 = vunpack.c.h.b16 %v72
  %v317 = vunpack.c.l.b16 %v73
  %v318 = vunpack.c.h.b16 %v73
  %v319 = vunpack.c.l.b16 %v74
  %v320 = vunpack.c.h.b16 %v74
  %v321 = vunpack.c.l.b16 %v75
  %v322 = vunpack.c.h.b16 %v75
  %v323 = vunpack.c.l.b16 %v76
  %v324 = vunpack.c.h.b16 %v76
  %v325 = vunpack.c.l.b16 %v77
  %v326 = vunpack.c.h.b16 %v77
  %v327 = vunpack.c.l.b16 %v78
  %v328 = vunpack.c.h.b16 %v78
  %v329 = vunpack.c.l.b16 %v79
  %v330 = vunpack.c.h.b16 %v79
  %v331 = vunpack.c.l.b16 %v80
  %v332 = vunpack.c.h.b16 %v80
  %v333 = vunpack.c.l.b16 %v81
  %v334 = vunpack.c.h.b16 %v81
  %v335 = vunpack.c.l.b16 %v82
  %v336 = vunpack.c.h.b16 %v82
  %v337 = vunpack.c.l.b16 %v83
  %v338 = vunpack.c.h.b16 %v83
  %v339 = vunpack.c.l.b16 %v84
  %v340 = vunpack.c.h.b16 %v84
  %v341 = vunpack.c.l.b16 %v85
  %v342 = vunpack.c.h.b16 %v85
  %v343 = vunpack.c.l.b16 %v86
  %v344 = vunpack.c.h.b16 %v86
  %v345 = vunpack.c.l.b16 %v87
  %v346 = vunpack.c.h.b16 %v87
  %v347 = vunpack.c.l.b16 %v88
  %v348 = vunpack.c.h.b16 %v88
  %v349 = vunpack.c.l.b16 %v89
  %v350 = vunpack.c.h.b16 %v89
  %v351 = vunpack.c.l.b16 %v90
  %v352 = vunpack.c.h.b16 %v90
  %v353 = vunpack.c.l.b16 %v91
  %v354 = vunpack.c.h.b16 %v91
  %v355 = vunpack.c.l.b16 %v92
  %v356 = vunpack.c.h.b16 %v92
  %v357 = vunpack.c.l.b16 %v93
  %v358 = vunpack.c.h.b16 %v93
  %v359 = vunpack.c.l.b16 %v94
  %v360 = vunpack.c.h.b16 %v94
  %v361 = vunpack.c.l.b16 %v95
  %v362 = vunpack.c.h.b16 %v95
  %v363 = vunpack.c.l.b16 %v96
  %v364 = vunpack.c.h.b16 %v96
  %v365 = vunpack.c.l.b16 %v97
  %v366 = vunpack.c.h.b16 %v97
  %v367 = vunpack.c.l.b16 %v98
  %v368 = vunpack.c.h.b16 %v98
  %v369 = vunpack.c.l.b16 %v99
  %v370 = vunpack.c.h.b16 %v99
  %v371 = vunpack.c.l.b16 %v100
  %v372 = vunpack.c.h.b16 %v100
  %v373 = vpack.c.b16 %v231, %v229
  %v374 = vpack.c.b16 %v232, %v230
  %v375 = vpack.c.b16 %v235, %v233
  %v376 = vpack.c.b16 %v236, %v234
  %v377 = vpack.c.b16 %v239, %v237
  %v378 = vpack.c.b16 %v240, %v238
  %v379 = vpack.c.b16 %v243, %v241
  %v380 = vpack.c.b16 %v244, %v242
  %v381 = vpack.c.b16 %v247, %v245
  %v382 = vpack.c.b16 %v248, %v246
  %v383 = vpack.c.b16 %v251, %v249
  %v384 = vpack.c.b16 %v252, %v250
  %v385 = vpack.c.b16 %v255, %v253
  %v386 = vpack.c.b16 %v256, %v254
  %v387 = vpack.c.b16 %v259, %v257
  %v388 = vpack.c.b16 %v260, %v258
  %v389 = vpack.c.b16 %v263, %v261
  %v390 = vpack.c.b16 %v264, %v262
  %v391 = vpack.c.b16 %v267, %v265
  %v392 = vpack.c.b16 %v268, %v266
  %v393 = vpack.c.b16 %v271, %v269
  %v394 = vpack.c.b16 %v272, %v270
  %v395 = vpack.c.b16 %v275, %v273
  %v396 = vpack.c.b16 %v276, %v274
  %v397 = vpack.c.b16 %v279, %v277
  %v398 = vpack.c.b16 %v280, %v278
  %v399 = vpack.c.b16 %v283, %v281
  %v400 = vpack.c.b16 %v284, %v282
  %v401 = vpack.c.b16 %v287, %v285
  %v402 = vpack.c.b16 %v288, %v286
  %v403 = vpack.c.b16 %v291, %v289
  %v404 = vpack.c.b16 %v292, %v290
  %v405 = vpack.c.b16 %v295, %v293
  %v406 = vpack.c.b16 %v296, %v294
  %v407 = vpack.c.b16 %v299, %v297
  %v408 = vpack.c.b16 %v300, %v298
  %v409 = vpack.c.b16 %v303, %v301
  %v410 = vpack.c.b16 %v304, %v302
  %v411 = vpack.c.b16 %v307, %v305
  %v412 = vpack.c.b16 %v308, %v306
  %v413 = vpack.c.b16 %v311, %v309
  %v414 = vpack.c.b16 %v312, %v310
  %v415 = vpack.c.b16 %v315, %v313
  %v416 = vpack.c.b16 %v316, %v314
  %v417 = vpack.c.b16 %v319, %v317
  %v418 = vpack.c.b16 %v320, %v318
  %v419 = vpack.c.b16 %v323, %v321
  %v420 = vpack.c.b16 %v324, %v322
  %v421 = vpack.c.b16 %v327, %v325
  %v422 = vpack.c.b16 %v328, %v326
  %v423 = vpack.c.b16 %v331, %v329
  %v424 = vpack.c.b16 %v332, %v330
  %v425 = vpack.c.b16 %v335, %v333
  %v426 = vpack.c.b16 %v336, %v334
  %v427 = vpack.c.b16 %v339, %v337
  %v428 = vpack.c.b16 %v340, %v338
  %v429 = vpack.c.b16 %v343, %v341
  %v430 = vpack.c.b16 %v344, %v342
  %v431 = vpack.c.b16 %v347, %v345
  %v432 = vpack.c.b16 %v348, %v346
  %v433 = vpack.c.b16 %v351, %v349
  %v434 = vpack.c.b16 %v352, %v350
  %v435 = vpack.c.b16 %v355, %v353
  %v436 = vpack.c.b16 %v356, %v354
  %v437 = vpack.c.b16 %v359, %v357
  %v438 = vpack.c.b16 %v360, %v358
  %v439 = vpack.c.b16 %v363, %v361
  %v440 = vpack.c.b16 %v364, %v362
  %v441 = vpack.c.b16 %v367, %v365
  %v442 = vpack.c.b16 %v368, %v366
  %v443 = vpack.c.b16 %v371, %v369
  %v444 = vpack.c.b16 %v372, %v370
  %vm517 = vcmask 523264
  %v519 = vsel %vm517, %v143, 0
  %v522 = vsel %vm517, %v148, 0
  %524 = vmatpush.bf16.msra.mxu0 %v387
  %525 = vmatpush.bf16.msra.mxu0 %v385
  %526 = vmatpush.bf16.msra.mxu0 %v383
  %527 = vmatpush.bf16.msra.mxu0 %v381
  %528 = vmatpush.bf16.msra.mxu0 %v379
  %529 = vmatpush.bf16.msra.mxu0 %v377
  %530 = vmatpush.bf16.msra.mxu0 %v375
  %531 = vmatpush.bf16.msra.mxu0 %v373
  %532 = vmatmul.bf16.gmra.mxu0 %v139
  %v533 = vpop.f32.mrf.mxu0
  %v534 = vadd.f32 %v103, %v533
  %v535 = vpop.f32.mrf.mxu0
  %v536 = vadd.f32 %v103, %v535
  %537 = vmatmul.bf16.gmra.mxu0 %v144
  %v538 = vpop.f32.mrf.mxu0
  %v539 = vadd.f32 %v103, %v538
  %v540 = vpop.f32.mrf.mxu0
  %v541 = vadd.f32 %v103, %v540
  %542 = vdwg.mxu0
  %543 = vmatpush.bf16.msra.mxu0 %v403
  %544 = vmatpush.bf16.msra.mxu0 %v401
  %545 = vmatpush.bf16.msra.mxu0 %v399
  %546 = vmatpush.bf16.msra.mxu0 %v397
  %547 = vmatpush.bf16.msra.mxu0 %v395
  %548 = vmatpush.bf16.msra.mxu0 %v393
  %549 = vmatpush.bf16.msra.mxu0 %v391
  %550 = vmatpush.bf16.msra.mxu0 %v389
  %551 = vmatmul.bf16.gmra.mxu0 %v140
  %v552 = vpop.f32.mrf.mxu0
  %v553 = vadd.f32 %v534, %v552
  %v554 = vpop.f32.mrf.mxu0
  %v555 = vadd.f32 %v536, %v554
  %556 = vmatmul.bf16.gmra.mxu0 %v145
  %v557 = vpop.f32.mrf.mxu0
  %v558 = vadd.f32 %v539, %v557
  %v559 = vpop.f32.mrf.mxu0
  %v560 = vadd.f32 %v541, %v559
  %561 = vdwg.mxu0
  %562 = vmatpush.bf16.msra.mxu0 %v419
  %563 = vmatpush.bf16.msra.mxu0 %v417
  %564 = vmatpush.bf16.msra.mxu0 %v415
  %565 = vmatpush.bf16.msra.mxu0 %v413
  %566 = vmatpush.bf16.msra.mxu0 %v411
  %567 = vmatpush.bf16.msra.mxu0 %v409
  %568 = vmatpush.bf16.msra.mxu0 %v407
  %569 = vmatpush.bf16.msra.mxu0 %v405
  %570 = vmatmul.bf16.gmra.mxu0 %v141
  %v571 = vpop.f32.mrf.mxu0
  %v572 = vadd.f32 %v553, %v571
  %v573 = vpop.f32.mrf.mxu0
  %v574 = vadd.f32 %v555, %v573
  %575 = vmatmul.bf16.gmra.mxu0 %v146
  %v576 = vpop.f32.mrf.mxu0
  %v577 = vadd.f32 %v558, %v576
  %v578 = vpop.f32.mrf.mxu0
  %v579 = vadd.f32 %v560, %v578
  %580 = vdwg.mxu0
  %581 = vmatpush.bf16.msra.mxu0 %v435
  %582 = vmatpush.bf16.msra.mxu0 %v433
  %583 = vmatpush.bf16.msra.mxu0 %v431
  %584 = vmatpush.bf16.msra.mxu0 %v429
  %585 = vmatpush.bf16.msra.mxu0 %v427
  %586 = vmatpush.bf16.msra.mxu0 %v425
  %587 = vmatpush.bf16.msra.mxu0 %v423
  %588 = vmatpush.bf16.msra.mxu0 %v421
  %589 = vmatmul.bf16.gmra.mxu0 %v142
  %v590 = vpop.f32.mrf.mxu0
  %v591 = vadd.f32 %v572, %v590
  %v592 = vpop.f32.mrf.mxu0
  %v593 = vadd.f32 %v574, %v592
  %594 = vmatmul.bf16.gmra.mxu0 %v147
  %v595 = vpop.f32.mrf.mxu0
  %v596 = vadd.f32 %v577, %v595
  %v597 = vpop.f32.mrf.mxu0
  %v598 = vadd.f32 %v579, %v597
  %599 = vdwg.mxu0
  %600 = vmatpush.bf16.msra.mxu0 0
  %601 = vmatpush.bf16.msra.mxu0 0
  %602 = vmatpush.bf16.msra.mxu0 0
  %603 = vmatpush.bf16.msra.mxu0 0
  %604 = vmatpush.bf16.msra.mxu0 %v443
  %605 = vmatpush.bf16.msra.mxu0 %v441
  %606 = vmatpush.bf16.msra.mxu0 %v439
  %607 = vmatpush.bf16.msra.mxu0 %v437
  %608 = vmatmul.bf16.gmra.mxu0 %v519
  %v609 = vpop.f32.mrf.mxu0
  %v610 = vadd.f32 %v591, %v609
  %v611 = vpop.f32.mrf.mxu0
  %v612 = vadd.f32 %v593, %v611
  %613 = vmatmul.bf16.gmra.mxu0 %v522
  %v614 = vpop.f32.mrf.mxu0
  %v615 = vadd.f32 %v596, %v614
  %v616 = vpop.f32.mrf.mxu0
  %v617 = vadd.f32 %v598, %v616
  %618 = vdwg.mxu0
  %619 = vmatpush.bf16.msra.mxu0 %v388
  %620 = vmatpush.bf16.msra.mxu0 %v386
  %621 = vmatpush.bf16.msra.mxu0 %v384
  %622 = vmatpush.bf16.msra.mxu0 %v382
  %623 = vmatpush.bf16.msra.mxu0 %v380
  %624 = vmatpush.bf16.msra.mxu0 %v378
  %625 = vmatpush.bf16.msra.mxu0 %v376
  %626 = vmatpush.bf16.msra.mxu0 %v374
  %627 = vmatmul.bf16.gmra.mxu0 %v139
  %v628 = vpop.f32.mrf.mxu0
  %v629 = vadd.f32 %v104, %v628
  %v630 = vpop.f32.mrf.mxu0
  %v631 = vadd.f32 %v104, %v630
  %632 = vmatmul.bf16.gmra.mxu0 %v144
  %v633 = vpop.f32.mrf.mxu0
  %v634 = vadd.f32 %v104, %v633
  %v635 = vpop.f32.mrf.mxu0
  %v636 = vadd.f32 %v104, %v635
  %637 = vdwg.mxu0
  %638 = vmatpush.bf16.msra.mxu0 %v404
  %639 = vmatpush.bf16.msra.mxu0 %v402
  %640 = vmatpush.bf16.msra.mxu0 %v400
  %641 = vmatpush.bf16.msra.mxu0 %v398
  %642 = vmatpush.bf16.msra.mxu0 %v396
  %643 = vmatpush.bf16.msra.mxu0 %v394
  %644 = vmatpush.bf16.msra.mxu0 %v392
  %645 = vmatpush.bf16.msra.mxu0 %v390
  %646 = vmatmul.bf16.gmra.mxu0 %v140
  %v647 = vpop.f32.mrf.mxu0
  %v648 = vadd.f32 %v629, %v647
  %v649 = vpop.f32.mrf.mxu0
  %v650 = vadd.f32 %v631, %v649
  %651 = vmatmul.bf16.gmra.mxu0 %v145
  %v652 = vpop.f32.mrf.mxu0
  %v653 = vadd.f32 %v634, %v652
  %v654 = vpop.f32.mrf.mxu0
  %v655 = vadd.f32 %v636, %v654
  %656 = vdwg.mxu0
  %657 = vmatpush.bf16.msra.mxu0 %v420
  %658 = vmatpush.bf16.msra.mxu0 %v418
  %659 = vmatpush.bf16.msra.mxu0 %v416
  %660 = vmatpush.bf16.msra.mxu0 %v414
  %661 = vmatpush.bf16.msra.mxu0 %v412
  %662 = vmatpush.bf16.msra.mxu0 %v410
  %663 = vmatpush.bf16.msra.mxu0 %v408
  %664 = vmatpush.bf16.msra.mxu0 %v406
  %665 = vmatmul.bf16.gmra.mxu0 %v141
  %v666 = vpop.f32.mrf.mxu0
  %v667 = vadd.f32 %v648, %v666
  %v668 = vpop.f32.mrf.mxu0
  %v669 = vadd.f32 %v650, %v668
  %670 = vmatmul.bf16.gmra.mxu0 %v146
  %v671 = vpop.f32.mrf.mxu0
  %v672 = vadd.f32 %v653, %v671
  %v673 = vpop.f32.mrf.mxu0
  %v674 = vadd.f32 %v655, %v673
  %675 = vdwg.mxu0
  %676 = vmatpush.bf16.msra.mxu0 %v436
  %677 = vmatpush.bf16.msra.mxu0 %v434
  %678 = vmatpush.bf16.msra.mxu0 %v432
  %679 = vmatpush.bf16.msra.mxu0 %v430
  %680 = vmatpush.bf16.msra.mxu0 %v428
  %681 = vmatpush.bf16.msra.mxu0 %v426
  %682 = vmatpush.bf16.msra.mxu0 %v424
  %683 = vmatpush.bf16.msra.mxu0 %v422
  %684 = vmatmul.bf16.gmra.mxu0 %v142
  %v685 = vpop.f32.mrf.mxu0
  %v686 = vadd.f32 %v667, %v685
  %v687 = vpop.f32.mrf.mxu0
  %v688 = vadd.f32 %v669, %v687
  %689 = vmatmul.bf16.gmra.mxu0 %v147
  %v690 = vpop.f32.mrf.mxu0
  %v691 = vadd.f32 %v672, %v690
  %v692 = vpop.f32.mrf.mxu0
  %v693 = vadd.f32 %v674, %v692
  %694 = vdwg.mxu0
  %695 = vmatpush.bf16.msra.mxu0 0
  %696 = vmatpush.bf16.msra.mxu0 0
  %697 = vmatpush.bf16.msra.mxu0 0
  %698 = vmatpush.bf16.msra.mxu0 0
  %699 = vmatpush.bf16.msra.mxu0 %v444
  %700 = vmatpush.bf16.msra.mxu0 %v442
  %701 = vmatpush.bf16.msra.mxu0 %v440
  %702 = vmatpush.bf16.msra.mxu0 %v438
  %703 = vmatmul.bf16.gmra.mxu0 %v519
  %v704 = vpop.f32.mrf.mxu0
  %v705 = vadd.f32 %v686, %v704
  %v706 = vpop.f32.mrf.mxu0
  %v707 = vadd.f32 %v688, %v706
  %708 = vmatmul.bf16.gmra.mxu0 %v522
  %v709 = vpop.f32.mrf.mxu0
  %v710 = vadd.f32 %v691, %v709
  %v711 = vpop.f32.mrf.mxu0
  %v712 = vadd.f32 %v693, %v711
  %713 = vdwg.mxu0
  %v714 = vmax.f32 %v610, 0.0
  %v715 = vmax.f32 %v612, 0.0
  %v716 = vmax.f32 %v615, 0.0
  %v717 = vmax.f32 %v617, 0.0
  %v718 = vpack.c.bf16 %v714, %v714
  %v719 = vpack.c.bf16 %v715, %v715
  %v720 = vpack.c.bf16 %v716, %v716
  %v721 = vpack.c.bf16 %v717, %v717
  %722 = vst [vmem:[%s3] sm:$0xf] %v718
  %723 = vst [vmem:[%s3 + $0x4] sm:$0xf] %v719
  %724 = vst [vmem:[%s3 + $0x8] sm:$0xf] %v720
  %725 = vst [vmem:[%s3 + $0xc] sm:$0xf] %v721
  %v726 = vpack.c.bf16 %v705, %v705
  %v727 = vpack.c.bf16 %v707, %v707
  %v728 = vpack.c.bf16 %v710, %v710
  %v729 = vpack.c.bf16 %v712, %v712
  %730 = vst [vmem:[%s4] sm:$0xf] %v726
  %731 = vst [vmem:[%s4 + $0x4] sm:$0xf] %v727
  %732 = vst [vmem:[%s4 + $0x8] sm:$0xf] %v728
  %733 = vst [vmem:[%s4 + $0xc] sm:$0xf] %v729
  // Predicated region
  $region14: #{forward.11} parent=0 // pred_check
    _
  $region15: #{forward.11} parent=0 // pred_check_branch
    %735 = sbr.rel (0) target = $region17
  $region16: #{forward.11} parent=0 // pred_region
    _
  $region17: #{forward.11} parent=0 // pred_fallthru
    _
  // Predicated region
  $region18: #{forward.11} parent=0 // pred_check
    _
  $region19: #{forward.11} parent=0 // pred_check_branch
    %737 = sbr.rel (0) target = $region21
  $region20: #{forward.11} parent=0 // pred_region
    _
  $region21: #{forward.11} parent=0 // pred_fallthru
    _
  // Predicated region
  $region22: #{forward.11} parent=0 // pred_check
    _
  $region23: #{forward.11} parent=0 // pred_check_branch
    %739 = sbr.rel (0) target = $region25
  $region24: #{forward.11} parent=0 // pred_region
    _
  $region25: #{forward.11} parent=0 // pred_fallthru
    _
  // Predicated region
  $region26: #{forward.11} parent=0 // pred_check
    _
  $region27: #{forward.11} parent=0 // pred_check_branch
    %741 = sbr.rel (0) target = $region29
  $region28: #{forward.11} parent=0 // pred_region
    _
  $region29: #{forward.11} parent=0 // pred_fallthru
    _

// kernel: forward.10
$region0: #{forward.10}
  #allocation0 [shape = 'u32[]', space=smem, size = 0x4, offset = 0x4, fixed_abs, tag = 'smem constant byte address 0x4 - core index']
  #allocation1 [shape = 'u32[72,128]{1,0:T(1,128)}', space=vmem, size = 0x9000, scoped, tag = 'internal scratch']
  %s0 = inlined_call_operand.vmem [shape: bf16[32,576], index: 0, kind: input, shape index: {}]
  %s1 = inlined_call_operand.vmem [shape: bf16[576,64], index: 1, kind: input, shape index: {}]
  %s2 = inlined_call_operand.vmem [shape: f32[1,64], index: 2, kind: input, shape index: {}]
  %s3 = inlined_call_operand.vmem [shape: bf16[32,64], index: 3, kind: input, shape index: {}]
  %s4 = inlined_call_operand.vmem [shape: bf16[32,64], index: 4, kind: output, shape index: {}]
  %s5 = sld [smem:[#allocation0]]
  $region26: #{forward.10} parent=0
    _
  %s7 = ssub.s32 1, %s5
  %s8 = scalar_select 0, %s7, %s5
  // Predicated region
  $region2: #{forward.10} parent=0 // pred_check
    _
  $region3: #{forward.10} parent=0 // pred_check_branch
    %10 = sbr.rel (0) target = $region5
  $region4: #{forward.10} parent=0 // pred_region
    _
  $region5: #{forward.10} parent=0 // pred_fallthru
    _
  // Predicated region
  $region6: #{forward.10} parent=0 // pred_check
    _
  $region7: #{forward.10} parent=0 // pred_check_branch
    %12 = sbr.rel (0) target = $region9
  $region8: #{forward.10} parent=0 // pred_region
    _
  $region9: #{forward.10} parent=0 // pred_fallthru
    _
  // Predicated region
  $region10: #{forward.10} parent=0 // pred_check
    _
  $region11: #{forward.10} parent=0 // pred_check_branch
    %14 = sbr.rel (0) target = $region13
  $region12: #{forward.10} parent=0 // pred_region
    _
  $region13: #{forward.10} parent=0 // pred_fallthru
    _
  // Predicated region
  $region14: #{forward.10} parent=0 // pred_check
    _
  $region15: #{forward.10} parent=0 // pred_check_branch
    %16 = sbr.rel (0) target = $region17
  $region16: #{forward.10} parent=0 // pred_region
    _
  $region17: #{forward.10} parent=0 // pred_fallthru
    _
  %v18 = vld [vmem:[%s0] sm:$0xff]
  %v19 = vld [vmem:[%s0 + $0x8] sm:$0xff]
  %v20 = vld [vmem:[%s0 + $0x10] sm:$0xf]
  %v21 = vld [vmem:[%s0 + $0x14] sm:$0xff]
  %v22 = vld [vmem:[%s0 + $0x1c] sm:$0xff]
  %v23 = vld [vmem:[%s0 + $0x24] sm:$0xf]
  %v24 = vld [vmem:[%s0 + $0x28] sm:$0xff]
  %v25 = vld [vmem:[%s0 + $0x30] sm:$0xff]
  %v26 = vld [vmem:[%s0 + $0x38] sm:$0xf]
  %v27 = vld [vmem:[%s0 + $0x3c] sm:$0xff]
  %v28 = vld [vmem:[%s0 + $0x44] sm:$0xff]
  %v29 = vld [vmem:[%s0 + $0x4c] sm:$0xf]
  %v30 = vld [vmem:[%s1] sm:$0xf]
  %v31 = vld [vmem:[%s1 + $0x4] sm:$0xf]
  %v32 = vld [vmem:[%s1 + $0x8] sm:$0xf]
  %v33 = vld [vmem:[%s1 + $0xc] sm:$0xf]
  %v34 = vld [vmem:[%s1 + $0x10] sm:$0xf]
  %v35 = vld [vmem:[%s1 + $0x14] sm:$0xf]
  %v36 = vld [vmem:[%s1 + $0x18] sm:$0xf]
  %v37 = vld [vmem:[%s1 + $0x1c] sm:$0xf]
  %v38 = vld [vmem:[%s1 + $0x20] sm:$0xf]
  %v39 = vld [vmem:[%s1 + $0x24] sm:$0xf]
  %v40 = vld [vmem:[%s1 + $0x28] sm:$0xf]
  %v41 = vld [vmem:[%s1 + $0x2c] sm:$0xf]
  %v42 = vld [vmem:[%s1 + $0x30] sm:$0xf]
  %v43 = vld [vmem:[%s1 + $0x34] sm:$0xf]
  %v44 = vld [vmem:[%s1 + $0x38] sm:$0xf]
  %v45 = vld [vmem:[%s1 + $0x3c] sm:$0xf]
  %v46 = vld [vmem:[%s1 + $0x40] sm:$0xf]
  %v47 = vld [vmem:[%s1 + $0x44] sm:$0xf]
  %v48 = vld [vmem:[%s1 + $0x48] sm:$0xf]
  %v49 = vld [vmem:[%s1 + $0x4c] sm:$0xf]
  %v50 = vld [vmem:[%s1 + $0x50] sm:$0xf]
  %v51 = vld [vmem:[%s1 + $0x54] sm:$0xf]
  %v52 = vld [vmem:[%s1 + $0x58] sm:$0xf]
  %v53 = vld [vmem:[%s1 + $0x5c] sm:$0xf]
  %v54 = vld [vmem:[%s1 + $0x60] sm:$0xf]
  %v55 = vld [vmem:[%s1 + $0x64] sm:$0xf]
  %v56 = vld [vmem:[%s1 + $0x68] sm:$0xf]
  %v57 = vld [vmem:[%s1 + $0x6c] sm:$0xf]
  %v58 = vld [vmem:[%s1 + $0x70] sm:$0xf]
  %v59 = vld [vmem:[%s1 + $0x74] sm:$0xf]
  %v60 = vld [vmem:[%s1 + $0x78] sm:$0xf]
  %v61 = vld [vmem:[%s1 + $0x7c] sm:$0xf]
  %v62 = vld [vmem:[%s1 + $0x80] sm:$0xf]
  %v63 = vld [vmem:[%s1 + $0x84] sm:$0xf]
  %v64 = vld [vmem:[%s1 + $0x88] sm:$0xf]
  %v65 = vld [vmem:[%s1 + $0x8c] sm:$0xf]
  %v66 = vld [vmem:[%s1 + $0x90] sm:$0xf]
  %v67 = vld [vmem:[%s1 + $0x94] sm:$0xf]
  %v68 = vld [vmem:[%s1 + $0x98] sm:$0xf]
  %v69 = vld [vmem:[%s1 + $0x9c] sm:$0xf]
  %v70 = vld [vmem:[%s1 + $0xa0] sm:$0xf]
  %v71 = vld [vmem:[%s1 + $0xa4] sm:$0xf]
  %v72 = vld [vmem:[%s1 + $0xa8] sm:$0xf]
  %v73 = vld [vmem:[%s1 + $0xac] sm:$0xf]
  %v74 = vld [vmem:[%s1 + $0xb0] sm:$0xf]
  %v75 = vld [vmem:[%s1 + $0xb4] sm:$0xf]
  %v76 = vld [vmem:[%s1 + $0xb8] sm:$0xf]
  %v77 = vld [vmem:[%s1 + $0xbc] sm:$0xf]
  %v78 = vld [vmem:[%s1 + $0xc0] sm:$0xf]
  %v79 = vld [vmem:[%s1 + $0xc4] sm:$0xf]
  %v80 = vld [vmem:[%s1 + $0xc8] sm:$0xf]
  %v81 = vld [vmem:[%s1 + $0xcc] sm:$0xf]
  %v82 = vld [vmem:[%s1 + $0xd0] sm:$0xf]
  %v83 = vld [vmem:[%s1 + $0xd4] sm:$0xf]
  %v84 = vld [vmem:[%s1 + $0xd8] sm:$0xf]
  %v85 = vld [vmem:[%s1 + $0xdc] sm:$0xf]
  %v86 = vld [vmem:[%s1 + $0xe0] sm:$0xf]
  %v87 = vld [vmem:[%s1 + $0xe4] sm:$0xf]
  %v88 = vld [vmem:[%s1 + $0xe8] sm:$0xf]
  %v89 = vld [vmem:[%s1 + $0xec] sm:$0xf]
  %v90 = vld [vmem:[%s1 + $0xf0] sm:$0xf]
  %v91 = vld [vmem:[%s1 + $0xf4] sm:$0xf]
  %v92 = vld [vmem:[%s1 + $0xf8] sm:$0xf]
  %v93 = vld [vmem:[%s1 + $0xfc] sm:$0xf]
  %v94 = vld [vmem:[%s1 + $0x100] sm:$0xf]
  %v95 = vld [vmem:[%s1 + $0x104] sm:$0xf]
  %v96 = vld [vmem:[%s1 + $0x108] sm:$0xf]
  %v97 = vld [vmem:[%s1 + $0x10c] sm:$0xf]
  %v98 = vld [vmem:[%s1 + $0x110] sm:$0xf]
  %v99 = vld [vmem:[%s1 + $0x114] sm:$0xf]
  %v100 = vld [vmem:[%s1 + $0x118] sm:$0xf]
  %v101 = vld [vmem:[%s1 + $0x11c] sm:$0xf]
  %v102 = vld [vmem:[%s2] sm:$0x1]
  %v104 = vperm.slane %v102, 0
  %v118 = vunpack.c.l.b16 %v18
  %v119 = vunpack.c.h.b16 %v18
  %v120 = vunpack.c.l.b16 %v19
  %v121 = vunpack.c.h.b16 %v19
  %v122 = vunpack.c.l.b16 %v20
  %v123 = vunpack.c.l.b16 %v21
  %v124 = vunpack.c.h.b16 %v21
  %v125 = vunpack.c.l.b16 %v22
  %v126 = vunpack.c.h.b16 %v22
  %v127 = vunpack.c.l.b16 %v23
  %v128 = vunpack.c.l.b16 %v24
  %v129 = vunpack.c.h.b16 %v24
  %v130 = vunpack.c.l.b16 %v25
  %v131 = vunpack.c.h.b16 %v25
  %v132 = vunpack.c.l.b16 %v26
  %v133 = vunpack.c.l.b16 %v27
  %v134 = vunpack.c.h.b16 %v27
  %v135 = vunpack.c.l.b16 %v28
  %v136 = vunpack.c.h.b16 %v28
  %v137 = vunpack.c.l.b16 %v29
  %v138 = vpack.c.b16 %v123, %v118
  %v139 = vpack.c.b16 %v124, %v119
  %v140 = vpack.c.b16 %v125, %v120
  %v141 = vpack.c.b16 %v126, %v121
  %v142 = vpack.c.b16 %v127, %v122
  %v143 = vpack.c.b16 %v133, %v128
  %v144 = vpack.c.b16 %v134, %v129
  %v145 = vpack.c.b16 %v135, %v130
  %v146 = vpack.c.b16 %v136, %v131
  %v147 = vpack.c.b16 %v137, %v132
  %v228 = vunpack.c.l.b16 %v30
  %v229 = vunpack.c.l.b16 %v31
  %v230 = vunpack.c.l.b16 %v32
  %v231 = vunpack.c.l.b16 %v33
  %v232 = vunpack.c.l.b16 %v34
  %v233 = vunpack.c.l.b16 %v35
  %v234 = vunpack.c.l.b16 %v36
  %v235 = vunpack.c.l.b16 %v37
  %v236 = vunpack.c.l.b16 %v38
  %v237 = vunpack.c.l.b16 %v39
  %v238 = vunpack.c.l.b16 %v40
  %v239 = vunpack.c.l.b16 %v41
  %v240 = vunpack.c.l.b16 %v42
  %v241 = vunpack.c.l.b16 %v43
  %v242 = vunpack.c.l.b16 %v44
  %v243 = vunpack.c.l.b16 %v45
  %v244 = vunpack.c.l.b16 %v46
  %v245 = vunpack.c.l.b16 %v47
  %v246 = vunpack.c.l.b16 %v48
  %v247 = vunpack.c.l.b16 %v49
  %v248 = vunpack.c.l.b16 %v50
  %v249 = vunpack.c.l.b16 %v51
  %v250 = vunpack.c.l.b16 %v52
  %v251 = vunpack.c.l.b16 %v53
  %v252 = vunpack.c.l.b16 %v54
  %v253 = vunpack.c.l.b16 %v55
  %v254 = vunpack.c.l.b16 %v56
  %v255 = vunpack.c.l.b16 %v57
  %v256 = vunpack.c.l.b16 %v58
  %v257 = vunpack.c.l.b16 %v59
  %v258 = vunpack.c.l.b16 %v60
  %v259 = vunpack.c.l.b16 %v61
  %v260 = vunpack.c.l.b16 %v62
  %v261 = vunpack.c.l.b16 %v63
  %v262 = vunpack.c.l.b16 %v64
  %v263 = vunpack.c.l.b16 %v65
  %v264 = vunpack.c.l.b16 %v66
  %v265 = vunpack.c.l.b16 %v67
  %v266 = vunpack.c.l.b16 %v68
  %v267 = vunpack.c.l.b16 %v69
  %v268 = vunpack.c.l.b16 %v70
  %v269 = vunpack.c.l.b16 %v71
  %v270 = vunpack.c.l.b16 %v72
  %v271 = vunpack.c.l.b16 %v73
  %v272 = vunpack.c.l.b16 %v74
  %v273 = vunpack.c.l.b16 %v75
  %v274 = vunpack.c.l.b16 %v76
  %v275 = vunpack.c.l.b16 %v77
  %v276 = vunpack.c.l.b16 %v78
  %v277 = vunpack.c.l.b16 %v79
  %v278 = vunpack.c.l.b16 %v80
  %v279 = vunpack.c.l.b16 %v81
  %v280 = vunpack.c.l.b16 %v82
  %v281 = vunpack.c.l.b16 %v83
  %v282 = vunpack.c.l.b16 %v84
  %v283 = vunpack.c.l.b16 %v85
  %v284 = vunpack.c.l.b16 %v86
  %v285 = vunpack.c.l.b16 %v87
  %v286 = vunpack.c.l.b16 %v88
  %v287 = vunpack.c.l.b16 %v89
  %v288 = vunpack.c.l.b16 %v90
  %v289 = vunpack.c.l.b16 %v91
  %v290 = vunpack.c.l.b16 %v92
  %v291 = vunpack.c.l.b16 %v93
  %v292 = vunpack.c.l.b16 %v94
  %v293 = vunpack.c.l.b16 %v95
  %v294 = vunpack.c.l.b16 %v96
  %v295 = vunpack.c.l.b16 %v97
  %v296 = vunpack.c.l.b16 %v98
  %v297 = vunpack.c.l.b16 %v99
  %v298 = vunpack.c.l.b16 %v100
  %v299 = vunpack.c.l.b16 %v101
  %v300 = vpack.c.b16 %v229, %v228
  %v301 = vpack.c.b16 %v231, %v230
  %v302 = vpack.c.b16 %v233, %v232
  %v303 = vpack.c.b16 %v235, %v234
  %v304 = vpack.c.b16 %v237, %v236
  %v305 = vpack.c.b16 %v239, %v238
  %v306 = vpack.c.b16 %v241, %v240
  %v307 = vpack.c.b16 %v243, %v242
  %v308 = vpack.c.b16 %v245, %v244
  %v309 = vpack.c.b16 %v247, %v246
  %v310 = vpack.c.b16 %v249, %v248
  %v311 = vpack.c.b16 %v251, %v250
  %v312 = vpack.c.b16 %v253, %v252
  %v313 = vpack.c.b16 %v255, %v254
  %v314 = vpack.c.b16 %v257, %v256
  %v315 = vpack.c.b16 %v259, %v258
  %v316 = vpack.c.b16 %v261, %v260
  %v317 = vpack.c.b16 %v263, %v262
  %v318 = vpack.c.b16 %v265, %v264
  %v319 = vpack.c.b16 %v267, %v266
  %v320 = vpack.c.b16 %v269, %v268
  %v321 = vpack.c.b16 %v271, %v270
  %v322 = vpack.c.b16 %v273, %v272
  %v323 = vpack.c.b16 %v275, %v274
  %v324 = vpack.c.b16 %v277, %v276
  %v325 = vpack.c.b16 %v279, %v278
  %v326 = vpack.c.b16 %v281, %v280
  %v327 = vpack.c.b16 %v283, %v282
  %v328 = vpack.c.b16 %v285, %v284
  %v329 = vpack.c.b16 %v287, %v286
  %v330 = vpack.c.b16 %v289, %v288
  %v331 = vpack.c.b16 %v291, %v290
  %v332 = vpack.c.b16 %v293, %v292
  %v333 = vpack.c.b16 %v295, %v294
  %v334 = vpack.c.b16 %v297, %v296
  %v335 = vpack.c.b16 %v299, %v298
  %vm372 = vcmask 523264
  %v374 = vsel %vm372, %v142, 0
  %v377 = vsel %vm372, %v147, 0
  %379 = vmatpush.bf16.msra.mxu0 %v307
  %380 = vmatpush.bf16.msra.mxu0 %v306
  %381 = vmatpush.bf16.msra.mxu0 %v305
  %382 = vmatpush.bf16.msra.mxu0 %v304
  %383 = vmatpush.bf16.msra.mxu0 %v303
  %384 = vmatpush.bf16.msra.mxu0 %v302
  %385 = vmatpush.bf16.msra.mxu0 %v301
  %386 = vmatpush.bf16.msra.mxu0 %v300
  %387 = vmatmul.bf16.gmra.mxu0 %v138
  %v388 = vpop.f32.mrf.mxu0
  %v389 = vadd.f32 %v104, %v388
  %v390 = vpop.f32.mrf.mxu0
  %v391 = vadd.f32 %v104, %v390
  %392 = vmatmul.bf16.gmra.mxu0 %v143
  %v393 = vpop.f32.mrf.mxu0
  %v394 = vadd.f32 %v104, %v393
  %v395 = vpop.f32.mrf.mxu0
  %v396 = vadd.f32 %v104, %v395
  %397 = vdwg.mxu0
  %398 = vmatpush.bf16.msra.mxu0 %v315
  %399 = vmatpush.bf16.msra.mxu0 %v314
  %400 = vmatpush.bf16.msra.mxu0 %v313
  %401 = vmatpush.bf16.msra.mxu0 %v312
  %402 = vmatpush.bf16.msra.mxu0 %v311
  %403 = vmatpush.bf16.msra.mxu0 %v310
  %404 = vmatpush.bf16.msra.mxu0 %v309
  %405 = vmatpush.bf16.msra.mxu0 %v308
  %406 = vmatmul.bf16.gmra.mxu0 %v139
  %v407 = vpop.f32.mrf.mxu0
  %v408 = vadd.f32 %v389, %v407
  %v409 = vpop.f32.mrf.mxu0
  %v410 = vadd.f32 %v391, %v409
  %411 = vmatmul.bf16.gmra.mxu0 %v144
  %v412 = vpop.f32.mrf.mxu0
  %v413 = vadd.f32 %v394, %v412
  %v414 = vpop.f32.mrf.mxu0
  %v415 = vadd.f32 %v396, %v414
  %416 = vdwg.mxu0
  %417 = vmatpush.bf16.msra.mxu0 %v323
  %418 = vmatpush.bf16.msra.mxu0 %v322
  %419 = vmatpush.bf16.msra.mxu0 %v321
  %420 = vmatpush.bf16.msra.mxu0 %v320
  %421 = vmatpush.bf16.msra.mxu0 %v319
  %422 = vmatpush.bf16.msra.mxu0 %v318
  %423 = vmatpush.bf16.msra.mxu0 %v317
  %424 = vmatpush.bf16.msra.mxu0 %v316
  %425 = vmatmul.bf16.gmra.mxu0 %v140
  %v426 = vpop.f32.mrf.mxu0
  %v427 = vadd.f32 %v408, %v426
  %v428 = vpop.f32.mrf.mxu0
  %v429 = vadd.f32 %v410, %v428
  %430 = vmatmul.bf16.gmra.mxu0 %v145
  %v431 = vpop.f32.mrf.mxu0
  %v432 = vadd.f32 %v413, %v431
  %v433 = vpop.f32.mrf.mxu0
  %v434 = vadd.f32 %v415, %v433
  %435 = vdwg.mxu0
  %436 = vmatpush.bf16.msra.mxu0 %v331
  %437 = vmatpush.bf16.msra.mxu0 %v330
  %438 = vmatpush.bf16.msra.mxu0 %v329
  %439 = vmatpush.bf16.msra.mxu0 %v328
  %440 = vmatpush.bf16.msra.mxu0 %v327
  %441 = vmatpush.bf16.msra.mxu0 %v326
  %442 = vmatpush.bf16.msra.mxu0 %v325
  %443 = vmatpush.bf16.msra.mxu0 %v324
  %444 = vmatmul.bf16.gmra.mxu0 %v141
  %v445 = vpop.f32.mrf.mxu0
  %v446 = vadd.f32 %v427, %v445
  %v447 = vpop.f32.mrf.mxu0
  %v448 = vadd.f32 %v429, %v447
  %449 = vmatmul.bf16.gmra.mxu0 %v146
  %v450 = vpop.f32.mrf.mxu0
  %v451 = vadd.f32 %v432, %v450
  %v452 = vpop.f32.mrf.mxu0
  %v453 = vadd.f32 %v434, %v452
  %454 = vdwg.mxu0
  %455 = vmatpush.bf16.msra.mxu0 0
  %456 = vmatpush.bf16.msra.mxu0 0
  %457 = vmatpush.bf16.msra.mxu0 0
  %458 = vmatpush.bf16.msra.mxu0 0
  %459 = vmatpush.bf16.msra.mxu0 %v335
  %460 = vmatpush.bf16.msra.mxu0 %v334
  %461 = vmatpush.bf16.msra.mxu0 %v333
  %462 = vmatpush.bf16.msra.mxu0 %v332
  %463 = vmatmul.bf16.gmra.mxu0 %v374
  %v464 = vpop.f32.mrf.mxu0
  %v465 = vadd.f32 %v446, %v464
  %v466 = vpop.f32.mrf.mxu0
  %v467 = vadd.f32 %v448, %v466
  %468 = vmatmul.bf16.gmra.mxu0 %v377
  %v469 = vpop.f32.mrf.mxu0
  %v470 = vadd.f32 %v451, %v469
  %v471 = vpop.f32.mrf.mxu0
  %v472 = vadd.f32 %v453, %v471
  %473 = vdwg.mxu0
  %v474 = vld [vmem:[%s3] sm:$0xf]
  %v475 = vld [vmem:[%s3 + $0x4] sm:$0xf]
  %v476 = vld [vmem:[%s3 + $0x8] sm:$0xf]
  %v477 = vld [vmem:[%s3 + $0xc] sm:$0xf]
  %v478 = vunpack.c.l.bf16 %v474
  %v479 = vunpack.c.l.bf16 %v475
  %v480 = vunpack.c.l.bf16 %v476
  %v481 = vunpack.c.l.bf16 %v477
  %v482 = vadd.f32 %v465, %v478
  %v483 = vadd.f32 %v467, %v479
  %v484 = vadd.f32 %v470, %v480
  %v485 = vadd.f32 %v472, %v481
  %v486 = vmax.f32 %v482, 0.0
  %v487 = vmax.f32 %v483, 0.0
  %v488 = vmax.f32 %v484, 0.0
  %v489 = vmax.f32 %v485, 0.0
  %v490 = vpack.c.bf16 %v486, %v486
  %v491 = vpack.c.bf16 %v487, %v487
  %v492 = vpack.c.bf16 %v488, %v488
  %v493 = vpack.c.bf16 %v489, %v489
  %vm494 = vcmask 519168
  %495 = vst.msk [vmem:[%s4] sm:$0xf] %vm494, %v490
  %496 = vst.msk [vmem:[%s4 + $0x4] sm:$0xf] %vm494, %v491
  %497 = vst.msk [vmem:[%s4 + $0x8] sm:$0xf] %vm494, %v492
  %498 = vst.msk [vmem:[%s4 + $0xc] sm:$0xf] %vm494, %v493
  // Predicated region
  $region18: #{forward.10} parent=0 // pred_check
    _
  $region19: #{forward.10} parent=0 // pred_check_branch
    %500 = sbr.rel (0) target = $region21
  $region20: #{forward.10} parent=0 // pred_region
    _
  $region21: #{forward.10} parent=0 // pred_fallthru
    _
  // Predicated region
  $region22: #{forward.10} parent=0 // pred_check
    _
  $region23: #{forward.10} parent=0 // pred_check_branch
    %502 = sbr.rel (0) target = $region25
  $region24: #{forward.10} parent=0 // pred_region
    _
  $region25: #{forward.10} parent=0 // pred_fallthru
    _

// kernel: forward.9
$region0: #{forward.9}
  #allocation0 [shape = 'u32[]', space=smem, size = 0x4, offset = 0x4, fixed_abs, tag = 'smem constant byte address 0x4 - core index']
  #allocation1 [shape = 'u32[72,128]{1,0:T(1,128)}', space=vmem, size = 0x9000, scoped, tag = 'internal scratch']
  %s0 = inlined_call_operand.vmem [shape: bf16[32,576], index: 0, kind: input, shape index: {}]
  %s1 = inlined_call_operand.vmem [shape: bf16[576,64], index: 1, kind: input, shape index: {}]
  %s2 = inlined_call_operand.vmem [shape: f32[1,64], index: 2, kind: input, shape index: {}]
  %s3 = inlined_call_operand.vmem [shape: bf16[32,64], index: 3, kind: output, shape index: {}]
  %s4 = sld [smem:[#allocation0]]
  $region22: #{forward.9} parent=0
    _
  %s6 = ssub.s32 1, %s4
  %s7 = scalar_select 0, %s6, %s4
  // Predicated region
  $region2: #{forward.9} parent=0 // pred_check
    _
  $region3: #{forward.9} parent=0 // pred_check_branch
    %9 = sbr.rel (0) target = $region5
  $region4: #{forward.9} parent=0 // pred_region
    _
  $region5: #{forward.9} parent=0 // pred_fallthru
    _
  // Predicated region
  $region6: #{forward.9} parent=0 // pred_check
    _
  $region7: #{forward.9} parent=0 // pred_check_branch
    %11 = sbr.rel (0) target = $region9
  $region8: #{forward.9} parent=0 // pred_region
    _
  $region9: #{forward.9} parent=0 // pred_fallthru
    _
  // Predicated region
  $region10: #{forward.9} parent=0 // pred_check
    _
  $region11: #{forward.9} parent=0 // pred_check_branch
    %13 = sbr.rel (0) target = $region13
  $region12: #{forward.9} parent=0 // pred_region
    _
  $region13: #{forward.9} parent=0 // pred_fallthru
    _
  %v15 = vld [vmem:[%s0] sm:$0xff]
  %v16 = vld [vmem:[%s0 + $0x8] sm:$0xff]
  %v17 = vld [vmem:[%s0 + $0x10] sm:$0xf]
  %v18 = vld [vmem:[%s0 + $0x14] sm:$0xff]
  %v19 = vld [vmem:[%s0 + $0x1c] sm:$0xff]
  %v20 = vld [vmem:[%s0 + $0x24] sm:$0xf]
  %v21 = vld [vmem:[%s0 + $0x28] sm:$0xff]
  %v22 = vld [vmem:[%s0 + $0x30] sm:$0xff]
  %v23 = vld [vmem:[%s0 + $0x38] sm:$0xf]
  %v24 = vld [vmem:[%s0 + $0x3c] sm:$0xff]
  %v25 = vld [vmem:[%s0 + $0x44] sm:$0xff]
  %v26 = vld [vmem:[%s0 + $0x4c] sm:$0xf]
  %v27 = vld [vmem:[%s1] sm:$0xf]
  %v28 = vld [vmem:[%s1 + $0x4] sm:$0xf]
  %v29 = vld [vmem:[%s1 + $0x8] sm:$0xf]
  %v30 = vld [vmem:[%s1 + $0xc] sm:$0xf]
  %v31 = vld [vmem:[%s1 + $0x10] sm:$0xf]
  %v32 = vld [vmem:[%s1 + $0x14] sm:$0xf]
  %v33 = vld [vmem:[%s1 + $0x18] sm:$0xf]
  %v34 = vld [vmem:[%s1 + $0x1c] sm:$0xf]
  %v35 = vld [vmem:[%s1 + $0x20] sm:$0xf]
  %v36 = vld [vmem:[%s1 + $0x24] sm:$0xf]
  %v37 = vld [vmem:[%s1 + $0x28] sm:$0xf]
  %v38 = vld [vmem:[%s1 + $0x2c] sm:$0xf]
  %v39 = vld [vmem:[%s1 + $0x30] sm:$0xf]
  %v40 = vld [vmem:[%s1 + $0x34] sm:$0xf]
  %v41 = vld [vmem:[%s1 + $0x38] sm:$0xf]
  %v42 = vld [vmem:[%s1 + $0x3c] sm:$0xf]
  %v43 = vld [vmem:[%s1 + $0x40] sm:$0xf]
  %v44 = vld [vmem:[%s1 + $0x44] sm:$0xf]
  %v45 = vld [vmem:[%s1 + $0x48] sm:$0xf]
  %v46 = vld [vmem:[%s1 + $0x4c] sm:$0xf]
  %v47 = vld [vmem:[%s1 + $0x50] sm:$0xf]
  %v48 = vld [vmem:[%s1 + $0x54] sm:$0xf]
  %v49 = vld [vmem:[%s1 + $0x58] sm:$0xf]
  %v50 = vld [vmem:[%s1 + $0x5c] sm:$0xf]
  %v51 = vld [vmem:[%s1 + $0x60] sm:$0xf]
  %v52 = vld [vmem:[%s1 + $0x64] sm:$0xf]
  %v53 = vld [vmem:[%s1 + $0x68] sm:$0xf]
  %v54 = vld [vmem:[%s1 + $0x6c] sm:$0xf]
  %v55 = vld [vmem:[%s1 + $0x70] sm:$0xf]
  %v56 = vld [vmem:[%s1 + $0x74] sm:$0xf]
  %v57 = vld [vmem:[%s1 + $0x78] sm:$0xf]
  %v58 = vld [vmem:[%s1 + $0x7c] sm:$0xf]
  %v59 = vld [vmem:[%s1 + $0x80] sm:$0xf]
  %v60 = vld [vmem:[%s1 + $0x84] sm:$0xf]
  %v61 = vld [vmem:[%s1 + $0x88] sm:$0xf]
  %v62 = vld [vmem:[%s1 + $0x8c] sm:$0xf]
  %v63 = vld [vmem:[%s1 + $0x90] sm:$0xf]
  %v64 = vld [vmem:[%s1 + $0x94] sm:$0xf]
  %v65 = vld [vmem:[%s1 + $0x98] sm:$0xf]
  %v66 = vld [vmem:[%s1 + $0x9c] sm:$0xf]
  %v67 = vld [vmem:[%s1 + $0xa0] sm:$0xf]
  %v68 = vld [vmem:[%s1 + $0xa4] sm:$0xf]
  %v69 = vld [vmem:[%s1 + $0xa8] sm:$0xf]
  %v70 = vld [vmem:[%s1 + $0xac] sm:$0xf]
  %v71 = vld [vmem:[%s1 + $0xb0] sm:$0xf]
  %v72 = vld [vmem:[%s1 + $0xb4] sm:$0xf]
  %v73 = vld [vmem:[%s1 + $0xb8] sm:$0xf]
  %v74 = vld [vmem:[%s1 + $0xbc] sm:$0xf]
  %v75 = vld [vmem:[%s1 + $0xc0] sm:$0xf]
  %v76 = vld [vmem:[%s1 + $0xc4] sm:$0xf]
  %v77 = vld [vmem:[%s1 + $0xc8] sm:$0xf]
  %v78 = vld [vmem:[%s1 + $0xcc] sm:$0xf]
  %v79 = vld [vmem:[%s1 + $0xd0] sm:$0xf]
  %v80 = vld [vmem:[%s1 + $0xd4] sm:$0xf]
  %v81 = vld [vmem:[%s1 + $0xd8] sm:$0xf]
  %v82 = vld [vmem:[%s1 + $0xdc] sm:$0xf]
  %v83 = vld [vmem:[%s1 + $0xe0] sm:$0xf]
  %v84 = vld [vmem:[%s1 + $0xe4] sm:$0xf]
  %v85 = vld [vmem:[%s1 + $0xe8] sm:$0xf]
  %v86 = vld [vmem:[%s1 + $0xec] sm:$0xf]
  %v87 = vld [vmem:[%s1 + $0xf0] sm:$0xf]
  %v88 = vld [vmem:[%s1 + $0xf4] sm:$0xf]
  %v89 = vld [vmem:[%s1 + $0xf8] sm:$0xf]
  %v90 = vld [vmem:[%s1 + $0xfc] sm:$0xf]
  %v91 = vld [vmem:[%s1 + $0x100] sm:$0xf]
  %v92 = vld [vmem:[%s1 + $0x104] sm:$0xf]
  %v93 = vld [vmem:[%s1 + $0x108] sm:$0xf]
  %v94 = vld [vmem:[%s1 + $0x10c] sm:$0xf]
  %v95 = vld [vmem:[%s1 + $0x110] sm:$0xf]
  %v96 = vld [vmem:[%s1 + $0x114] sm:$0xf]
  %v97 = vld [vmem:[%s1 + $0x118] sm:$0xf]
  %v98 = vld [vmem:[%s1 + $0x11c] sm:$0xf]
  %v99 = vld [vmem:[%s2] sm:$0x1]
  %v101 = vperm.slane %v99, 0
  %v115 = vunpack.c.l.b16 %v15
  %v116 = vunpack.c.h.b16 %v15
  %v117 = vunpack.c.l.b16 %v16
  %v118 = vunpack.c.h.b16 %v16
  %v119 = vunpack.c.l.b16 %v17
  %v120 = vunpack.c.l.b16 %v18
  %v121 = vunpack.c.h.b16 %v18
  %v122 = vunpack.c.l.b16 %v19
  %v123 = vunpack.c.h.b16 %v19
  %v124 = vunpack.c.l.b16 %v20
  %v125 = vunpack.c.l.b16 %v21
  %v126 = vunpack.c.h.b16 %v21
  %v127 = vunpack.c.l.b16 %v22
  %v128 = vunpack.c.h.b16 %v22
  %v129 = vunpack.c.l.b16 %v23
  %v130 = vunpack.c.l.b16 %v24
  %v131 = vunpack.c.h.b16 %v24
  %v132 = vunpack.c.l.b16 %v25
  %v133 = vunpack.c.h.b16 %v25
  %v134 = vunpack.c.l.b16 %v26
  %v135 = vpack.c.b16 %v120, %v115
  %v136 = vpack.c.b16 %v121, %v116
  %v137 = vpack.c.b16 %v122, %v117
  %v138 = vpack.c.b16 %v123, %v118
  %v139 = vpack.c.b16 %v124, %v119
  %v140 = vpack.c.b16 %v130, %v125
  %v141 = vpack.c.b16 %v131, %v126
  %v142 = vpack.c.b16 %v132, %v127
  %v143 = vpack.c.b16 %v133, %v128
  %v144 = vpack.c.b16 %v134, %v129
  %v225 = vunpack.c.l.b16 %v27
  %v226 = vunpack.c.l.b16 %v28
  %v227 = vunpack.c.l.b16 %v29
  %v228 = vunpack.c.l.b16 %v30
  %v229 = vunpack.c.l.b16 %v31
  %v230 = vunpack.c.l.b16 %v32
  %v231 = vunpack.c.l.b16 %v33
  %v232 = vunpack.c.l.b16 %v34
  %v233 = vunpack.c.l.b16 %v35
  %v234 = vunpack.c.l.b16 %v36
  %v235 = vunpack.c.l.b16 %v37
  %v236 = vunpack.c.l.b16 %v38
  %v237 = vunpack.c.l.b16 %v39
  %v238 = vunpack.c.l.b16 %v40
  %v239 = vunpack.c.l.b16 %v41
  %v240 = vunpack.c.l.b16 %v42
  %v241 = vunpack.c.l.b16 %v43
  %v242 = vunpack.c.l.b16 %v44
  %v243 = vunpack.c.l.b16 %v45
  %v244 = vunpack.c.l.b16 %v46
  %v245 = vunpack.c.l.b16 %v47
  %v246 = vunpack.c.l.b16 %v48
  %v247 = vunpack.c.l.b16 %v49
  %v248 = vunpack.c.l.b16 %v50
  %v249 = vunpack.c.l.b16 %v51
  %v250 = vunpack.c.l.b16 %v52
  %v251 = vunpack.c.l.b16 %v53
  %v252 = vunpack.c.l.b16 %v54
  %v253 = vunpack.c.l.b16 %v55
  %v254 = vunpack.c.l.b16 %v56
  %v255 = vunpack.c.l.b16 %v57
  %v256 = vunpack.c.l.b16 %v58
  %v257 = vunpack.c.l.b16 %v59
  %v258 = vunpack.c.l.b16 %v60
  %v259 = vunpack.c.l.b16 %v61
  %v260 = vunpack.c.l.b16 %v62
  %v261 = vunpack.c.l.b16 %v63
  %v262 = vunpack.c.l.b16 %v64
  %v263 = vunpack.c.l.b16 %v65
  %v264 = vunpack.c.l.b16 %v66
  %v265 = vunpack.c.l.b16 %v67
  %v266 = vunpack.c.l.b16 %v68
  %v267 = vunpack.c.l.b16 %v69
  %v268 = vunpack.c.l.b16 %v70
  %v269 = vunpack.c.l.b16 %v71
  %v270 = vunpack.c.l.b16 %v72
  %v271 = vunpack.c.l.b16 %v73
  %v272 = vunpack.c.l.b16 %v74
  %v273 = vunpack.c.l.b16 %v75
  %v274 = vunpack.c.l.b16 %v76
  %v275 = vunpack.c.l.b16 %v77
  %v276 = vunpack.c.l.b16 %v78
  %v277 = vunpack.c.l.b16 %v79
  %v278 = vunpack.c.l.b16 %v80
  %v279 = vunpack.c.l.b16 %v81
  %v280 = vunpack.c.l.b16 %v82
  %v281 = vunpack.c.l.b16 %v83
  %v282 = vunpack.c.l.b16 %v84
  %v283 = vunpack.c.l.b16 %v85
  %v284 = vunpack.c.l.b16 %v86
  %v285 = vunpack.c.l.b16 %v87
  %v286 = vunpack.c.l.b16 %v88
  %v287 = vunpack.c.l.b16 %v89
  %v288 = vunpack.c.l.b16 %v90
  %v289 = vunpack.c.l.b16 %v91
  %v290 = vunpack.c.l.b16 %v92
  %v291 = vunpack.c.l.b16 %v93
  %v292 = vunpack.c.l.b16 %v94
  %v293 = vunpack.c.l.b16 %v95
  %v294 = vunpack.c.l.b16 %v96
  %v295 = vunpack.c.l.b16 %v97
  %v296 = vunpack.c.l.b16 %v98
  %v297 = vpack.c.b16 %v226, %v225
  %v298 = vpack.c.b16 %v228, %v227
  %v299 = vpack.c.b16 %v230, %v229
  %v300 = vpack.c.b16 %v232, %v231
  %v301 = vpack.c.b16 %v234, %v233
  %v302 = vpack.c.b16 %v236, %v235
  %v303 = vpack.c.b16 %v238, %v237
  %v304 = vpack.c.b16 %v240, %v239
  %v305 = vpack.c.b16 %v242, %v241
  %v306 = vpack.c.b16 %v244, %v243
  %v307 = vpack.c.b16 %v246, %v245
  %v308 = vpack.c.b16 %v248, %v247
  %v309 = vpack.c.b16 %v250, %v249
  %v310 = vpack.c.b16 %v252, %v251
  %v311 = vpack.c.b16 %v254, %v253
  %v312 = vpack.c.b16 %v256, %v255
  %v313 = vpack.c.b16 %v258, %v257
  %v314 = vpack.c.b16 %v260, %v259
  %v315 = vpack.c.b16 %v262, %v261
  %v316 = vpack.c.b16 %v264, %v263
  %v317 = vpack.c.b16 %v266, %v265
  %v318 = vpack.c.b16 %v268, %v267
  %v319 = vpack.c.b16 %v270, %v269
  %v320 = vpack.c.b16 %v272, %v271
  %v321 = vpack.c.b16 %v274, %v273
  %v322 = vpack.c.b16 %v276, %v275
  %v323 = vpack.c.b16 %v278, %v277
  %v324 = vpack.c.b16 %v280, %v279
  %v325 = vpack.c.b16 %v282, %v281
  %v326 = vpack.c.b16 %v284, %v283
  %v327 = vpack.c.b16 %v286, %v285
  %v328 = vpack.c.b16 %v288, %v287
  %v329 = vpack.c.b16 %v290, %v289
  %v330 = vpack.c.b16 %v292, %v291
  %v331 = vpack.c.b16 %v294, %v293
  %v332 = vpack.c.b16 %v296, %v295
  %vm369 = vcmask 523264
  %v371 = vsel %vm369, %v139, 0
  %v374 = vsel %vm369, %v144, 0
  %376 = vmatpush.bf16.msra.mxu0 %v304
  %377 = vmatpush.bf16.msra.mxu0 %v303
  %378 = vmatpush.bf16.msra.mxu0 %v302
  %379 = vmatpush.bf16.msra.mxu0 %v301
  %380 = vmatpush.bf16.msra.mxu0 %v300
  %381 = vmatpush.bf16.msra.mxu0 %v299
  %382 = vmatpush.bf16.msra.mxu0 %v298
  %383 = vmatpush.bf16.msra.mxu0 %v297
  %384 = vmatmul.bf16.gmra.mxu0 %v135
  %v385 = vpop.f32.mrf.mxu0
  %v386 = vadd.f32 %v101, %v385
  %v387 = vpop.f32.mrf.mxu0
  %v388 = vadd.f32 %v101, %v387
  %389 = vmatmul.bf16.gmra.mxu0 %v140
  %v390 = vpop.f32.mrf.mxu0
  %v391 = vadd.f32 %v101, %v390
  %v392 = vpop.f32.mrf.mxu0
  %v393 = vadd.f32 %v101, %v392
  %394 = vdwg.mxu0
  %395 = vmatpush.bf16.msra.mxu0 %v312
  %396 = vmatpush.bf16.msra.mxu0 %v311
  %397 = vmatpush.bf16.msra.mxu0 %v310
  %398 = vmatpush.bf16.msra.mxu0 %v309
  %399 = vmatpush.bf16.msra.mxu0 %v308
  %400 = vmatpush.bf16.msra.mxu0 %v307
  %401 = vmatpush.bf16.msra.mxu0 %v306
  %402 = vmatpush.bf16.msra.mxu0 %v305
  %403 = vmatmul.bf16.gmra.mxu0 %v136
  %v404 = vpop.f32.mrf.mxu0
  %v405 = vadd.f32 %v386, %v404
  %v406 = vpop.f32.mrf.mxu0
  %v407 = vadd.f32 %v388, %v406
  %408 = vmatmul.bf16.gmra.mxu0 %v141
  %v409 = vpop.f32.mrf.mxu0
  %v410 = vadd.f32 %v391, %v409
  %v411 = vpop.f32.mrf.mxu0
  %v412 = vadd.f32 %v393, %v411
  %413 = vdwg.mxu0
  %414 = vmatpush.bf16.msra.mxu0 %v320
  %415 = vmatpush.bf16.msra.mxu0 %v319
  %416 = vmatpush.bf16.msra.mxu0 %v318
  %417 = vmatpush.bf16.msra.mxu0 %v317
  %418 = vmatpush.bf16.msra.mxu0 %v316
  %419 = vmatpush.bf16.msra.mxu0 %v315
  %420 = vmatpush.bf16.msra.mxu0 %v314
  %421 = vmatpush.bf16.msra.mxu0 %v313
  %422 = vmatmul.bf16.gmra.mxu0 %v137
  %v423 = vpop.f32.mrf.mxu0
  %v424 = vadd.f32 %v405, %v423
  %v425 = vpop.f32.mrf.mxu0
  %v426 = vadd.f32 %v407, %v425
  %427 = vmatmul.bf16.gmra.mxu0 %v142
  %v428 = vpop.f32.mrf.mxu0
  %v429 = vadd.f32 %v410, %v428
  %v430 = vpop.f32.mrf.mxu0
  %v431 = vadd.f32 %v412, %v430
  %432 = vdwg.mxu0
  %433 = vmatpush.bf16.msra.mxu0 %v328
  %434 = vmatpush.bf16.msra.mxu0 %v327
  %435 = vmatpush.bf16.msra.mxu0 %v326
  %436 = vmatpush.bf16.msra.mxu0 %v325
  %437 = vmatpush.bf16.msra.mxu0 %v324
  %438 = vmatpush.bf16.msra.mxu0 %v323
  %439 = vmatpush.bf16.msra.mxu0 %v322
  %440 = vmatpush.bf16.msra.mxu0 %v321
  %441 = vmatmul.bf16.gmra.mxu0 %v138
  %v442 = vpop.f32.mrf.mxu0
  %v443 = vadd.f32 %v424, %v442
  %v444 = vpop.f32.mrf.mxu0
  %v445 = vadd.f32 %v426, %v444
  %446 = vmatmul.bf16.gmra.mxu0 %v143
  %v447 = vpop.f32.mrf.mxu0
  %v448 = vadd.f32 %v429, %v447
  %v449 = vpop.f32.mrf.mxu0
  %v450 = vadd.f32 %v431, %v449
  %451 = vdwg.mxu0
  %452 = vmatpush.bf16.msra.mxu0 0
  %453 = vmatpush.bf16.msra.mxu0 0
  %454 = vmatpush.bf16.msra.mxu0 0
  %455 = vmatpush.bf16.msra.mxu0 0
  %456 = vmatpush.bf16.msra.mxu0 %v332
  %457 = vmatpush.bf16.msra.mxu0 %v331
  %458 = vmatpush.bf16.msra.mxu0 %v330
  %459 = vmatpush.bf16.msra.mxu0 %v329
  %460 = vmatmul.bf16.gmra.mxu0 %v371
  %v461 = vpop.f32.mrf.mxu0
  %v462 = vadd.f32 %v443, %v461
  %v463 = vpop.f32.mrf.mxu0
  %v464 = vadd.f32 %v445, %v463
  %465 = vmatmul.bf16.gmra.mxu0 %v374
  %v466 = vpop.f32.mrf.mxu0
  %v467 = vadd.f32 %v448, %v466
  %v468 = vpop.f32.mrf.mxu0
  %v469 = vadd.f32 %v450, %v468
  %470 = vdwg.mxu0
  %v471 = vmax.f32 %v462, 0.0
  %v472 = vmax.f32 %v464, 0.0
  %v473 = vmax.f32 %v467, 0.0
  %v474 = vmax.f32 %v469, 0.0
  %v475 = vpack.c.bf16 %v471, %v471
  %v476 = vpack.c.bf16 %v472, %v472
  %v477 = vpack.c.bf16 %v473, %v473
  %v478 = vpack.c.bf16 %v474, %v474
  %vm479 = vcmask 519168
  %480 = vst.msk [vmem:[%s3] sm:$0xf] %vm479, %v475
  %481 = vst.msk [vmem:[%s3 + $0x4] sm:$0xf] %vm479, %v476
  %482 = vst.msk [vmem:[%s3 + $0x8] sm:$0xf] %vm479, %v477
  %483 = vst.msk [vmem:[%s3 + $0xc] sm:$0xf] %vm479, %v478
  // Predicated region
  $region14: #{forward.9} parent=0 // pred_check
    _
  $region15: #{forward.9} parent=0 // pred_check_branch
    %485 = sbr.rel (0) target = $region17
  $region16: #{forward.9} parent=0 // pred_region
    _
  $region17: #{forward.9} parent=0 // pred_fallthru
    _
  // Predicated region
  $region18: #{forward.9} parent=0 // pred_check
    _
  $region19: #{forward.9} parent=0 // pred_check_branch
    %487 = sbr.rel (0) target = $region21
  $region20: #{forward.9} parent=0 // pred_region
    _
  $region21: #{forward.9} parent=0 // pred_fallthru
    _

// kernel: forward.12
$region0: #{forward.12}
  #allocation0 [shape = 'u32[]', space=smem, size = 0x4, offset = 0x4, fixed_abs, tag = 'smem constant byte address 0x4 - core index']
  #allocation1 [shape = 'u32[72,128]{1,0:T(1,128)}', space=vmem, size = 0x9000, scoped, tag = 'internal scratch']
  %s0 = inlined_call_operand.vmem [shape: bf16[32,1152], index: 0, kind: input, shape index: {}]
  %s1 = inlined_call_operand.vmem [shape: bf16[1152,128], index: 1, kind: input, shape index: {}]
  %s2 = inlined_call_operand.vmem [shape: f32[1,128], index: 2, kind: input, shape index: {}]
  %s3 = inlined_call_operand.vmem [shape: bf16[32,128], index: 3, kind: input, shape index: {}]
  %s4 = inlined_call_operand.vmem [shape: bf16[32,128], index: 4, kind: output, shape index: {}]
  %s5 = sld [smem:[#allocation0]]
  $region26: #{forward.12} parent=0
    _
  %s7 = ssub.s32 1, %s5
  %s8 = scalar_select 0, %s7, %s5
  // Predicated region
  $region2: #{forward.12} parent=0 // pred_check
    _
  $region3: #{forward.12} parent=0 // pred_check_branch
    %10 = sbr.rel (0) target = $region5
  $region4: #{forward.12} parent=0 // pred_region
    _
  $region5: #{forward.12} parent=0 // pred_fallthru
    _
  // Predicated region
  $region6: #{forward.12} parent=0 // pred_check
    _
  $region7: #{forward.12} parent=0 // pred_check_branch
    %12 = sbr.rel (0) target = $region9
  $region8: #{forward.12} parent=0 // pred_region
    _
  $region9: #{forward.12} parent=0 // pred_fallthru
    _
  // Predicated region
  $region10: #{forward.12} parent=0 // pred_check
    _
  $region11: #{forward.12} parent=0 // pred_check_branch
    %14 = sbr.rel (0) target = $region13
  $region12: #{forward.12} parent=0 // pred_region
    _
  $region13: #{forward.12} parent=0 // pred_fallthru
    _
  // Predicated region
  $region14: #{forward.12} parent=0 // pred_check
    _
  $region15: #{forward.12} parent=0 // pred_check_branch
    %16 = sbr.rel (0) target = $region17
  $region16: #{forward.12} parent=0 // pred_region
    _
  $region17: #{forward.12} parent=0 // pred_fallthru
    _
  %v17 = vld [vmem:[%s0] sm:$0xff]
  %v18 = vld [vmem:[%s0 + $0x8] sm:$0xff]
  %v19 = vld [vmem:[%s0 + $0x10] sm:$0xff]
  %v20 = vld [vmem:[%s0 + $0x18] sm:$0xff]
  %v21 = vld [vmem:[%s0 + $0x20] sm:$0xf]
  %v22 = vld [vmem:[%s0 + $0x24] sm:$0xff]
  %v23 = vld [vmem:[%s0 + $0x2c] sm:$0xff]
  %v24 = vld [vmem:[%s0 + $0x34] sm:$0xff]
  %v25 = vld [vmem:[%s0 + $0x3c] sm:$0xff]
  %v26 = vld [vmem:[%s0 + $0x44] sm:$0xf]
  %v27 = vld [vmem:[%s0 + $0x48] sm:$0xff]
  %v28 = vld [vmem:[%s0 + $0x50] sm:$0xff]
  %v29 = vld [vmem:[%s0 + $0x58] sm:$0xff]
  %v30 = vld [vmem:[%s0 + $0x60] sm:$0xff]
  %v31 = vld [vmem:[%s0 + $0x68] sm:$0xf]
  %v32 = vld [vmem:[%s0 + $0x6c] sm:$0xff]
  %v33 = vld [vmem:[%s0 + $0x74] sm:$0xff]
  %v34 = vld [vmem:[%s0 + $0x7c] sm:$0xff]
  %v35 = vld [vmem:[%s0 + $0x84] sm:$0xff]
  %v36 = vld [vmem:[%s0 + $0x8c] sm:$0xf]
  %v37 = vld [vmem:[%s1] sm:$0xf]
  %v38 = vld [vmem:[%s1 + $0x4] sm:$0xf]
  %v39 = vld [vmem:[%s1 + $0x8] sm:$0xf]
  %v40 = vld [vmem:[%s1 + $0xc] sm:$0xf]
  %v41 = vld [vmem:[%s1 + $0x10] sm:$0xf]
  %v42 = vld [vmem:[%s1 + $0x14] sm:$0xf]
  %v43 = vld [vmem:[%s1 + $0x18] sm:$0xf]
  %v44 = vld [vmem:[%s1 + $0x1c] sm:$0xf]
  %v45 = vld [vmem:[%s1 + $0x20] sm:$0xf]
  %v46 = vld [vmem:[%s1 + $0x24] sm:$0xf]
  %v47 = vld [vmem:[%s1 + $0x28] sm:$0xf]
  %v48 = vld [vmem:[%s1 + $0x2c] sm:$0xf]
  %v49 = vld [vmem:[%s1 + $0x30] sm:$0xf]
  %v50 = vld [vmem:[%s1 + $0x34] sm:$0xf]
  %v51 = vld [vmem:[%s1 + $0x38] sm:$0xf]
  %v52 = vld [vmem:[%s1 + $0x3c] sm:$0xf]
  %v53 = vld [vmem:[%s1 + $0x40] sm:$0xf]
  %v54 = vld [vmem:[%s1 + $0x44] sm:$0xf]
  %v55 = vld [vmem:[%s1 + $0x48] sm:$0xf]
  %v56 = vld [vmem:[%s1 + $0x4c] sm:$0xf]
  %v57 = vld [vmem:[%s1 + $0x50] sm:$0xf]
  %v58 = vld [vmem:[%s1 + $0x54] sm:$0xf]
  %v59 = vld [vmem:[%s1 + $0x58] sm:$0xf]
  %v60 = vld [vmem:[%s1 + $0x5c] sm:$0xf]
  %v61 = vld [vmem:[%s1 + $0x60] sm:$0xf]
  %v62 = vld [vmem:[%s1 + $0x64] sm:$0xf]
  %v63 = vld [vmem:[%s1 + $0x68] sm:$0xf]
  %v64 = vld [vmem:[%s1 + $0x6c] sm:$0xf]
  %v65 = vld [vmem:[%s1 + $0x70] sm:$0xf]
  %v66 = vld [vmem:[%s1 + $0x74] sm:$0xf]
  %v67 = vld [vmem:[%s1 + $0x78] sm:$0xf]
  %v68 = vld [vmem:[%s1 + $0x7c] sm:$0xf]
  %v69 = vld [vmem:[%s1 + $0x80] sm:$0xf]
  %v70 = vld [vmem:[%s1 + $0x84] sm:$0xf]
  %v71 = vld [vmem:[%s1 + $0x88] sm:$0xf]
  %v72 = vld [vmem:[%s1 + $0x8c] sm:$0xf]
  %v73 = vld [vmem:[%s1 + $0x90] sm:$0xf]
  %v74 = vld [vmem:[%s1 + $0x94] sm:$0xf]
  %v75 = vld [vmem:[%s1 + $0x98] sm:$0xf]
  %v76 = vld [vmem:[%s1 + $0x9c] sm:$0xf]
  %v77 = vld [vmem:[%s1 + $0xa0] sm:$0xf]
  %v78 = vld [vmem:[%s1 + $0xa4] sm:$0xf]
  %v79 = vld [vmem:[%s1 + $0xa8] sm:$0xf]
  %v80 = vld [vmem:[%s1 + $0xac] sm:$0xf]
  %v81 = vld [vmem:[%s1 + $0xb0] sm:$0xf]
  %v82 = vld [vmem:[%s1 + $0xb4] sm:$0xf]
  %v83 = vld [vmem:[%s1 + $0xb8] sm:$0xf]
  %v84 = vld [vmem:[%s1 + $0xbc] sm:$0xf]
  %v85 = vld [vmem:[%s1 + $0xc0] sm:$0xf]
  %v86 = vld [vmem:[%s1 + $0xc4] sm:$0xf]
  %v87 = vld [vmem:[%s1 + $0xc8] sm:$0xf]
  %v88 = vld [vmem:[%s1 + $0xcc] sm:$0xf]
  %v89 = vld [vmem:[%s1 + $0xd0] sm:$0xf]
  %v90 = vld [vmem:[%s1 + $0xd4] sm:$0xf]
  %v91 = vld [vmem:[%s1 + $0xd8] sm:$0xf]
  %v92 = vld [vmem:[%s1 + $0xdc] sm:$0xf]
  %v93 = vld [vmem:[%s1 + $0xe0] sm:$0xf]
  %v94 = vld [vmem:[%s1 + $0xe4] sm:$0xf]
  %v95 = vld [vmem:[%s1 + $0xe8] sm:$0xf]
  %v96 = vld [vmem:[%s1 + $0xec] sm:$0xf]
  %v97 = vld [vmem:[%s1 + $0xf0] sm:$0xf]
  %v98 = vld [vmem:[%s1 + $0xf4] sm:$0xf]
  %v99 = vld [vmem:[%s1 + $0xf8] sm:$0xf]
  %v100 = vld [vmem:[%s1 + $0xfc] sm:$0xf]
  %v101 = vld [vmem:[%s1 + $0x100] sm:$0xf]
  %v102 = vld [vmem:[%s1 + $0x104] sm:$0xf]
  %v103 = vld [vmem:[%s1 + $0x108] sm:$0xf]
  %v104 = vld [vmem:[%s1 + $0x10c] sm:$0xf]
  %v105 = vld [vmem:[%s1 + $0x110] sm:$0xf]
  %v106 = vld [vmem:[%s1 + $0x114] sm:$0xf]
  %v107 = vld [vmem:[%s1 + $0x118] sm:$0xf]
  %v108 = vld [vmem:[%s1 + $0x11c] sm:$0xf]
  %v109 = vld [vmem:[%s1 + $0x120] sm:$0xf]
  %v110 = vld [vmem:[%s1 + $0x124] sm:$0xf]
  %v111 = vld [vmem:[%s1 + $0x128] sm:$0xf]
  %v112 = vld [vmem:[%s1 + $0x12c] sm:$0xf]
  %v113 = vld [vmem:[%s1 + $0x130] sm:$0xf]
  %v114 = vld [vmem:[%s1 + $0x134] sm:$0xf]
  %v115 = vld [vmem:[%s1 + $0x138] sm:$0xf]
  %v116 = vld [vmem:[%s1 + $0x13c] sm:$0xf]
  %v117 = vld [vmem:[%s1 + $0x140] sm:$0xf]
  %v118 = vld [vmem:[%s1 + $0x144] sm:$0xf]
  %v119 = vld [vmem:[%s1 + $0x148] sm:$0xf]
  %v120 = vld [vmem:[%s1 + $0x14c] sm:$0xf]
  %v121 = vld [vmem:[%s1 + $0x150] sm:$0xf]
  %v122 = vld [vmem:[%s1 + $0x154] sm:$0xf]
  %v123 = vld [vmem:[%s1 + $0x158] sm:$0xf]
  %v124 = vld [vmem:[%s1 + $0x15c] sm:$0xf]
  %v125 = vld [vmem:[%s1 + $0x160] sm:$0xf]
  %v126 = vld [vmem:[%s1 + $0x164] sm:$0xf]
  %v127 = vld [vmem:[%s1 + $0x168] sm:$0xf]
  %v128 = vld [vmem:[%s1 + $0x16c] sm:$0xf]
  %v129 = vld [vmem:[%s1 + $0x170] sm:$0xf]
  %v130 = vld [vmem:[%s1 + $0x174] sm:$0xf]
  %v131 = vld [vmem:[%s1 + $0x178] sm:$0xf]
  %v132 = vld [vmem:[%s1 + $0x17c] sm:$0xf]
  %v133 = vld [vmem:[%s1 + $0x180] sm:$0xf]
  %v134 = vld [vmem:[%s1 + $0x184] sm:$0xf]
  %v135 = vld [vmem:[%s1 + $0x188] sm:$0xf]
  %v136 = vld [vmem:[%s1 + $0x18c] sm:$0xf]
  %v137 = vld [vmem:[%s1 + $0x190] sm:$0xf]
  %v138 = vld [vmem:[%s1 + $0x194] sm:$0xf]
  %v139 = vld [vmem:[%s1 + $0x198] sm:$0xf]
  %v140 = vld [vmem:[%s1 + $0x19c] sm:$0xf]
  %v141 = vld [vmem:[%s1 + $0x1a0] sm:$0xf]
  %v142 = vld [vmem:[%s1 + $0x1a4] sm:$0xf]
  %v143 = vld [vmem:[%s1 + $0x1a8] sm:$0xf]
  %v144 = vld [vmem:[%s1 + $0x1ac] sm:$0xf]
  %v145 = vld [vmem:[%s1 + $0x1b0] sm:$0xf]
  %v146 = vld [vmem:[%s1 + $0x1b4] sm:$0xf]
  %v147 = vld [vmem:[%s1 + $0x1b8] sm:$0xf]
  %v148 = vld [vmem:[%s1 + $0x1bc] sm:$0xf]
  %v149 = vld [vmem:[%s1 + $0x1c0] sm:$0xf]
  %v150 = vld [vmem:[%s1 + $0x1c4] sm:$0xf]
  %v151 = vld [vmem:[%s1 + $0x1c8] sm:$0xf]
  %v152 = vld [vmem:[%s1 + $0x1cc] sm:$0xf]
  %v153 = vld [vmem:[%s1 + $0x1d0] sm:$0xf]
  %v154 = vld [vmem:[%s1 + $0x1d4] sm:$0xf]
  %v155 = vld [vmem:[%s1 + $0x1d8] sm:$0xf]
  %v156 = vld [vmem:[%s1 + $0x1dc] sm:$0xf]
  %v157 = vld [vmem:[%s1 + $0x1e0] sm:$0xf]
  %v158 = vld [vmem:[%s1 + $0x1e4] sm:$0xf]
  %v159 = vld [vmem:[%s1 + $0x1e8] sm:$0xf]
  %v160 = vld [vmem:[%s1 + $0x1ec] sm:$0xf]
  %v161 = vld [vmem:[%s1 + $0x1f0] sm:$0xf]
  %v162 = vld [vmem:[%s1 + $0x1f4] sm:$0xf]
  %v163 = vld [vmem:[%s1 + $0x1f8] sm:$0xf]
  %v164 = vld [vmem:[%s1 + $0x1fc] sm:$0xf]
  %v165 = vld [vmem:[%s1 + $0x200] sm:$0xf]
  %v166 = vld [vmem:[%s1 + $0x204] sm:$0xf]
  %v167 = vld [vmem:[%s1 + $0x208] sm:$0xf]
  %v168 = vld [vmem:[%s1 + $0x20c] sm:$0xf]
  %v169 = vld [vmem:[%s1 + $0x210] sm:$0xf]
  %v170 = vld [vmem:[%s1 + $0x214] sm:$0xf]
  %v171 = vld [vmem:[%s1 + $0x218] sm:$0xf]
  %v172 = vld [vmem:[%s1 + $0x21c] sm:$0xf]
  %v173 = vld [vmem:[%s1 + $0x220] sm:$0xf]
  %v174 = vld [vmem:[%s1 + $0x224] sm:$0xf]
  %v175 = vld [vmem:[%s1 + $0x228] sm:$0xf]
  %v176 = vld [vmem:[%s1 + $0x22c] sm:$0xf]
  %v177 = vld [vmem:[%s1 + $0x230] sm:$0xf]
  %v178 = vld [vmem:[%s1 + $0x234] sm:$0xf]
  %v179 = vld [vmem:[%s1 + $0x238] sm:$0xf]
  %v180 = vld [vmem:[%s1 + $0x23c] sm:$0xf]
  %v181 = vld [vmem:[%s2] sm:$0x1]
  %v183 = vperm.slane %v181, 0
  %v205 = vunpack.c.l.b16 %v17
  %v206 = vunpack.c.h.b16 %v17
  %v207 = vunpack.c.l.b16 %v18
  %v208 = vunpack.c.h.b16 %v18
  %v209 = vunpack.c.l.b16 %v19
  %v210 = vunpack.c.h.b16 %v19
  %v211 = vunpack.c.l.b16 %v20
  %v212 = vunpack.c.h.b16 %v20
  %v213 = vunpack.c.l.b16 %v21
  %v214 = vunpack.c.l.b16 %v22
  %v215 = vunpack.c.h.b16 %v22
  %v216 = vunpack.c.l.b16 %v23
  %v217 = vunpack.c.h.b16 %v23
  %v218 = vunpack.c.l.b16 %v24
  %v219 = vunpack.c.h.b16 %v24
  %v220 = vunpack.c.l.b16 %v25
  %v221 = vunpack.c.h.b16 %v25
  %v222 = vunpack.c.l.b16 %v26
  %v223 = vunpack.c.l.b16 %v27
  %v224 = vunpack.c.h.b16 %v27
  %v225 = vunpack.c.l.b16 %v28
  %v226 = vunpack.c.h.b16 %v28
  %v227 = vunpack.c.l.b16 %v29
  %v228 = vunpack.c.h.b16 %v29
  %v229 = vunpack.c.l.b16 %v30
  %v230 = vunpack.c.h.b16 %v30
  %v231 = vunpack.c.l.b16 %v31
  %v232 = vunpack.c.l.b16 %v32
  %v233 = vunpack.c.h.b16 %v32
  %v234 = vunpack.c.l.b16 %v33
  %v235 = vunpack.c.h.b16 %v33
  %v236 = vunpack.c.l.b16 %v34
  %v237 = vunpack.c.h.b16 %v34
  %v238 = vunpack.c.l.b16 %v35
  %v239 = vunpack.c.h.b16 %v35
  %v240 = vunpack.c.l.b16 %v36
  %v241 = vpack.c.b16 %v214, %v205
  %v242 = vpack.c.b16 %v215, %v206
  %v243 = vpack.c.b16 %v216, %v207
  %v244 = vpack.c.b16 %v217, %v208
  %v245 = vpack.c.b16 %v218, %v209
  %v246 = vpack.c.b16 %v219, %v210
  %v247 = vpack.c.b16 %v220, %v211
  %v248 = vpack.c.b16 %v221, %v212
  %v249 = vpack.c.b16 %v222, %v213
  %v250 = vpack.c.b16 %v232, %v223
  %v251 = vpack.c.b16 %v233, %v224
  %v252 = vpack.c.b16 %v234, %v225
  %v253 = vpack.c.b16 %v235, %v226
  %v254 = vpack.c.b16 %v236, %v227
  %v255 = vpack.c.b16 %v237, %v228
  %v256 = vpack.c.b16 %v238, %v229
  %v257 = vpack.c.b16 %v239, %v230
  %v258 = vpack.c.b16 %v240, %v231
  %v421 = vunpack.c.l.b16 %v37
  %v422 = vunpack.c.l.b16 %v38
  %v423 = vunpack.c.l.b16 %v39
  %v424 = vunpack.c.l.b16 %v40
  %v425 = vunpack.c.l.b16 %v41
  %v426 = vunpack.c.l.b16 %v42
  %v427 = vunpack.c.l.b16 %v43
  %v428 = vunpack.c.l.b16 %v44
  %v429 = vunpack.c.l.b16 %v45
  %v430 = vunpack.c.l.b16 %v46
  %v431 = vunpack.c.l.b16 %v47
  %v432 = vunpack.c.l.b16 %v48
  %v433 = vunpack.c.l.b16 %v49
  %v434 = vunpack.c.l.b16 %v50
  %v435 = vunpack.c.l.b16 %v51
  %v436 = vunpack.c.l.b16 %v52
  %v437 = vunpack.c.l.b16 %v53
  %v438 = vunpack.c.l.b16 %v54
  %v439 = vunpack.c.l.b16 %v55
  %v440 = vunpack.c.l.b16 %v56
  %v441 = vunpack.c.l.b16 %v57
  %v442 = vunpack.c.l.b16 %v58
  %v443 = vunpack.c.l.b16 %v59
  %v444 = vunpack.c.l.b16 %v60
  %v445 = vunpack.c.l.b16 %v61
  %v446 = vunpack.c.l.b16 %v62
  %v447 = vunpack.c.l.b16 %v63
  %v448 = vunpack.c.l.b16 %v64
  %v449 = vunpack.c.l.b16 %v65
  %v450 = vunpack.c.l.b16 %v66
  %v451 = vunpack.c.l.b16 %v67
  %v452 = vunpack.c.l.b16 %v68
  %v453 = vunpack.c.l.b16 %v69
  %v454 = vunpack.c.l.b16 %v70
  %v455 = vunpack.c.l.b16 %v71
  %v456 = vunpack.c.l.b16 %v72
  %v457 = vunpack.c.l.b16 %v73
  %v458 = vunpack.c.l.b16 %v74
  %v459 = vunpack.c.l.b16 %v75
  %v460 = vunpack.c.l.b16 %v76
  %v461 = vunpack.c.l.b16 %v77
  %v462 = vunpack.c.l.b16 %v78
  %v463 = vunpack.c.l.b16 %v79
  %v464 = vunpack.c.l.b16 %v80
  %v465 = vunpack.c.l.b16 %v81
  %v466 = vunpack.c.l.b16 %v82
  %v467 = vunpack.c.l.b16 %v83
  %v468 = vunpack.c.l.b16 %v84
  %v469 = vunpack.c.l.b16 %v85
  %v470 = vunpack.c.l.b16 %v86
  %v471 = vunpack.c.l.b16 %v87
  %v472 = vunpack.c.l.b16 %v88
  %v473 = vunpack.c.l.b16 %v89
  %v474 = vunpack.c.l.b16 %v90
  %v475 = vunpack.c.l.b16 %v91
  %v476 = vunpack.c.l.b16 %v92
  %v477 = vunpack.c.l.b16 %v93
  %v478 = vunpack.c.l.b16 %v94
  %v479 = vunpack.c.l.b16 %v95
  %v480 = vunpack.c.l.b16 %v96
  %v481 = vunpack.c.l.b16 %v97
  %v482 = vunpack.c.l.b16 %v98
  %v483 = vunpack.c.l.b16 %v99
  %v484 = vunpack.c.l.b16 %v100
  %v485 = vunpack.c.l.b16 %v101
  %v486 = vunpack.c.l.b16 %v102
  %v487 = vunpack.c.l.b16 %v103
  %v488 = vunpack.c.l.b16 %v104
  %v489 = vunpack.c.l.b16 %v105
  %v490 = vunpack.c.l.b16 %v106
  %v491 = vunpack.c.l.b16 %v107
  %v492 = vunpack.c.l.b16 %v108
  %v493 = vunpack.c.l.b16 %v109
  %v494 = vunpack.c.l.b16 %v110
  %v495 = vunpack.c.l.b16 %v111
  %v496 = vunpack.c.l.b16 %v112
  %v497 = vunpack.c.l.b16 %v113
  %v498 = vunpack.c.l.b16 %v114
  %v499 = vunpack.c.l.b16 %v115
  %v500 = vunpack.c.l.b16 %v116
  %v501 = vunpack.c.l.b16 %v117
  %v502 = vunpack.c.l.b16 %v118
  %v503 = vunpack.c.l.b16 %v119
  %v504 = vunpack.c.l.b16 %v120
  %v505 = vunpack.c.l.b16 %v121
  %v506 = vunpack.c.l.b16 %v122
  %v507 = vunpack.c.l.b16 %v123
  %v508 = vunpack.c.l.b16 %v124
  %v509 = vunpack.c.l.b16 %v125
  %v510 = vunpack.c.l.b16 %v126
  %v511 = vunpack.c.l.b16 %v127
  %v512 = vunpack.c.l.b16 %v128
  %v513 = vunpack.c.l.b16 %v129
  %v514 = vunpack.c.l.b16 %v130
  %v515 = vunpack.c.l.b16 %v131
  %v516 = vunpack.c.l.b16 %v132
  %v517 = vunpack.c.l.b16 %v133
  %v518 = vunpack.c.l.b16 %v134
  %v519 = vunpack.c.l.b16 %v135
  %v520 = vunpack.c.l.b16 %v136
  %v521 = vunpack.c.l.b16 %v137
  %v522 = vunpack.c.l.b16 %v138
  %v523 = vunpack.c.l.b16 %v139
  %v524 = vunpack.c.l.b16 %v140
  %v525 = vunpack.c.l.b16 %v141
  %v526 = vunpack.c.l.b16 %v142
  %v527 = vunpack.c.l.b16 %v143
  %v528 = vunpack.c.l.b16 %v144
  %v529 = vunpack.c.l.b16 %v145
  %v530 = vunpack.c.l.b16 %v146
  %v531 = vunpack.c.l.b16 %v147
  %v532 = vunpack.c.l.b16 %v148
  %v533 = vunpack.c.l.b16 %v149
  %v534 = vunpack.c.l.b16 %v150
  %v535 = vunpack.c.l.b16 %v151
  %v536 = vunpack.c.l.b16 %v152
  %v537 = vunpack.c.l.b16 %v153
  %v538 = vunpack.c.l.b16 %v154
  %v539 = vunpack.c.l.b16 %v155
  %v540 = vunpack.c.l.b16 %v156
  %v541 = vunpack.c.l.b16 %v157
  %v542 = vunpack.c.l.b16 %v158
  %v543 = vunpack.c.l.b16 %v159
  %v544 = vunpack.c.l.b16 %v160
  %v545 = vunpack.c.l.b16 %v161
  %v546 = vunpack.c.l.b16 %v162
  %v547 = vunpack.c.l.b16 %v163
  %v548 = vunpack.c.l.b16 %v164
  %v549 = vunpack.c.l.b16 %v165
  %v550 = vunpack.c.l.b16 %v166
  %v551 = vunpack.c.l.b16 %v167
  %v552 = vunpack.c.l.b16 %v168
  %v553 = vunpack.c.l.b16 %v169
  %v554 = vunpack.c.l.b16 %v170
  %v555 = vunpack.c.l.b16 %v171
  %v556 = vunpack.c.l.b16 %v172
  %v557 = vunpack.c.l.b16 %v173
  %v558 = vunpack.c.l.b16 %v174
  %v559 = vunpack.c.l.b16 %v175
  %v560 = vunpack.c.l.b16 %v176
  %v561 = vunpack.c.l.b16 %v177
  %v562 = vunpack.c.l.b16 %v178
  %v563 = vunpack.c.l.b16 %v179
  %v564 = vunpack.c.l.b16 %v180
  %v565 = vpack.c.b16 %v422, %v421
  %v566 = vpack.c.b16 %v424, %v423
  %v567 = vpack.c.b16 %v426, %v425
  %v568 = vpack.c.b16 %v428, %v427
  %v569 = vpack.c.b16 %v430, %v429
  %v570 = vpack.c.b16 %v432, %v431
  %v571 = vpack.c.b16 %v434, %v433
  %v572 = vpack.c.b16 %v436, %v435
  %v573 = vpack.c.b16 %v438, %v437
  %v574 = vpack.c.b16 %v440, %v439
  %v575 = vpack.c.b16 %v442, %v441
  %v576 = vpack.c.b16 %v444, %v443
  %v577 = vpack.c.b16 %v446, %v445
  %v578 = vpack.c.b16 %v448, %v447
  %v579 = vpack.c.b16 %v450, %v449
  %v580 = vpack.c.b16 %v452, %v451
  %v581 = vpack.c.b16 %v454, %v453
  %v582 = vpack.c.b16 %v456, %v455
  %v583 = vpack.c.b16 %v458, %v457
  %v584 = vpack.c.b16 %v460, %v459
  %v585 = vpack.c.b16 %v462, %v461
  %v586 = vpack.c.b16 %v464, %v463
  %v587 = vpack.c.b16 %v466, %v465
  %v588 = vpack.c.b16 %v468, %v467
  %v589 = vpack.c.b16 %v470, %v469
  %v590 = vpack.c.b16 %v472, %v471
  %v591 = vpack.c.b16 %v474, %v473
  %v592 = vpack.c.b16 %v476, %v475
  %v593 = vpack.c.b16 %v478, %v477
  %v594 = vpack.c.b16 %v480, %v479
  %v595 = vpack.c.b16 %v482, %v481
  %v596 = vpack.c.b16 %v484, %v483
  %v597 = vpack.c.b16 %v486, %v485
  %v598 = vpack.c.b16 %v488, %v487
  %v599 = vpack.c.b16 %v490, %v489
  %v600 = vpack.c.b16 %v492, %v491
  %v601 = vpack.c.b16 %v494, %v493
  %v602 = vpack.c.b16 %v496, %v495
  %v603 = vpack.c.b16 %v498, %v497
  %v604 = vpack.c.b16 %v500, %v499
  %v605 = vpack.c.b16 %v502, %v501
  %v606 = vpack.c.b16 %v504, %v503
  %v607 = vpack.c.b16 %v506, %v505
  %v608 = vpack.c.b16 %v508, %v507
  %v609 = vpack.c.b16 %v510, %v509
  %v610 = vpack.c.b16 %v512, %v511
  %v611 = vpack.c.b16 %v514, %v513
  %v612 = vpack.c.b16 %v516, %v515
  %v613 = vpack.c.b16 %v518, %v517
  %v614 = vpack.c.b16 %v520, %v519
  %v615 = vpack.c.b16 %v522, %v521
  %v616 = vpack.c.b16 %v524, %v523
  %v617 = vpack.c.b16 %v526, %v525
  %v618 = vpack.c.b16 %v528, %v527
  %v619 = vpack.c.b16 %v530, %v529
  %v620 = vpack.c.b16 %v532, %v531
  %v621 = vpack.c.b16 %v534, %v533
  %v622 = vpack.c.b16 %v536, %v535
  %v623 = vpack.c.b16 %v538, %v537
  %v624 = vpack.c.b16 %v540, %v539
  %v625 = vpack.c.b16 %v542, %v541
  %v626 = vpack.c.b16 %v544, %v543
  %v627 = vpack.c.b16 %v546, %v545
  %v628 = vpack.c.b16 %v548, %v547
  %v629 = vpack.c.b16 %v550, %v549
  %v630 = vpack.c.b16 %v552, %v551
  %v631 = vpack.c.b16 %v554, %v553
  %v632 = vpack.c.b16 %v556, %v555
  %v633 = vpack.c.b16 %v558, %v557
  %v634 = vpack.c.b16 %v560, %v559
  %v635 = vpack.c.b16 %v562, %v561
  %v636 = vpack.c.b16 %v564, %v563
  %709 = vmatpush.bf16.msra.mxu0 %v572
  %710 = vmatpush.bf16.msra.mxu0 %v571
  %711 = vmatpush.bf16.msra.mxu0 %v570
  %712 = vmatpush.bf16.msra.mxu0 %v569
  %713 = vmatpush.bf16.msra.mxu0 %v568
  %714 = vmatpush.bf16.msra.mxu0 %v567
  %715 = vmatpush.bf16.msra.mxu0 %v566
  %716 = vmatpush.bf16.msra.mxu0 %v565
  %717 = vmatmul.bf16.gmra.mxu0 %v241
  %v718 = vpop.f32.mrf.mxu0
  %v719 = vadd.f32 %v183, %v718
  %v720 = vpop.f32.mrf.mxu0
  %v721 = vadd.f32 %v183, %v720
  %722 = vmatmul.bf16.gmra.mxu0 %v250
  %v723 = vpop.f32.mrf.mxu0
  %v724 = vadd.f32 %v183, %v723
  %v725 = vpop.f32.mrf.mxu0
  %v726 = vadd.f32 %v183, %v725
  %727 = vdwg.mxu0
  %728 = vmatpush.bf16.msra.mxu0 %v580
  %729 = vmatpush.bf16.msra.mxu0 %v579
  %730 = vmatpush.bf16.msra.mxu0 %v578
  %731 = vmatpush.bf16.msra.mxu0 %v577
  %732 = vmatpush.bf16.msra.mxu0 %v576
  %733 = vmatpush.bf16.msra.mxu0 %v575
  %734 = vmatpush.bf16.msra.mxu0 %v574
  %735 = vmatpush.bf16.msra.mxu0 %v573
  %736 = vmatmul.bf16.gmra.mxu0 %v242
  %v737 = vpop.f32.mrf.mxu0
  %v738 = vadd.f32 %v719, %v737
  %v739 = vpop.f32.mrf.mxu0
  %v740 = vadd.f32 %v721, %v739
  %741 = vmatmul.bf16.gmra.mxu0 %v251
  %v742 = vpop.f32.mrf.mxu0
  %v743 = vadd.f32 %v724, %v742
  %v744 = vpop.f32.mrf.mxu0
  %v745 = vadd.f32 %v726, %v744
  %746 = vdwg.mxu0
  %747 = vmatpush.bf16.msra.mxu0 %v588
  %748 = vmatpush.bf16.msra.mxu0 %v587
  %749 = vmatpush.bf16.msra.mxu0 %v586
  %750 = vmatpush.bf16.msra.mxu0 %v585
  %751 = vmatpush.bf16.msra.mxu0 %v584
  %752 = vmatpush.bf16.msra.mxu0 %v583
  %753 = vmatpush.bf16.msra.mxu0 %v582
  %754 = vmatpush.bf16.msra.mxu0 %v581
  %755 = vmatmul.bf16.gmra.mxu0 %v243
  %v756 = vpop.f32.mrf.mxu0
  %v757 = vadd.f32 %v738, %v756
  %v758 = vpop.f32.mrf.mxu0
  %v759 = vadd.f32 %v740, %v758
  %760 = vmatmul.bf16.gmra.mxu0 %v252
  %v761 = vpop.f32.mrf.mxu0
  %v762 = vadd.f32 %v743, %v761
  %v763 = vpop.f32.mrf.mxu0
  %v764 = vadd.f32 %v745, %v763
  %765 = vdwg.mxu0
  %766 = vmatpush.bf16.msra.mxu0 %v596
  %767 = vmatpush.bf16.msra.mxu0 %v595
  %768 = vmatpush.bf16.msra.mxu0 %v594
  %769 = vmatpush.bf16.msra.mxu0 %v593
  %770 = vmatpush.bf16.msra.mxu0 %v592
  %771 = vmatpush.bf16.msra.mxu0 %v591
  %772 = vmatpush.bf16.msra.mxu0 %v590
  %773 = vmatpush.bf16.msra.mxu0 %v589
  %774 = vmatmul.bf16.gmra.mxu0 %v244
  %v775 = vpop.f32.mrf.mxu0
  %v776 = vadd.f32 %v757, %v775
  %v777 = vpop.f32.mrf.mxu0
  %v778 = vadd.f32 %v759, %v777
  %779 = vmatmul.bf16.gmra.mxu0 %v253
  %v780 = vpop.f32.mrf.mxu0
  %v781 = vadd.f32 %v762, %v780
  %v782 = vpop.f32.mrf.mxu0
  %v783 = vadd.f32 %v764, %v782
  %784 = vdwg.mxu0
  %785 = vmatpush.bf16.msra.mxu0 %v604
  %786 = vmatpush.bf16.msra.mxu0 %v603
  %787 = vmatpush.bf16.msra.mxu0 %v602
  %788 = vmatpush.bf16.msra.mxu0 %v601
  %789 = vmatpush.bf16.msra.mxu0 %v600
  %790 = vmatpush.bf16.msra.mxu0 %v599
  %791 = vmatpush.bf16.msra.mxu0 %v598
  %792 = vmatpush.bf16.msra.mxu0 %v597
  %793 = vmatmul.bf16.gmra.mxu0 %v245
  %v794 = vpop.f32.mrf.mxu0
  %v795 = vadd.f32 %v776, %v794
  %v796 = vpop.f32.mrf.mxu0
  %v797 = vadd.f32 %v778, %v796
  %798 = vmatmul.bf16.gmra.mxu0 %v254
  %v799 = vpop.f32.mrf.mxu0
  %v800 = vadd.f32 %v781, %v799
  %v801 = vpop.f32.mrf.mxu0
  %v802 = vadd.f32 %v783, %v801
  %803 = vdwg.mxu0
  %804 = vmatpush.bf16.msra.mxu0 %v612
  %805 = vmatpush.bf16.msra.mxu0 %v611
  %806 = vmatpush.bf16.msra.mxu0 %v610
  %807 = vmatpush.bf16.msra.mxu0 %v609
  %808 = vmatpush.bf16.msra.mxu0 %v608
  %809 = vmatpush.bf16.msra.mxu0 %v607
  %810 = vmatpush.bf16.msra.mxu0 %v606
  %811 = vmatpush.bf16.msra.mxu0 %v605
  %812 = vmatmul.bf16.gmra.mxu0 %v246
  %v813 = vpop.f32.mrf.mxu0
  %v814 = vadd.f32 %v795, %v813
  %v815 = vpop.f32.mrf.mxu0
  %v816 = vadd.f32 %v797, %v815
  %817 = vmatmul.bf16.gmra.mxu0 %v255
  %v818 = vpop.f32.mrf.mxu0
  %v819 = vadd.f32 %v800, %v818
  %v820 = vpop.f32.mrf.mxu0
  %v821 = vadd.f32 %v802, %v820
  %822 = vdwg.mxu0
  %823 = vmatpush.bf16.msra.mxu0 %v620
  %824 = vmatpush.bf16.msra.mxu0 %v619
  %825 = vmatpush.bf16.msra.mxu0 %v618
  %826 = vmatpush.bf16.msra.mxu0 %v617
  %827 = vmatpush.bf16.msra.mxu0 %v616
  %828 = vmatpush.bf16.msra.mxu0 %v615
  %829 = vmatpush.bf16.msra.mxu0 %v614
  %830 = vmatpush.bf16.msra.mxu0 %v613
  %831 = vmatmul.bf16.gmra.mxu0 %v247
  %v832 = vpop.f32.mrf.mxu0
  %v833 = vadd.f32 %v814, %v832
  %v834 = vpop.f32.mrf.mxu0
  %v835 = vadd.f32 %v816, %v834
  %836 = vmatmul.bf16.gmra.mxu0 %v256
  %v837 = vpop.f32.mrf.mxu0
  %v838 = vadd.f32 %v819, %v837
  %v839 = vpop.f32.mrf.mxu0
  %v840 = vadd.f32 %v821, %v839
  %841 = vdwg.mxu0
  %842 = vmatpush.bf16.msra.mxu0 %v628
  %843 = vmatpush.bf16.msra.mxu0 %v627
  %844 = vmatpush.bf16.msra.mxu0 %v626
  %845 = vmatpush.bf16.msra.mxu0 %v625
  %846 = vmatpush.bf16.msra.mxu0 %v624
  %847 = vmatpush.bf16.msra.mxu0 %v623
  %848 = vmatpush.bf16.msra.mxu0 %v622
  %849 = vmatpush.bf16.msra.mxu0 %v621
  %850 = vmatmul.bf16.gmra.mxu0 %v248
  %v851 = vpop.f32.mrf.mxu0
  %v852 = vadd.f32 %v833, %v851
  %v853 = vpop.f32.mrf.mxu0
  %v854 = vadd.f32 %v835, %v853
  %855 = vmatmul.bf16.gmra.mxu0 %v257
  %v856 = vpop.f32.mrf.mxu0
  %v857 = vadd.f32 %v838, %v856
  %v858 = vpop.f32.mrf.mxu0
  %v859 = vadd.f32 %v840, %v858
  %860 = vdwg.mxu0
  %861 = vmatpush.bf16.msra.mxu0 %v636
  %862 = vmatpush.bf16.msra.mxu0 %v635
  %863 = vmatpush.bf16.msra.mxu0 %v634
  %864 = vmatpush.bf16.msra.mxu0 %v633
  %865 = vmatpush.bf16.msra.mxu0 %v632
  %866 = vmatpush.bf16.msra.mxu0 %v631
  %867 = vmatpush.bf16.msra.mxu0 %v630
  %868 = vmatpush.bf16.msra.mxu0 %v629
  %869 = vmatmul.bf16.gmra.mxu0 %v249
  %v870 = vpop.f32.mrf.mxu0
  %v871 = vadd.f32 %v852, %v870
  %v872 = vpop.f32.mrf.mxu0
  %v873 = vadd.f32 %v854, %v872
  %874 = vmatmul.bf16.gmra.mxu0 %v258
  %v875 = vpop.f32.mrf.mxu0
  %v876 = vadd.f32 %v857, %v875
  %v877 = vpop.f32.mrf.mxu0
  %v878 = vadd.f32 %v859, %v877
  %879 = vdwg.mxu0
  %v880 = vld [vmem:[%s3] sm:$0xf]
  %v881 = vld [vmem:[%s3 + $0x4] sm:$0xf]
  %v882 = vld [vmem:[%s3 + $0x8] sm:$0xf]
  %v883 = vld [vmem:[%s3 + $0xc] sm:$0xf]
  %v884 = vunpack.c.l.bf16 %v880
  %v885 = vunpack.c.l.bf16 %v881
  %v886 = vunpack.c.l.bf16 %v882
  %v887 = vunpack.c.l.bf16 %v883
  %v888 = vadd.f32 %v871, %v884
  %v889 = vadd.f32 %v873, %v885
  %v890 = vadd.f32 %v876, %v886
  %v891 = vadd.f32 %v878, %v887
  %v892 = vmax.f32 %v888, 0.0
  %v893 = vmax.f32 %v889, 0.0
  %v894 = vmax.f32 %v890, 0.0
  %v895 = vmax.f32 %v891, 0.0
  %v896 = vpack.c.bf16 %v892, %v892
  %v897 = vpack.c.bf16 %v893, %v893
  %v898 = vpack.c.bf16 %v894, %v894
  %v899 = vpack.c.bf16 %v895, %v895
  %900 = vst [vmem:[%s4] sm:$0xf] %v896
  %901 = vst [vmem:[%s4 + $0x4] sm:$0xf] %v897
  %902 = vst [vmem:[%s4 + $0x8] sm:$0xf] %v898
  %903 = vst [vmem:[%s4 + $0xc] sm:$0xf] %v899
  // Predicated region
  $region18: #{forward.12} parent=0 // pred_check
    _
  $region19: #{forward.12} parent=0 // pred_check_branch
    %905 = sbr.rel (0) target = $region21
  $region20: #{forward.12} parent=0 // pred_region
    _
  $region21: #{forward.12} parent=0 // pred_fallthru
    _
  // Predicated region
  $region22: #{forward.12} parent=0 // pred_check
    _
  $region23: #{forward.12} parent=0 // pred_check_branch
    %907 = sbr.rel (0) target = $region25
  $region24: #{forward.12} parent=0 // pred_region
    _
  $region25: #{forward.12} parent=0 // pred_fallthru
    _

// kernel: forward.13
$region0: #{forward.13}
  #allocation0 [shape = 'u32[]', space=smem, size = 0x4, offset = 0x4, fixed_abs, tag = 'smem constant byte address 0x4 - core index']
  #allocation1 [shape = 'u32[72,128]{1,0:T(1,128)}', space=vmem, size = 0x9000, scoped, tag = 'internal scratch']
  %s0 = inlined_call_operand.vmem [shape: bf16[2,512], index: 0, kind: input, shape index: {}]
  %s1 = inlined_call_operand.vmem [shape: bf16[512,128], index: 1, kind: input, shape index: {}]
  %s2 = inlined_call_operand.vmem [shape: f32[1,128], index: 2, kind: input, shape index: {}]
  %s3 = inlined_call_operand.vmem [shape: bf16[128,64], index: 3, kind: input, shape index: {}]
  %s4 = inlined_call_operand.vmem [shape: f32[1,64], index: 4, kind: input, shape index: {}]
  %s5 = inlined_call_operand.vmem [shape: bf16[64,10], index: 5, kind: input, shape index: {}]
  %s6 = inlined_call_operand.vmem [shape: f32[1,10], index: 6, kind: input, shape index: {}]
  %s7 = inlined_call_operand.hbm [shape: f32[2,10], index: 7, kind: output, shape index: {}]
  %s8 = sld [smem:[#allocation0]]
  $region38: #{forward.13} parent=0
    _
  %s10 = ssub.s32 1, %s8
  %s11 = scalar_select 0, %s10, %s8
  $region1: #{forward.13} parent=0
    #allocation2 [shape = 'u8[1024]{0}', space=vmem, size = 0x400, scoped, tag = 'output window, operand 0, single buffered']
    #allocation3 [shape = 's32[1]{0}', space=sflag, size = 0x4, scoped, tag = 'scoped memory for forward.13']
    %12 = vsyncpa [#allocation3], 0
    // Predicated region
    $region2: #{forward.13} parent=1 // pred_check
      _
    $region3: #{forward.13} parent=1 // pred_check_branch
      %14 = sbr.rel (0) target = $region5
    $region4: #{forward.13} parent=1 // pred_region
      _
    $region5: #{forward.13} parent=1 // pred_fallthru
      _
    // Predicated region
    $region6: #{forward.13} parent=1 // pred_check
      _
    $region7: #{forward.13} parent=1 // pred_check_branch
      %16 = sbr.rel (0) target = $region9
    $region8: #{forward.13} parent=1 // pred_region
      _
    $region9: #{forward.13} parent=1 // pred_fallthru
      _
    // Predicated region
    $region10: #{forward.13} parent=1 // pred_check
      _
    $region11: #{forward.13} parent=1 // pred_check_branch
      %18 = sbr.rel (0) target = $region13
    $region12: #{forward.13} parent=1 // pred_region
      _
    $region13: #{forward.13} parent=1 // pred_fallthru
      _
    // Predicated region
    $region14: #{forward.13} parent=1 // pred_check
      _
    $region15: #{forward.13} parent=1 // pred_check_branch
      %20 = sbr.rel (0) target = $region17
    $region16: #{forward.13} parent=1 // pred_region
      _
    $region17: #{forward.13} parent=1 // pred_fallthru
      _
    // Predicated region
    $region18: #{forward.13} parent=1 // pred_check
      _
    $region19: #{forward.13} parent=1 // pred_check_branch
      %22 = sbr.rel (0) target = $region21
    $region20: #{forward.13} parent=1 // pred_region
      _
    $region21: #{forward.13} parent=1 // pred_fallthru
      _
    // Predicated region
    $region22: #{forward.13} parent=1 // pred_check
      _
    $region23: #{forward.13} parent=1 // pred_check_branch
      %24 = sbr.rel (0) target = $region25
    $region24: #{forward.13} parent=1 // pred_region
      _
    $region25: #{forward.13} parent=1 // pred_fallthru
      _
    // Predicated region
    $region26: #{forward.13} parent=1 // pred_check
      _
    $region27: #{forward.13} parent=1 // pred_check_branch
      %26 = sbr.rel (0) target = $region29
    $region28: #{forward.13} parent=1 // pred_region
      _
    $region29: #{forward.13} parent=1 // pred_fallthru
      _
    %v28 = vld [vmem:[%s0] sm:$0xf]
    %v29 = vld [vmem:[%s1] sm:$0xf]
    %v30 = vld [vmem:[%s1 + $0x4] sm:$0xf]
    %v31 = vld [vmem:[%s1 + $0x8] sm:$0xf]
    %v32 = vld [vmem:[%s1 + $0xc] sm:$0xf]
    %v33 = vld [vmem:[%s1 + $0x10] sm:$0xf]
    %v34 = vld [vmem:[%s1 + $0x14] sm:$0xf]
    %v35 = vld [vmem:[%s1 + $0x18] sm:$0xf]
    %v36 = vld [vmem:[%s1 + $0x1c] sm:$0xf]
    %v37 = vld [vmem:[%s1 + $0x20] sm:$0xf]
    %v38 = vld [vmem:[%s1 + $0x24] sm:$0xf]
    %v39 = vld [vmem:[%s1 + $0x28] sm:$0xf]
    %v40 = vld [vmem:[%s1 + $0x2c] sm:$0xf]
    %v41 = vld [vmem:[%s1 + $0x30] sm:$0xf]
    %v42 = vld [vmem:[%s1 + $0x34] sm:$0xf]
    %v43 = vld [vmem:[%s1 + $0x38] sm:$0xf]
    %v44 = vld [vmem:[%s1 + $0x3c] sm:$0xf]
    %v45 = vld [vmem:[%s1 + $0x40] sm:$0xf]
    %v46 = vld [vmem:[%s1 + $0x44] sm:$0xf]
    %v47 = vld [vmem:[%s1 + $0x48] sm:$0xf]
    %v48 = vld [vmem:[%s1 + $0x4c] sm:$0xf]
    %v49 = vld [vmem:[%s1 + $0x50] sm:$0xf]
    %v50 = vld [vmem:[%s1 + $0x54] sm:$0xf]
    %v51 = vld [vmem:[%s1 + $0x58] sm:$0xf]
    %v52 = vld [vmem:[%s1 + $0x5c] sm:$0xf]
    %v53 = vld [vmem:[%s1 + $0x60] sm:$0xf]
    %v54 = vld [vmem:[%s1 + $0x64] sm:$0xf]
    %v55 = vld [vmem:[%s1 + $0x68] sm:$0xf]
    %v56 = vld [vmem:[%s1 + $0x6c] sm:$0xf]
    %v57 = vld [vmem:[%s1 + $0x70] sm:$0xf]
    %v58 = vld [vmem:[%s1 + $0x74] sm:$0xf]
    %v59 = vld [vmem:[%s1 + $0x78] sm:$0xf]
    %v60 = vld [vmem:[%s1 + $0x7c] sm:$0xf]
    %v61 = vld [vmem:[%s1 + $0x80] sm:$0xf]
    %v62 = vld [vmem:[%s1 + $0x84] sm:$0xf]
    %v63 = vld [vmem:[%s1 + $0x88] sm:$0xf]
    %v64 = vld [vmem:[%s1 + $0x8c] sm:$0xf]
    %v65 = vld [vmem:[%s1 + $0x90] sm:$0xf]
    %v66 = vld [vmem:[%s1 + $0x94] sm:$0xf]
    %v67 = vld [vmem:[%s1 + $0x98] sm:$0xf]
    %v68 = vld [vmem:[%s1 + $0x9c] sm:$0xf]
    %v69 = vld [vmem:[%s1 + $0xa0] sm:$0xf]
    %v70 = vld [vmem:[%s1 + $0xa4] sm:$0xf]
    %v71 = vld [vmem:[%s1 + $0xa8] sm:$0xf]
    %v72 = vld [vmem:[%s1 + $0xac] sm:$0xf]
    %v73 = vld [vmem:[%s1 + $0xb0] sm:$0xf]
    %v74 = vld [vmem:[%s1 + $0xb4] sm:$0xf]
    %v75 = vld [vmem:[%s1 + $0xb8] sm:$0xf]
    %v76 = vld [vmem:[%s1 + $0xbc] sm:$0xf]
    %v77 = vld [vmem:[%s1 + $0xc0] sm:$0xf]
    %v78 = vld [vmem:[%s1 + $0xc4] sm:$0xf]
    %v79 = vld [vmem:[%s1 + $0xc8] sm:$0xf]
    %v80 = vld [vmem:[%s1 + $0xcc] sm:$0xf]
    %v81 = vld [vmem:[%s1 + $0xd0] sm:$0xf]
    %v82 = vld [vmem:[%s1 + $0xd4] sm:$0xf]
    %v83 = vld [vmem:[%s1 + $0xd8] sm:$0xf]
    %v84 = vld [vmem:[%s1 + $0xdc] sm:$0xf]
    %v85 = vld [vmem:[%s1 + $0xe0] sm:$0xf]
    %v86 = vld [vmem:[%s1 + $0xe4] sm:$0xf]
    %v87 = vld [vmem:[%s1 + $0xe8] sm:$0xf]
    %v88 = vld [vmem:[%s1 + $0xec] sm:$0xf]
    %v89 = vld [vmem:[%s1 + $0xf0] sm:$0xf]
    %v90 = vld [vmem:[%s1 + $0xf4] sm:$0xf]
    %v91 = vld [vmem:[%s1 + $0xf8] sm:$0xf]
    %v92 = vld [vmem:[%s1 + $0xfc] sm:$0xf]
    %v93 = vld [vmem:[%s2] sm:$0x1]
    %v95 = vperm.slane %v93, 0
    %98 = vst [vmem:[#allocation1] ss:$9 sm:$0xff] %v28
    %v99 = vld [vmem:[#allocation1] sm:$0xff]
    %v100 = vld [vmem:[#allocation1 + $0x9] sm:$0xff]
    %v101 = vld [vmem:[#allocation1 + $0x12] sm:$0xff]
    %v102 = vld [vmem:[#allocation1 + $0x1b] sm:$0xff]
    %v171 = vunpack.c.l.b16 %v29
    %v172 = vunpack.c.l.b16 %v30
    %v173 = vunpack.c.l.b16 %v31
    %v174 = vunpack.c.l.b16 %v32
    %v175 = vunpack.c.l.b16 %v33
    %v176 = vunpack.c.l.b16 %v34
    %v177 = vunpack.c.l.b16 %v35
    %v178 = vunpack.c.l.b16 %v36
    %v179 = vunpack.c.l.b16 %v37
    %v180 = vunpack.c.l.b16 %v38
    %v181 = vunpack.c.l.b16 %v39
    %v182 = vunpack.c.l.b16 %v40
    %v183 = vunpack.c.l.b16 %v41
    %v184 = vunpack.c.l.b16 %v42
    %v185 = vunpack.c.l.b16 %v43
    %v186 = vunpack.c.l.b16 %v44
    %v187 = vunpack.c.l.b16 %v45
    %v188 = vunpack.c.l.b16 %v46
    %v189 = vunpack.c.l.b16 %v47
    %v190 = vunpack.c.l.b16 %v48
    %v191 = vunpack.c.l.b16 %v49
    %v192 = vunpack.c.l.b16 %v50
    %v193 = vunpack.c.l.b16 %v51
    %v194 = vunpack.c.l.b16 %v52
    %v195 = vunpack.c.l.b16 %v53
    %v196 = vunpack.c.l.b16 %v54
    %v197 = vunpack.c.l.b16 %v55
    %v198 = vunpack.c.l.b16 %v56
    %v199 = vunpack.c.l.b16 %v57
    %v200 = vunpack.c.l.b16 %v58
    %v201 = vunpack.c.l.b16 %v59
    %v202 = vunpack.c.l.b16 %v60
    %v203 = vunpack.c.l.b16 %v61
    %v204 = vunpack.c.l.b16 %v62
    %v205 = vunpack.c.l.b16 %v63
    %v206 = vunpack.c.l.b16 %v64
    %v207 = vunpack.c.l.b16 %v65
    %v208 = vunpack.c.l.b16 %v66
    %v209 = vunpack.c.l.b16 %v67
    %v210 = vunpack.c.l.b16 %v68
    %v211 = vunpack.c.l.b16 %v69
    %v212 = vunpack.c.l.b16 %v70
    %v213 = vunpack.c.l.b16 %v71
    %v214 = vunpack.c.l.b16 %v72
    %v215 = vunpack.c.l.b16 %v73
    %v216 = vunpack.c.l.b16 %v74
    %v217 = vunpack.c.l.b16 %v75
    %v218 = vunpack.c.l.b16 %v76
    %v219 = vunpack.c.l.b16 %v77
    %v220 = vunpack.c.l.b16 %v78
    %v221 = vunpack.c.l.b16 %v79
    %v222 = vunpack.c.l.b16 %v80
    %v223 = vunpack.c.l.b16 %v81
    %v224 = vunpack.c.l.b16 %v82
    %v225 = vunpack.c.l.b16 %v83
    %v226 = vunpack.c.l.b16 %v84
    %v227 = vunpack.c.l.b16 %v85
    %v228 = vunpack.c.l.b16 %v86
    %v229 = vunpack.c.l.b16 %v87
    %v230 = vunpack.c.l.b16 %v88
    %v231 = vunpack.c.l.b16 %v89
    %v232 = vunpack.c.l.b16 %v90
    %v233 = vunpack.c.l.b16 %v91
    %v234 = vunpack.c.l.b16 %v92
    %v235 = vpack.c.b16 %v172, %v171
    %v236 = vpack.c.b16 %v174, %v173
    %v237 = vpack.c.b16 %v176, %v175
    %v238 = vpack.c.b16 %v178, %v177
    %v239 = vpack.c.b16 %v180, %v179
    %v240 = vpack.c.b16 %v182, %v181
    %v241 = vpack.c.b16 %v184, %v183
    %v242 = vpack.c.b16 %v186, %v185
    %v243 = vpack.c.b16 %v188, %v187
    %v244 = vpack.c.b16 %v190, %v189
    %v245 = vpack.c.b16 %v192, %v191
    %v246 = vpack.c.b16 %v194, %v193
    %v247 = vpack.c.b16 %v196, %v195
    %v248 = vpack.c.b16 %v198, %v197
    %v249 = vpack.c.b16 %v200, %v199
    %v250 = vpack.c.b16 %v202, %v201
    %v251 = vpack.c.b16 %v204, %v203
    %v252 = vpack.c.b16 %v206, %v205
    %v253 = vpack.c.b16 %v208, %v207
    %v254 = vpack.c.b16 %v210, %v209
    %v255 = vpack.c.b16 %v212, %v211
    %v256 = vpack.c.b16 %v214, %v213
    %v257 = vpack.c.b16 %v216, %v215
    %v258 = vpack.c.b16 %v218, %v217
    %v259 = vpack.c.b16 %v220, %v219
    %v260 = vpack.c.b16 %v222, %v221
    %v261 = vpack.c.b16 %v224, %v223
    %v262 = vpack.c.b16 %v226, %v225
    %v263 = vpack.c.b16 %v228, %v227
    %v264 = vpack.c.b16 %v230, %v229
    %v265 = vpack.c.b16 %v232, %v231
    %v266 = vpack.c.b16 %v234, %v233
    %299 = vmatpush.bf16.msra.mxu0 %v242
    %300 = vmatpush.bf16.msra.mxu0 %v241
    %301 = vmatpush.bf16.msra.mxu0 %v240
    %302 = vmatpush.bf16.msra.mxu0 %v239
    %303 = vmatpush.bf16.msra.mxu0 %v238
    %304 = vmatpush.bf16.msra.mxu0 %v237
    %305 = vmatpush.bf16.msra.mxu0 %v236
    %306 = vmatpush.bf16.msra.mxu0 %v235
    %307 = vmatmul.bf16.gmra.mxu0 %v99
    %v308 = vpop.f32.mrf.mxu0
    %v309 = vadd.f32 %v95, %v308
    %v310 = vpop.f32.mrf.mxu0
    %311 = vdwg.mxu0
    %312 = vmatpush.bf16.msra.mxu0 %v250
    %313 = vmatpush.bf16.msra.mxu0 %v249
    %314 = vmatpush.bf16.msra.mxu0 %v248
    %315 = vmatpush.bf16.msra.mxu0 %v247
    %316 = vmatpush.bf16.msra.mxu0 %v246
    %317 = vmatpush.bf16.msra.mxu0 %v245
    %318 = vmatpush.bf16.msra.mxu0 %v244
    %319 = vmatpush.bf16.msra.mxu0 %v243
    %320 = vmatmul.bf16.gmra.mxu0 %v100
    %v321 = vpop.f32.mrf.mxu0
    %v322 = vadd.f32 %v309, %v321
    %v323 = vpop.f32.mrf.mxu0
    %324 = vdwg.mxu0
    %325 = vmatpush.bf16.msra.mxu0 %v258
    %326 = vmatpush.bf16.msra.mxu0 %v257
    %327 = vmatpush.bf16.msra.mxu0 %v256
    %328 = vmatpush.bf16.msra.mxu0 %v255
    %329 = vmatpush.bf16.msra.mxu0 %v254
    %330 = vmatpush.bf16.msra.mxu0 %v253
    %331 = vmatpush.bf16.msra.mxu0 %v252
    %332 = vmatpush.bf16.msra.mxu0 %v251
    %333 = vmatmul.bf16.gmra.mxu0 %v101
    %v334 = vpop.f32.mrf.mxu0
    %v335 = vadd.f32 %v322, %v334
    %v336 = vpop.f32.mrf.mxu0
    %337 = vdwg.mxu0
    %338 = vmatpush.bf16.msra.mxu0 %v266
    %339 = vmatpush.bf16.msra.mxu0 %v265
    %340 = vmatpush.bf16.msra.mxu0 %v264
    %341 = vmatpush.bf16.msra.mxu0 %v263
    %342 = vmatpush.bf16.msra.mxu0 %v262
    %343 = vmatpush.bf16.msra.mxu0 %v261
    %344 = vmatpush.bf16.msra.mxu0 %v260
    %345 = vmatpush.bf16.msra.mxu0 %v259
    %346 = vmatmul.bf16.gmra.mxu0 %v102
    %v347 = vpop.f32.mrf.mxu0
    %v348 = vadd.f32 %v335, %v347
    %v349 = vpop.f32.mrf.mxu0
    %350 = vdwg.mxu0
    %v351 = vmax.f32 %v348, 0.0
    %v352 = vpack.c.bf16 %v351, %v351
    %v353 = vld [vmem:[%s3] sm:$0xf]
    %v354 = vld [vmem:[%s3 + $0x4] sm:$0xf]
    %v355 = vld [vmem:[%s3 + $0x8] sm:$0xf]
    %v356 = vld [vmem:[%s3 + $0xc] sm:$0xf]
    %v357 = vld [vmem:[%s3 + $0x10] sm:$0xf]
    %v358 = vld [vmem:[%s3 + $0x14] sm:$0xf]
    %v359 = vld [vmem:[%s3 + $0x18] sm:$0xf]
    %v360 = vld [vmem:[%s3 + $0x1c] sm:$0xf]
    %v361 = vld [vmem:[%s3 + $0x20] sm:$0xf]
    %v362 = vld [vmem:[%s3 + $0x24] sm:$0xf]
    %v363 = vld [vmem:[%s3 + $0x28] sm:$0xf]
    %v364 = vld [vmem:[%s3 + $0x2c] sm:$0xf]
    %v365 = vld [vmem:[%s3 + $0x30] sm:$0xf]
    %v366 = vld [vmem:[%s3 + $0x34] sm:$0xf]
    %v367 = vld [vmem:[%s3 + $0x38] sm:$0xf]
    %v368 = vld [vmem:[%s3 + $0x3c] sm:$0xf]
    %v369 = vld [vmem:[%s4] sm:$0x1]
    %v371 = vperm.slane %v369, 0
    %v389 = vunpack.c.l.b16 %v353
    %v390 = vunpack.c.l.b16 %v354
    %v391 = vunpack.c.l.b16 %v355
    %v392 = vunpack.c.l.b16 %v356
    %v393 = vunpack.c.l.b16 %v357
    %v394 = vunpack.c.l.b16 %v358
    %v395 = vunpack.c.l.b16 %v359
    %v396 = vunpack.c.l.b16 %v360
    %v397 = vunpack.c.l.b16 %v361
    %v398 = vunpack.c.l.b16 %v362
    %v399 = vunpack.c.l.b16 %v363
    %v400 = vunpack.c.l.b16 %v364
    %v401 = vunpack.c.l.b16 %v365
    %v402 = vunpack.c.l.b16 %v366
    %v403 = vunpack.c.l.b16 %v367
    %v404 = vunpack.c.l.b16 %v368
    %v405 = vpack.c.b16 %v390, %v389
    %v406 = vpack.c.b16 %v392, %v391
    %v407 = vpack.c.b16 %v394, %v393
    %v408 = vpack.c.b16 %v396, %v395
    %v409 = vpack.c.b16 %v398, %v397
    %v410 = vpack.c.b16 %v400, %v399
    %v411 = vpack.c.b16 %v402, %v401
    %v412 = vpack.c.b16 %v404, %v403
    %421 = vmatpush.bf16.msra.mxu0 %v412
    %422 = vmatpush.bf16.msra.mxu0 %v411
    %423 = vmatpush.bf16.msra.mxu0 %v410
    %424 = vmatpush.bf16.msra.mxu0 %v409
    %425 = vmatpush.bf16.msra.mxu0 %v408
    %426 = vmatpush.bf16.msra.mxu0 %v407
    %427 = vmatpush.bf16.msra.mxu0 %v406
    %428 = vmatpush.bf16.msra.mxu0 %v405
    %429 = vmatmul.bf16.gmra.mxu0 %v352
    %v430 = vpop.f32.mrf.mxu0
    %v431 = vadd.f32 %v371, %v430
    %v432 = vpop.f32.mrf.mxu0
    %433 = vdwg.mxu0
    %v434 = vmax.f32 %v431, 0.0
    %v435 = vpack.c.bf16 %v434, %v434
    %v436 = vld [vmem:[%s5] sm:$0xf]
    %v437 = vld [vmem:[%s5 + $0x4] sm:$0xf]
    %v438 = vld [vmem:[%s5 + $0x8] sm:$0xf]
    %v439 = vld [vmem:[%s5 + $0xc] sm:$0xf]
    %v440 = vld [vmem:[%s5 + $0x10] sm:$0xf]
    %v441 = vld [vmem:[%s5 + $0x14] sm:$0xf]
    %v442 = vld [vmem:[%s5 + $0x18] sm:$0xf]
    %v443 = vld [vmem:[%s5 + $0x1c] sm:$0xf]
    %v444 = vld [vmem:[%s6] sm:$0x1]
    %v446 = vperm.slane %v444, 0
    %v456 = vunpack.c.l.b16 %v436
    %v457 = vunpack.c.l.b16 %v437
    %v458 = vunpack.c.l.b16 %v438
    %v459 = vunpack.c.l.b16 %v439
    %v460 = vunpack.c.l.b16 %v440
    %v461 = vunpack.c.l.b16 %v441
    %v462 = vunpack.c.l.b16 %v442
    %v463 = vunpack.c.l.b16 %v443
    %v464 = vpack.c.b16 %v457, %v456
    %v465 = vpack.c.b16 %v459, %v458
    %v466 = vpack.c.b16 %v461, %v460
    %v467 = vpack.c.b16 %v463, %v462
    %vm472 = vcmask 523264
    %v474 = vsel %vm472, %v435, 0
    %476 = vmatpush.bf16.msra.mxu0 0
    %477 = vmatpush.bf16.msra.mxu0 0
    %478 = vmatpush.bf16.msra.mxu0 0
    %479 = vmatpush.bf16.msra.mxu0 0
    %480 = vmatpush.bf16.msra.mxu0 %v467
    %481 = vmatpush.bf16.msra.mxu0 %v466
    %482 = vmatpush.bf16.msra.mxu0 %v465
    %483 = vmatpush.bf16.msra.mxu0 %v464
    %484 = vmatmul.bf16.gmra.mxu0 %v474
    %v485 = vpop.f32.mrf.mxu0
    %v486 = vadd.f32 %v446, %v485
    %v487 = vpop.f32.mrf.mxu0
    %488 = vdwg.mxu0
    %vm489 = vcmask 74752
    %v490 = vsel %vm489, %v486, -inf
    %491 = vmax.xlane.f32.xlu0 %v490
    %v492 = vpop.xlane.xlu0 %491
    %v493 = vsub.f32 %v486, %v492
    %v494 = vmul.f32 %v493, 1.442695
    %v495 = vpow.pop %v494
    %v496 = vsel %vm489, %v495, 0.0
    %497 = vadd.xlane.f32.xlu0 %v496
    %v498 = vpop.xlane.xlu0 %497
    %v499 = vlog2.pop %v498
    %v500 = vmul.f32 %v499, 0.6931472
    %v501 = vsub.f32 %v493, %v500
    %502 = vst.msk [vmem:[#allocation2] sm:$0x3] %vm489, %v501
    // Predicated region
    $region30: #{forward.13} parent=1 // pred_check
      _
    $region31: #{forward.13} parent=1 // pred_check_branch
      %504 = sbr.rel (0) target = $region33
    $region32: #{forward.13} parent=1 // pred_region
      %506 = vsyncadd [#allocation3], 0
      %s508 = sshll.u32 [#allocation2], 4
      %s509 = int_to_ptr.vmem [resolvable:$true] %s508
      %s510 = sshll.u32 %s7, 4
      %s511 = int_to_ptr.hbm [resolvable:$true] %s510
      %513 = dma.vmem_to_hbm [thread:$0]  %s509, 32, %s511, [#allocation3]
    $region33: #{forward.13} parent=1 // pred_fallthru
      _
    // Predicated region
    $region34: #{forward.13} parent=1 // pred_check
      _
    $region35: #{forward.13} parent=1 // pred_check_branch
      %515 = sbr.rel (0) target = $region37
    $region36: #{forward.13} parent=1 // pred_region
      %517 = dma.done [#allocation3], 32
    $region37: #{forward.13} parent=1 // pred_fallthru
      _
    %518 = vsyncpa [#allocation3], 1

</llo_original>
